<compile_context>
chip_gen: v7x
topology: tpu7x:2x2x1
jax: 0.10.0
libtpu: 0.0.40
codegen_flags: <defaults>
</compile_context>

<pallas_src>
import math

import jax
import jax.numpy as jnp
from jax.experimental import pallas as pl
from jax.experimental.pallas import tpu as pltpu

# ---------------- model hyper-parameters (small, consistent with __init__) ---
FEATURE_DIM = 6          # one-hot(3) + ncd_local + log1p(ncd_global) + time
HIDDEN = 32
NUM_LAYERS = 2
NHEAD = 4
HEAD_DIM = HIDDEN // NHEAD
FFN = 4 * HIDDEN
MAX_SEQ_LEN = 16
LN_EPS = 1e-5
OUT_PAD = 128            # merged lane-dense output: [:, 0:2]=complexities, [:, 2]=logit
NEG_INF = -1e30


# ----------------------------- in-kernel helpers -----------------------------
def _layer_norm(x, w, b):
    mu = jnp.mean(x, axis=-1, keepdims=True)
    xc = x - mu
    var = jnp.mean(xc * xc, axis=-1, keepdims=True)
    return xc * jax.lax.rsqrt(var + LN_EPS) * w + b


def _gelu_exact(x):
    # PyTorch activation='gelu' -> exact erf-based GELU
    return 0.5 * x * (1.0 + jax.lax.erf(x * (1.0 / math.sqrt(2.0))))


def _softmax_last(x):
    m = jnp.max(x, axis=-1, keepdims=True)
    e = jnp.exp(x - m)
    return e / jnp.sum(e, axis=-1, keepdims=True)


# --------------------------------- kernel ------------------------------------
def complexity_transformer_kernel(
        x_ref, mask_ref, attn_bias_ref, head_mask_ref,
        w_emb_ref, emb_bias_ref,
        wq_ref, bq_ref, wk_ref, bk_ref, wv_ref, bv_ref,
        wo_ref, bo_ref,
        ln1_w_ref, ln1_b_ref, ln2_w_ref, ln2_b_ref,
        ffn_w1_ref, ffn_b1_ref, ffn_w2_ref, ffn_b2_ref,
        head_w_ref, head_b_ref,
        out_ref):
    N = x_ref.shape[0]                     # N = B*S flattened tokens
    B, S = mask_ref.shape

    # ---- input embedding + (positional + bias) table, all tokens at once ----
    h = (jnp.dot(x_ref[...], w_emb_ref[...], preferred_element_type=jnp.float32)
         + emb_bias_ref[...])              # (N, H)

    attn_bias = attn_bias_ref[...]         # (N, N) block-diag + key-padding bias (hoisted)
    hmask = head_mask_ref[...]             # (NHEAD, 1, H) 0/1 head-column selectors

    for l in range(NUM_LAYERS):            # static unroll (L = 2)
        # ---- multi-head self-attention (post-norm), batch folded into rows ----
        q = jnp.dot(h, wq_ref[l], preferred_element_type=jnp.float32) + bq_ref[l]  # pre-scaled
        k = jnp.dot(h, wk_ref[l], preferred_element_type=jnp.float32) + bk_ref[l]
        v = jnp.dot(h, wv_ref[l], preferred_element_type=jnp.float32) + bv_ref[l]

        ctx = None
        for hd in range(NHEAD):            # static unroll; no lane slices / concats
            m = hmask[hd]                  # (1, H)
            # (q*m) @ k^T == q_head @ k_head^T  (other heads' columns zeroed)
            scores = jax.lax.dot_general(
                q * m, k, (((1,), (1,)), ((), ())),
                preferred_element_type=jnp.float32)             # (N, N)
            # NOTE: fully-padded sequences degenerate to a uniform softmax over
            # masked keys (finite garbage), same silent fallback as PyTorch-free ref.
            p = _softmax_last(scores + attn_bias)
            # (p @ v) * m == p_head @ v_head placed in the head's columns
            c = jnp.dot(p, v, preferred_element_type=jnp.float32) * m
            ctx = c if ctx is None else ctx + c                 # "concat" via disjoint masks

        attn = jnp.dot(ctx, wo_ref[l], preferred_element_type=jnp.float32) + bo_ref[l]
        h = _layer_norm(h + attn, ln1_w_ref[l], ln1_b_ref[l])

        # ---- feed-forward block ----
        ff = jnp.dot(h, ffn_w1_ref[l], preferred_element_type=jnp.float32) + ffn_b1_ref[l]
        ff = _gelu_exact(ff)
        ff = jnp.dot(ff, ffn_w2_ref[l], preferred_element_type=jnp.float32) + ffn_b2_ref[l]
        h = _layer_norm(h + ff, ln2_w_ref[l], ln2_b_ref[l])

    # ---- select last non-padded token: one-hot selector -> single matmul gather ----
    mask = mask_ref[...]                                        # (B, S)  1.0 == padded
    lengths = jnp.sum(1.0 - mask, axis=1, keepdims=True)        # (B, 1)
    last = jnp.maximum(lengths.astype(jnp.int32) - 1, 0)        # (B, 1)
    target = jax.lax.broadcasted_iota(jnp.int32, (B, 1), 0) * S + last
    cols = jax.lax.broadcasted_iota(jnp.int32, (B, N), 1)
    sel = (cols == target).astype(jnp.float32)                  # (B, N)
    last_hidden = jnp.dot(sel, h, preferred_element_type=jnp.float32)   # (B, H)

    # ---- merged regressor + classifier head, one lane-dense (B, 128) store ----
    out_ref[...] = (jnp.dot(last_hidden, head_w_ref[...],
                            preferred_element_type=jnp.float32) + head_b_ref[...])


# ------------------------------ host wrappers ---------------------------------
def init_params(key):
    ks = jax.random.split(key, 20)
    L, H, F = NUM_LAYERS, HIDDEN, FEATURE_DIM

    def nrm(k, shape, scale=0.05):
        return (scale * jax.random.normal(k, shape)).astype(jnp.float32)

    return dict(
        w_emb=nrm(ks[0], (F, H)),
        b_emb=nrm(ks[1], (1, H), 0.01),
        pos_table=nrm(ks[2], (MAX_SEQ_LEN, H)),
        in_w=nrm(ks[3], (L, H, 3 * H)),
        in_b=nrm(ks[4], (L, 3 * H), 0.01),
        out_w=nrm(ks[5], (L, H, H)),
        out_b=nrm(ks[6], (L, H), 0.01),
        ln1_w=(1.0 + 0.01 * jax.random.normal(ks[7], (L, H))).astype(jnp.float32),
        ln1_b=nrm(ks[8], (L, H), 0.01),
        ln2_w=(1.0 + 0.01 * jax.random.normal(ks[9], (L, H))).astype(jnp.float32),
        ln2_b=nrm(ks[10], (L, H), 0.01),
        ffn_w1=nrm(ks[11], (L, H, FFN)),
        ffn_b1=nrm(ks[12], (L, FFN), 0.01),
        ffn_w2=nrm(ks[13], (L, FFN, H)),
        ffn_b2=nrm(ks[14], (L, H), 0.01),
        reg_w=nrm(ks[15], (H, 2)),
        reg_b=nrm(ks[16], (1, 2), 0.01),
        cls_w=nrm(ks[17], (H, 1)),
        cls_b=nrm(ks[18], (1, 1), 0.01),
    )


def prepare_kernel_params(params):
    """One-time host repacking: split QKV, fold 1/sqrt(head_dim) into W_q/b_q,
    fold b_emb into the positional table, pad the two tiny heads into one
    lane-dense 128-wide head matrix."""
    L, H = NUM_LAYERS, HIDDEN
    scale = 1.0 / math.sqrt(HEAD_DIM)
    in_w, in_b = params["in_w"], params["in_b"]
    kp = dict(
        w_emb=params["w_emb"],
        wq=in_w[:, :, 0 * H:1 * H] * scale,
        wk=in_w[:, :, 1 * H:2 * H],
        wv=in_w[:, :, 2 * H:3 * H],
        bq=(in_b[:, 0 * H:1 * H] * scale)[:, None, :],
        bk=in_b[:, 1 * H:2 * H][:, None, :],
        bv=in_b[:, 2 * H:3 * H][:, None, :],
        wo=params["out_w"],
        bo=params["out_b"][:, None, :],
        ln1_w=params["ln1_w"][:, None, :],
        ln1_b=params["ln1_b"][:, None, :],
        ln2_w=params["ln2_w"][:, None, :],
        ln2_b=params["ln2_b"][:, None, :],
        ffn_w1=params["ffn_w1"],
        ffn_b1=params["ffn_b1"][:, None, :],
        ffn_w2=params["ffn_w2"],
        ffn_b2=params["ffn_b2"][:, None, :],
    )
    head_w = jnp.zeros((H, OUT_PAD), jnp.float32)
    head_w = head_w.at[:, 0:2].set(params["reg_w"]).at[:, 2:3].set(params["cls_w"])
    head_b = jnp.zeros((1, OUT_PAD), jnp.float32)
    head_b = head_b.at[:, 0:2].set(params["reg_b"]).at[:, 2:3].set(params["cls_b"])
    kp["head_w"], kp["head_b"] = head_w, head_b
    # (NHEAD, 1, H) 0/1 column selectors per head
    kp["head_mask"] = (jnp.arange(HIDDEN)[None, :] // HEAD_DIM ==
                       jnp.arange(NHEAD)[:, None]).astype(jnp.float32)[:, None, :]
    # positional table with the embedding bias folded in (per position)
    kp["pos_bias"] = params["pos_table"] + params["b_emb"]       # (MAX_SEQ_LEN, H)
    return kp


def complexity_transformer_forward(sequences, padding_mask, kparams):
    """sequences: (B,S,F) f32, padding_mask: (B,S) bool (True == padded)."""
    B, S, F = sequences.shape
    assert F == FEATURE_DIM and S <= MAX_SEQ_LEN
    N = B * S

    # Host-side glue (mask / position preprocessing, all tiny):
    x_flat = sequences.reshape(N, F)
    emb_bias = jnp.tile(kparams["pos_bias"][:S], (B, 1))          # (N, H)
    mask_f = padding_mask.astype(jnp.float32)                     # (B, S)
    tok_batch = jnp.arange(N) // S
    same_seq = tok_batch[:, None] == tok_batch[None, :]           # block-diagonal batches
    key_valid = (mask_f.reshape(N) < 0.5)[None, :]                # not padded
    attn_bias = jnp.where(same_seq & key_valid, 0.0, NEG_INF).astype(jnp.float32)  # (N, N)

    args = (
        x_flat, mask_f, attn_bias, kparams["head_mask"],
        kparams["w_emb"], emb_bias,
        kparams["wq"], kparams["bq"], kparams["wk"], kparams["bk"],
        kparams["wv"], kparams["bv"], kparams["wo"], kparams["bo"],
        kparams["ln1_w"], kparams["ln1_b"], kparams["ln2_w"], kparams["ln2_b"],
        kparams["ffn_w1"], kparams["ffn_b1"], kparams["ffn_w2"], kparams["ffn_b2"],
        kparams["head_w"], kparams["head_b"],
    )
    vmem = pl.BlockSpec(memory_space=pltpu.MemorySpace.VMEM)
    out = pl.pallas_call(
        complexity_transformer_kernel,
        out_shape=jax.ShapeDtypeStruct((B, OUT_PAD), jnp.float32),
        in_specs=[vmem] * len(args),
        out_specs=vmem,
    )(*args)
    return out[:, 0:2], out[:, 2:3]                               # (B,2), (B,1)


# ----------------------------- pure-JAX reference ----------------------------
def reference_forward(sequences, padding_mask, params):
    B, S, F = sequences.shape
    H = HIDDEN
    pos = params["pos_table"][:S]
    mask_f = padding_mask.astype(jnp.float32)
    comp_rows, logit_rows = [], []
    for b in range(B):
        h = sequences[b] @ params["w_emb"] + params["b_emb"] + pos
        mrow = mask_f[b:b + 1, :]
        for l in range(NUM_LAYERS):
            qkv = h @ params["in_w"][l] + params["in_b"][l:l + 1]
            q, k, v = qkv[:, :H], qkv[:, H:2 * H], qkv[:, 2 * H:]
            heads = []
            for hd in range(NHEAD):
                lo, hi = hd * HEAD_DIM, (hd + 1) * HEAD_DIM
                sc = (q[:, lo:hi] / math.sqrt(HEAD_DIM)) @ k[:, lo:hi].T
                sc = jnp.where(mrow > 0.5, NEG_INF, sc)
                p = jax.nn.softmax(sc, axis=-1)
                heads.append(p @ v[:, lo:hi])
            attn = jnp.concatenate(heads, axis=-1) @ params["out_w"][l] + params["out_b"][l:l + 1]
            h = _layer_norm(h + attn, params["ln1_w"][l:l + 1], params["ln1_b"][l:l + 1])
            ff = jax.nn.gelu(h @ params["ffn_w1"][l] + params["ffn_b1"][l:l + 1],
                             approximate=False)
            ff = ff @ params["ffn_w2"][l] + params["ffn_b2"][l:l + 1]
            h = _layer_norm(h + ff, params["ln2_w"][l:l + 1], params["ln2_b"][l:l + 1])
        last_idx = jnp.maximum(jnp.sum(1.0 - mrow).astype(jnp.int32) - 1, 0)
        last_hidden = h[last_idx][None, :]
        comp_rows.append(last_hidden @ params["reg_w"] + params["reg_b"])
        logit_rows.append(last_hidden @ params["cls_w"] + params["cls_b"])
    return jnp.concatenate(comp_rows, 0), jnp.concatenate(logit_rows, 0)


# ----------------------------------- main ------------------------------------
if __name__ == "__main__":
    key = jax.random.PRNGKey(0)
    k_param, k_seq = jax.random.split(key)

    params = init_params(k_param)
    kparams = prepare_kernel_params(params)

    B, S = 2, 8
    sequences = jax.random.normal(k_seq, (B, S, FEATURE_DIM), dtype=jnp.float32)
    lengths = jnp.array([5, 8], dtype=jnp.int32)                 # valid lengths
    padding_mask = jnp.arange(S)[None, :] >= lengths[:, None]    # True == padded

    comp, logit = complexity_transformer_forward(sequences, padding_mask, kparams)
    jax.block_until_ready((comp, logit))

    comp_ref, logit_ref = reference_forward(sequences, padding_mask, params)
    assert comp.shape == (B, 2) and logit.shape == (B, 1)
    assert jnp.allclose(comp, comp_ref, atol=1e-2, rtol=1e-2)
    assert jnp.allclose(logit, logit_ref, atol=1e-2, rtol=1e-2)

    print("KERNEL_OK")
</pallas_src>

<mosaic_0001>
module attributes {stable_mosaic.version = 11 : i64} {
  func.func @complexity_transformer_kernel(%arg0: memref<16x6xf32, #tpu.memory_space<vmem>>, %arg1: memref<2x8xf32, #tpu.memory_space<vmem>>, %arg2: memref<16x16xf32, #tpu.memory_space<vmem>>, %arg3: memref<4x1x32xf32, #tpu.memory_space<vmem>>, %arg4: memref<6x32xf32, #tpu.memory_space<vmem>>, %arg5: memref<16x32xf32, #tpu.memory_space<vmem>>, %arg6: memref<2x32x32xf32, #tpu.memory_space<vmem>>, %arg7: memref<2x1x32xf32, #tpu.memory_space<vmem>>, %arg8: memref<2x32x32xf32, #tpu.memory_space<vmem>>, %arg9: memref<2x1x32xf32, #tpu.memory_space<vmem>>, %arg10: memref<2x32x32xf32, #tpu.memory_space<vmem>>, %arg11: memref<2x1x32xf32, #tpu.memory_space<vmem>>, %arg12: memref<2x32x32xf32, #tpu.memory_space<vmem>>, %arg13: memref<2x1x32xf32, #tpu.memory_space<vmem>>, %arg14: memref<2x1x32xf32, #tpu.memory_space<vmem>>, %arg15: memref<2x1x32xf32, #tpu.memory_space<vmem>>, %arg16: memref<2x1x32xf32, #tpu.memory_space<vmem>>, %arg17: memref<2x1x32xf32, #tpu.memory_space<vmem>>, %arg18: memref<2x32x128xf32, #tpu.memory_space<vmem>>, %arg19: memref<2x1x128xf32, #tpu.memory_space<vmem>>, %arg20: memref<2x128x32xf32, #tpu.memory_space<vmem>>, %arg21: memref<2x1x32xf32, #tpu.memory_space<vmem>>, %arg22: memref<32x128xf32, #tpu.memory_space<vmem>>, %arg23: memref<1x128xf32, #tpu.memory_space<vmem>>, %arg24: memref<2x128xf32, #tpu.memory_space<vmem>>) attributes {dimension_semantics = [], scalar_prefetch = 0 : i64, scratch_operands = 0 : i64, tpu.core_type = #tpu.core_type<tc>} {
    %c0 = arith.constant 0 : index
    %c0_0 = arith.constant 0 : index
    %0 = vector.load %arg0[%c0, %c0_0] : memref<16x6xf32, #tpu.memory_space<vmem>>, vector<16x6xf32>
    %c0_1 = arith.constant 0 : index
    %c0_2 = arith.constant 0 : index
    %1 = vector.load %arg4[%c0_1, %c0_2] : memref<6x32xf32, #tpu.memory_space<vmem>>, vector<6x32xf32>
    %cst = arith.constant dense<0.000000e+00> : vector<16x32xf32>
    %2 = tpu.matmul %0, %1, %cst {dimension_numbers = #tpu.dot_dimension_numbers<[1], [0], [0], [1], [0, 0, 1, 1], [], []>} : vector<16x6xf32>, vector<6x32xf32>, vector<16x32xf32> -> vector<16x32xf32>
    %c0_3 = arith.constant 0 : index
    %c0_4 = arith.constant 0 : index
    %3 = vector.load %arg5[%c0_3, %c0_4] : memref<16x32xf32, #tpu.memory_space<vmem>>, vector<16x32xf32>
    %4 = arith.addf %2, %3 : vector<16x32xf32>
    %c0_5 = arith.constant 0 : index
    %c0_6 = arith.constant 0 : index
    %5 = vector.load %arg2[%c0_5, %c0_6] : memref<16x16xf32, #tpu.memory_space<vmem>>, vector<16x16xf32>
    %c0_7 = arith.constant 0 : index
    %c0_8 = arith.constant 0 : index
    %c0_9 = arith.constant 0 : index
    %6 = vector.load %arg3[%c0_7, %c0_8, %c0_9] : memref<4x1x32xf32, #tpu.memory_space<vmem>>, vector<4x1x32xf32>
    %c0_10 = arith.constant 0 : index
    %c0_11 = arith.constant 0 : index
    %c0_12 = arith.constant 0 : index
    %7 = vector.load %arg6[%c0_10, %c0_11, %c0_12] : memref<2x32x32xf32, #tpu.memory_space<vmem>>, vector<1x32x32xf32>
    %8 = vector.shape_cast %7 : vector<1x32x32xf32> to vector<32x32xf32>
    %cst_13 = arith.constant dense<0.000000e+00> : vector<16x32xf32>
    %9 = tpu.matmul %4, %8, %cst_13 {dimension_numbers = #tpu.dot_dimension_numbers<[1], [0], [0], [1], [0, 0, 1, 1], [], []>} : vector<16x32xf32>, vector<32x32xf32>, vector<16x32xf32> -> vector<16x32xf32>
    %c0_14 = arith.constant 0 : index
    %c0_15 = arith.constant 0 : index
    %c0_16 = arith.constant 0 : index
    %10 = vector.load %arg7[%c0_14, %c0_15, %c0_16] : memref<2x1x32xf32, #tpu.memory_space<vmem>>, vector<1x1x32xf32>
    %11 = vector.shape_cast %10 : vector<1x1x32xf32> to vector<1x32xf32>
    %12 = vector.broadcast %11 : vector<1x32xf32> to vector<16x32xf32>
    %13 = arith.addf %9, %12 : vector<16x32xf32>
    %c0_17 = arith.constant 0 : index
    %c0_18 = arith.constant 0 : index
    %c0_19 = arith.constant 0 : index
    %14 = vector.load %arg8[%c0_17, %c0_18, %c0_19] : memref<2x32x32xf32, #tpu.memory_space<vmem>>, vector<1x32x32xf32>
    %15 = vector.shape_cast %14 : vector<1x32x32xf32> to vector<32x32xf32>
    %cst_20 = arith.constant dense<0.000000e+00> : vector<16x32xf32>
    %16 = tpu.matmul %4, %15, %cst_20 {dimension_numbers = #tpu.dot_dimension_numbers<[1], [0], [0], [1], [0, 0, 1, 1], [], []>} : vector<16x32xf32>, vector<32x32xf32>, vector<16x32xf32> -> vector<16x32xf32>
    %c0_21 = arith.constant 0 : index
    %c0_22 = arith.constant 0 : index
    %c0_23 = arith.constant 0 : index
    %17 = vector.load %arg9[%c0_21, %c0_22, %c0_23] : memref<2x1x32xf32, #tpu.memory_space<vmem>>, vector<1x1x32xf32>
    %18 = vector.shape_cast %17 : vector<1x1x32xf32> to vector<1x32xf32>
    %19 = vector.broadcast %18 : vector<1x32xf32> to vector<16x32xf32>
    %20 = arith.addf %16, %19 : vector<16x32xf32>
    %c0_24 = arith.constant 0 : index
    %c0_25 = arith.constant 0 : index
    %c0_26 = arith.constant 0 : index
    %21 = vector.load %arg10[%c0_24, %c0_25, %c0_26] : memref<2x32x32xf32, #tpu.memory_space<vmem>>, vector<1x32x32xf32>
    %22 = vector.shape_cast %21 : vector<1x32x32xf32> to vector<32x32xf32>
    %cst_27 = arith.constant dense<0.000000e+00> : vector<16x32xf32>
    %23 = tpu.matmul %4, %22, %cst_27 {dimension_numbers = #tpu.dot_dimension_numbers<[1], [0], [0], [1], [0, 0, 1, 1], [], []>} : vector<16x32xf32>, vector<32x32xf32>, vector<16x32xf32> -> vector<16x32xf32>
    %c0_28 = arith.constant 0 : index
    %c0_29 = arith.constant 0 : index
    %c0_30 = arith.constant 0 : index
    %24 = vector.load %arg11[%c0_28, %c0_29, %c0_30] : memref<2x1x32xf32, #tpu.memory_space<vmem>>, vector<1x1x32xf32>
    %25 = vector.shape_cast %24 : vector<1x1x32xf32> to vector<1x32xf32>
    %26 = vector.broadcast %25 : vector<1x32xf32> to vector<16x32xf32>
    %27 = arith.addf %23, %26 : vector<16x32xf32>
    %28 = vector.extract_strided_slice %6 {offsets = [0, 0, 0], sizes = [1, 1, 32], strides = [1, 1, 1]} : vector<4x1x32xf32> to vector<1x1x32xf32>
    %29 = vector.shape_cast %28 : vector<1x1x32xf32> to vector<1x32xf32>
    %30 = vector.broadcast %29 : vector<1x32xf32> to vector<16x32xf32>
    %31 = arith.mulf %13, %30 : vector<16x32xf32>
    %cst_31 = arith.constant dense<0.000000e+00> : vector<16x16xf32>
    %32 = tpu.matmul %31, %20, %cst_31 {dimension_numbers = #tpu.dot_dimension_numbers<[1], [1], [0], [0], [0, 0, 1, 0], [], []>} : vector<16x32xf32>, vector<16x32xf32>, vector<16x16xf32> -> vector<16x16xf32>
    %33 = arith.addf %32, %5 : vector<16x16xf32>
    %cst_32 = arith.constant dense<0xFF800000> : vector<16xf32>
    %34 = vector.multi_reduction <maximumf>, %33, %cst_32 [1] : vector<16x16xf32> to vector<16xf32>
    %35 = vector.shape_cast %34 : vector<16xf32> to vector<16x1xf32>
    %36 = vector.broadcast %35 : vector<16x1xf32> to vector<16x16xf32>
    %37 = arith.subf %33, %36 : vector<16x16xf32>
    %38 = math.exp %37 : vector<16x16xf32>
    %cst_33 = arith.constant dense<0.000000e+00> : vector<16xf32>
    %39 = vector.multi_reduction <add>, %38, %cst_33 [1] : vector<16x16xf32> to vector<16xf32>
    %40 = vector.shape_cast %39 : vector<16xf32> to vector<16x1xf32>
    %41 = vector.broadcast %40 : vector<16x1xf32> to vector<16x16xf32>
    %42 = arith.divf %38, %41 : vector<16x16xf32>
    %cst_34 = arith.constant dense<0.000000e+00> : vector<16x32xf32>
    %43 = tpu.matmul %42, %27, %cst_34 {dimension_numbers = #tpu.dot_dimension_numbers<[1], [0], [0], [1], [0, 0, 1, 1], [], []>} : vector<16x16xf32>, vector<16x32xf32>, vector<16x32xf32> -> vector<16x32xf32>
    %44 = vector.broadcast %29 : vector<1x32xf32> to vector<16x32xf32>
    %45 = arith.mulf %43, %44 : vector<16x32xf32>
    %46 = vector.extract_strided_slice %6 {offsets = [1, 0, 0], sizes = [1, 1, 32], strides = [1, 1, 1]} : vector<4x1x32xf32> to vector<1x1x32xf32>
    %47 = vector.shape_cast %46 : vector<1x1x32xf32> to vector<1x32xf32>
    %48 = vector.broadcast %47 : vector<1x32xf32> to vector<16x32xf32>
    %49 = arith.mulf %13, %48 : vector<16x32xf32>
    %cst_35 = arith.constant dense<0.000000e+00> : vector<16x16xf32>
    %50 = tpu.matmul %49, %20, %cst_35 {dimension_numbers = #tpu.dot_dimension_numbers<[1], [1], [0], [0], [0, 0, 1, 0], [], []>} : vector<16x32xf32>, vector<16x32xf32>, vector<16x16xf32> -> vector<16x16xf32>
    %51 = arith.addf %50, %5 : vector<16x16xf32>
    %cst_36 = arith.constant dense<0xFF800000> : vector<16xf32>
    %52 = vector.multi_reduction <maximumf>, %51, %cst_36 [1] : vector<16x16xf32> to vector<16xf32>
    %53 = vector.shape_cast %52 : vector<16xf32> to vector<16x1xf32>
    %54 = vector.broadcast %53 : vector<16x1xf32> to vector<16x16xf32>
    %55 = arith.subf %51, %54 : vector<16x16xf32>
    %56 = math.exp %55 : vector<16x16xf32>
    %cst_37 = arith.constant dense<0.000000e+00> : vector<16xf32>
    %57 = vector.multi_reduction <add>, %56, %cst_37 [1] : vector<16x16xf32> to vector<16xf32>
    %58 = vector.shape_cast %57 : vector<16xf32> to vector<16x1xf32>
    %59 = vector.broadcast %58 : vector<16x1xf32> to vector<16x16xf32>
    %60 = arith.divf %56, %59 : vector<16x16xf32>
    %cst_38 = arith.constant dense<0.000000e+00> : vector<16x32xf32>
    %61 = tpu.matmul %60, %27, %cst_38 {dimension_numbers = #tpu.dot_dimension_numbers<[1], [0], [0], [1], [0, 0, 1, 1], [], []>} : vector<16x16xf32>, vector<16x32xf32>, vector<16x32xf32> -> vector<16x32xf32>
    %62 = vector.broadcast %47 : vector<1x32xf32> to vector<16x32xf32>
    %63 = arith.mulf %61, %62 : vector<16x32xf32>
    %64 = arith.addf %45, %63 : vector<16x32xf32>
    %65 = vector.extract_strided_slice %6 {offsets = [2, 0, 0], sizes = [1, 1, 32], strides = [1, 1, 1]} : vector<4x1x32xf32> to vector<1x1x32xf32>
    %66 = vector.shape_cast %65 : vector<1x1x32xf32> to vector<1x32xf32>
    %67 = vector.broadcast %66 : vector<1x32xf32> to vector<16x32xf32>
    %68 = arith.mulf %13, %67 : vector<16x32xf32>
    %cst_39 = arith.constant dense<0.000000e+00> : vector<16x16xf32>
    %69 = tpu.matmul %68, %20, %cst_39 {dimension_numbers = #tpu.dot_dimension_numbers<[1], [1], [0], [0], [0, 0, 1, 0], [], []>} : vector<16x32xf32>, vector<16x32xf32>, vector<16x16xf32> -> vector<16x16xf32>
    %70 = arith.addf %69, %5 : vector<16x16xf32>
    %cst_40 = arith.constant dense<0xFF800000> : vector<16xf32>
    %71 = vector.multi_reduction <maximumf>, %70, %cst_40 [1] : vector<16x16xf32> to vector<16xf32>
    %72 = vector.shape_cast %71 : vector<16xf32> to vector<16x1xf32>
    %73 = vector.broadcast %72 : vector<16x1xf32> to vector<16x16xf32>
    %74 = arith.subf %70, %73 : vector<16x16xf32>
    %75 = math.exp %74 : vector<16x16xf32>
    %cst_41 = arith.constant dense<0.000000e+00> : vector<16xf32>
    %76 = vector.multi_reduction <add>, %75, %cst_41 [1] : vector<16x16xf32> to vector<16xf32>
    %77 = vector.shape_cast %76 : vector<16xf32> to vector<16x1xf32>
    %78 = vector.broadcast %77 : vector<16x1xf32> to vector<16x16xf32>
    %79 = arith.divf %75, %78 : vector<16x16xf32>
    %cst_42 = arith.constant dense<0.000000e+00> : vector<16x32xf32>
    %80 = tpu.matmul %79, %27, %cst_42 {dimension_numbers = #tpu.dot_dimension_numbers<[1], [0], [0], [1], [0, 0, 1, 1], [], []>} : vector<16x16xf32>, vector<16x32xf32>, vector<16x32xf32> -> vector<16x32xf32>
    %81 = vector.broadcast %66 : vector<1x32xf32> to vector<16x32xf32>
    %82 = arith.mulf %80, %81 : vector<16x32xf32>
    %83 = arith.addf %64, %82 : vector<16x32xf32>
    %84 = vector.extract_strided_slice %6 {offsets = [3, 0, 0], sizes = [1, 1, 32], strides = [1, 1, 1]} : vector<4x1x32xf32> to vector<1x1x32xf32>
    %85 = vector.shape_cast %84 : vector<1x1x32xf32> to vector<1x32xf32>
    %86 = vector.broadcast %85 : vector<1x32xf32> to vector<16x32xf32>
    %87 = arith.mulf %13, %86 : vector<16x32xf32>
    %cst_43 = arith.constant dense<0.000000e+00> : vector<16x16xf32>
    %88 = tpu.matmul %87, %20, %cst_43 {dimension_numbers = #tpu.dot_dimension_numbers<[1], [1], [0], [0], [0, 0, 1, 0], [], []>} : vector<16x32xf32>, vector<16x32xf32>, vector<16x16xf32> -> vector<16x16xf32>
    %89 = arith.addf %88, %5 : vector<16x16xf32>
    %cst_44 = arith.constant dense<0xFF800000> : vector<16xf32>
    %90 = vector.multi_reduction <maximumf>, %89, %cst_44 [1] : vector<16x16xf32> to vector<16xf32>
    %91 = vector.shape_cast %90 : vector<16xf32> to vector<16x1xf32>
    %92 = vector.broadcast %91 : vector<16x1xf32> to vector<16x16xf32>
    %93 = arith.subf %89, %92 : vector<16x16xf32>
    %94 = math.exp %93 : vector<16x16xf32>
    %cst_45 = arith.constant dense<0.000000e+00> : vector<16xf32>
    %95 = vector.multi_reduction <add>, %94, %cst_45 [1] : vector<16x16xf32> to vector<16xf32>
    %96 = vector.shape_cast %95 : vector<16xf32> to vector<16x1xf32>
    %97 = vector.broadcast %96 : vector<16x1xf32> to vector<16x16xf32>
    %98 = arith.divf %94, %97 : vector<16x16xf32>
    %cst_46 = arith.constant dense<0.000000e+00> : vector<16x32xf32>
    %99 = tpu.matmul %98, %27, %cst_46 {dimension_numbers = #tpu.dot_dimension_numbers<[1], [0], [0], [1], [0, 0, 1, 1], [], []>} : vector<16x16xf32>, vector<16x32xf32>, vector<16x32xf32> -> vector<16x32xf32>
    %100 = vector.broadcast %85 : vector<1x32xf32> to vector<16x32xf32>
    %101 = arith.mulf %99, %100 : vector<16x32xf32>
    %102 = arith.addf %83, %101 : vector<16x32xf32>
    %c0_47 = arith.constant 0 : index
    %c0_48 = arith.constant 0 : index
    %c0_49 = arith.constant 0 : index
    %103 = vector.load %arg12[%c0_47, %c0_48, %c0_49] : memref<2x32x32xf32, #tpu.memory_space<vmem>>, vector<1x32x32xf32>
    %104 = vector.shape_cast %103 : vector<1x32x32xf32> to vector<32x32xf32>
    %cst_50 = arith.constant dense<0.000000e+00> : vector<16x32xf32>
    %105 = tpu.matmul %102, %104, %cst_50 {dimension_numbers = #tpu.dot_dimension_numbers<[1], [0], [0], [1], [0, 0, 1, 1], [], []>} : vector<16x32xf32>, vector<32x32xf32>, vector<16x32xf32> -> vector<16x32xf32>
    %c0_51 = arith.constant 0 : index
    %c0_52 = arith.constant 0 : index
    %c0_53 = arith.constant 0 : index
    %106 = vector.load %arg13[%c0_51, %c0_52, %c0_53] : memref<2x1x32xf32, #tpu.memory_space<vmem>>, vector<1x1x32xf32>
    %107 = vector.shape_cast %106 : vector<1x1x32xf32> to vector<1x32xf32>
    %108 = vector.broadcast %107 : vector<1x32xf32> to vector<16x32xf32>
    %109 = arith.addf %105, %108 : vector<16x32xf32>
    %110 = arith.addf %4, %109 : vector<16x32xf32>
    %c0_54 = arith.constant 0 : index
    %c0_55 = arith.constant 0 : index
    %c0_56 = arith.constant 0 : index
    %111 = vector.load %arg14[%c0_54, %c0_55, %c0_56] : memref<2x1x32xf32, #tpu.memory_space<vmem>>, vector<1x1x32xf32>
    %112 = vector.shape_cast %111 : vector<1x1x32xf32> to vector<1x32xf32>
    %c0_57 = arith.constant 0 : index
    %c0_58 = arith.constant 0 : index
    %c0_59 = arith.constant 0 : index
    %113 = vector.load %arg15[%c0_57, %c0_58, %c0_59] : memref<2x1x32xf32, #tpu.memory_space<vmem>>, vector<1x1x32xf32>
    %114 = vector.shape_cast %113 : vector<1x1x32xf32> to vector<1x32xf32>
    %cst_60 = arith.constant dense<0.000000e+00> : vector<16xf32>
    %115 = vector.multi_reduction <add>, %110, %cst_60 [1] : vector<16x32xf32> to vector<16xf32>
    %116 = vector.shape_cast %115 : vector<16xf32> to vector<16x1xf32>
    %cst_61 = arith.constant 3.200000e+01 : f32
    %117 = vector.broadcast %cst_61 : f32 to vector<16x1xf32>
    %118 = arith.divf %116, %117 : vector<16x1xf32>
    %119 = vector.broadcast %118 : vector<16x1xf32> to vector<16x32xf32>
    %120 = arith.subf %110, %119 : vector<16x32xf32>
    %121 = arith.mulf %120, %120 : vector<16x32xf32>
    %cst_62 = arith.constant dense<0.000000e+00> : vector<16xf32>
    %122 = vector.multi_reduction <add>, %121, %cst_62 [1] : vector<16x32xf32> to vector<16xf32>
    %123 = vector.shape_cast %122 : vector<16xf32> to vector<16x1xf32>
    %cst_63 = arith.constant 3.200000e+01 : f32
    %124 = vector.broadcast %cst_63 : f32 to vector<16x1xf32>
    %125 = arith.divf %123, %124 : vector<16x1xf32>
    %cst_64 = arith.constant 9.99999974E-6 : f32
    %126 = vector.broadcast %cst_64 : f32 to vector<16x1xf32>
    %127 = arith.addf %125, %126 : vector<16x1xf32>
    %128 = math.rsqrt %127 : vector<16x1xf32>
    %129 = vector.broadcast %128 : vector<16x1xf32> to vector<16x32xf32>
    %130 = arith.mulf %120, %129 : vector<16x32xf32>
    %131 = vector.broadcast %112 : vector<1x32xf32> to vector<16x32xf32>
    %132 = arith.mulf %130, %131 : vector<16x32xf32>
    %133 = vector.broadcast %114 : vector<1x32xf32> to vector<16x32xf32>
    %134 = arith.addf %132, %133 : vector<16x32xf32>
    %c0_65 = arith.constant 0 : index
    %c0_66 = arith.constant 0 : index
    %c0_67 = arith.constant 0 : index
    %135 = vector.load %arg18[%c0_65, %c0_66, %c0_67] : memref<2x32x128xf32, #tpu.memory_space<vmem>>, vector<1x32x128xf32>
    %136 = vector.shape_cast %135 : vector<1x32x128xf32> to vector<32x128xf32>
    %cst_68 = arith.constant dense<0.000000e+00> : vector<16x128xf32>
    %137 = tpu.matmul %134, %136, %cst_68 {dimension_numbers = #tpu.dot_dimension_numbers<[1], [0], [0], [1], [0, 0, 1, 1], [], []>} : vector<16x32xf32>, vector<32x128xf32>, vector<16x128xf32> -> vector<16x128xf32>
    %c0_69 = arith.constant 0 : index
    %c0_70 = arith.constant 0 : index
    %c0_71 = arith.constant 0 : index
    %138 = vector.load %arg19[%c0_69, %c0_70, %c0_71] : memref<2x1x128xf32, #tpu.memory_space<vmem>>, vector<1x1x128xf32>
    %139 = vector.shape_cast %138 : vector<1x1x128xf32> to vector<1x128xf32>
    %140 = vector.broadcast %139 : vector<1x128xf32> to vector<16x128xf32>
    %141 = arith.addf %137, %140 : vector<16x128xf32>
    %cst_72 = arith.constant 5.000000e-01 : f32
    %142 = vector.broadcast %cst_72 : f32 to vector<16x128xf32>
    %143 = arith.mulf %142, %141 : vector<16x128xf32>
    %cst_73 = arith.constant 0.707106769 : f32
    %144 = vector.broadcast %cst_73 : f32 to vector<16x128xf32>
    %145 = arith.mulf %141, %144 : vector<16x128xf32>
    %146 = math.erf %145 : vector<16x128xf32>
    %cst_74 = arith.constant 1.000000e+00 : f32
    %147 = vector.broadcast %cst_74 : f32 to vector<16x128xf32>
    %148 = arith.addf %147, %146 : vector<16x128xf32>
    %149 = arith.mulf %143, %148 : vector<16x128xf32>
    %c0_75 = arith.constant 0 : index
    %c0_76 = arith.constant 0 : index
    %c0_77 = arith.constant 0 : index
    %150 = vector.load %arg20[%c0_75, %c0_76, %c0_77] : memref<2x128x32xf32, #tpu.memory_space<vmem>>, vector<1x128x32xf32>
    %151 = vector.shape_cast %150 : vector<1x128x32xf32> to vector<128x32xf32>
    %cst_78 = arith.constant dense<0.000000e+00> : vector<16x32xf32>
    %152 = tpu.matmul %149, %151, %cst_78 {dimension_numbers = #tpu.dot_dimension_numbers<[1], [0], [0], [1], [0, 0, 1, 1], [], []>} : vector<16x128xf32>, vector<128x32xf32>, vector<16x32xf32> -> vector<16x32xf32>
    %c0_79 = arith.constant 0 : index
    %c0_80 = arith.constant 0 : index
    %c0_81 = arith.constant 0 : index
    %153 = vector.load %arg21[%c0_79, %c0_80, %c0_81] : memref<2x1x32xf32, #tpu.memory_space<vmem>>, vector<1x1x32xf32>
    %154 = vector.shape_cast %153 : vector<1x1x32xf32> to vector<1x32xf32>
    %155 = vector.broadcast %154 : vector<1x32xf32> to vector<16x32xf32>
    %156 = arith.addf %152, %155 : vector<16x32xf32>
    %157 = arith.addf %134, %156 : vector<16x32xf32>
    %c0_82 = arith.constant 0 : index
    %c0_83 = arith.constant 0 : index
    %c0_84 = arith.constant 0 : index
    %158 = vector.load %arg16[%c0_82, %c0_83, %c0_84] : memref<2x1x32xf32, #tpu.memory_space<vmem>>, vector<1x1x32xf32>
    %159 = vector.shape_cast %158 : vector<1x1x32xf32> to vector<1x32xf32>
    %c0_85 = arith.constant 0 : index
    %c0_86 = arith.constant 0 : index
    %c0_87 = arith.constant 0 : index
    %160 = vector.load %arg17[%c0_85, %c0_86, %c0_87] : memref<2x1x32xf32, #tpu.memory_space<vmem>>, vector<1x1x32xf32>
    %161 = vector.shape_cast %160 : vector<1x1x32xf32> to vector<1x32xf32>
    %cst_88 = arith.constant dense<0.000000e+00> : vector<16xf32>
    %162 = vector.multi_reduction <add>, %157, %cst_88 [1] : vector<16x32xf32> to vector<16xf32>
    %163 = vector.shape_cast %162 : vector<16xf32> to vector<16x1xf32>
    %cst_89 = arith.constant 3.200000e+01 : f32
    %164 = vector.broadcast %cst_89 : f32 to vector<16x1xf32>
    %165 = arith.divf %163, %164 : vector<16x1xf32>
    %166 = vector.broadcast %165 : vector<16x1xf32> to vector<16x32xf32>
    %167 = arith.subf %157, %166 : vector<16x32xf32>
    %168 = arith.mulf %167, %167 : vector<16x32xf32>
    %cst_90 = arith.constant dense<0.000000e+00> : vector<16xf32>
    %169 = vector.multi_reduction <add>, %168, %cst_90 [1] : vector<16x32xf32> to vector<16xf32>
    %170 = vector.shape_cast %169 : vector<16xf32> to vector<16x1xf32>
    %cst_91 = arith.constant 3.200000e+01 : f32
    %171 = vector.broadcast %cst_91 : f32 to vector<16x1xf32>
    %172 = arith.divf %170, %171 : vector<16x1xf32>
    %cst_92 = arith.constant 9.99999974E-6 : f32
    %173 = vector.broadcast %cst_92 : f32 to vector<16x1xf32>
    %174 = arith.addf %172, %173 : vector<16x1xf32>
    %175 = math.rsqrt %174 : vector<16x1xf32>
    %176 = vector.broadcast %175 : vector<16x1xf32> to vector<16x32xf32>
    %177 = arith.mulf %167, %176 : vector<16x32xf32>
    %178 = vector.broadcast %159 : vector<1x32xf32> to vector<16x32xf32>
    %179 = arith.mulf %177, %178 : vector<16x32xf32>
    %180 = vector.broadcast %161 : vector<1x32xf32> to vector<16x32xf32>
    %181 = arith.addf %179, %180 : vector<16x32xf32>
    %c1 = arith.constant 1 : index
    %c0_93 = arith.constant 0 : index
    %c0_94 = arith.constant 0 : index
    %182 = vector.load %arg6[%c1, %c0_93, %c0_94] : memref<2x32x32xf32, #tpu.memory_space<vmem>>, vector<1x32x32xf32>
    %183 = vector.shape_cast %182 : vector<1x32x32xf32> to vector<32x32xf32>
    %cst_95 = arith.constant dense<0.000000e+00> : vector<16x32xf32>
    %184 = tpu.matmul %181, %183, %cst_95 {dimension_numbers = #tpu.dot_dimension_numbers<[1], [0], [0], [1], [0, 0, 1, 1], [], []>} : vector<16x32xf32>, vector<32x32xf32>, vector<16x32xf32> -> vector<16x32xf32>
    %c1_96 = arith.constant 1 : index
    %c0_97 = arith.constant 0 : index
    %c0_98 = arith.constant 0 : index
    %185 = vector.load %arg7[%c1_96, %c0_97, %c0_98] : memref<2x1x32xf32, #tpu.memory_space<vmem>>, vector<1x1x32xf32>
    %186 = vector.shape_cast %185 : vector<1x1x32xf32> to vector<1x32xf32>
    %187 = vector.broadcast %186 : vector<1x32xf32> to vector<16x32xf32>
    %188 = arith.addf %184, %187 : vector<16x32xf32>
    %c1_99 = arith.constant 1 : index
    %c0_100 = arith.constant 0 : index
    %c0_101 = arith.constant 0 : index
    %189 = vector.load %arg8[%c1_99, %c0_100, %c0_101] : memref<2x32x32xf32, #tpu.memory_space<vmem>>, vector<1x32x32xf32>
    %190 = vector.shape_cast %189 : vector<1x32x32xf32> to vector<32x32xf32>
    %cst_102 = arith.constant dense<0.000000e+00> : vector<16x32xf32>
    %191 = tpu.matmul %181, %190, %cst_102 {dimension_numbers = #tpu.dot_dimension_numbers<[1], [0], [0], [1], [0, 0, 1, 1], [], []>} : vector<16x32xf32>, vector<32x32xf32>, vector<16x32xf32> -> vector<16x32xf32>
    %c1_103 = arith.constant 1 : index
    %c0_104 = arith.constant 0 : index
    %c0_105 = arith.constant 0 : index
    %192 = vector.load %arg9[%c1_103, %c0_104, %c0_105] : memref<2x1x32xf32, #tpu.memory_space<vmem>>, vector<1x1x32xf32>
    %193 = vector.shape_cast %192 : vector<1x1x32xf32> to vector<1x32xf32>
    %194 = vector.broadcast %193 : vector<1x32xf32> to vector<16x32xf32>
    %195 = arith.addf %191, %194 : vector<16x32xf32>
    %c1_106 = arith.constant 1 : index
    %c0_107 = arith.constant 0 : index
    %c0_108 = arith.constant 0 : index
    %196 = vector.load %arg10[%c1_106, %c0_107, %c0_108] : memref<2x32x32xf32, #tpu.memory_space<vmem>>, vector<1x32x32xf32>
    %197 = vector.shape_cast %196 : vector<1x32x32xf32> to vector<32x32xf32>
    %cst_109 = arith.constant dense<0.000000e+00> : vector<16x32xf32>
    %198 = tpu.matmul %181, %197, %cst_109 {dimension_numbers = #tpu.dot_dimension_numbers<[1], [0], [0], [1], [0, 0, 1, 1], [], []>} : vector<16x32xf32>, vector<32x32xf32>, vector<16x32xf32> -> vector<16x32xf32>
    %c1_110 = arith.constant 1 : index
    %c0_111 = arith.constant 0 : index
    %c0_112 = arith.constant 0 : index
    %199 = vector.load %arg11[%c1_110, %c0_111, %c0_112] : memref<2x1x32xf32, #tpu.memory_space<vmem>>, vector<1x1x32xf32>
    %200 = vector.shape_cast %199 : vector<1x1x32xf32> to vector<1x32xf32>
    %201 = vector.broadcast %200 : vector<1x32xf32> to vector<16x32xf32>
    %202 = arith.addf %198, %201 : vector<16x32xf32>
    %203 = vector.extract_strided_slice %6 {offsets = [0, 0, 0], sizes = [1, 1, 32], strides = [1, 1, 1]} : vector<4x1x32xf32> to vector<1x1x32xf32>
    %204 = vector.shape_cast %203 : vector<1x1x32xf32> to vector<1x32xf32>
    %205 = vector.broadcast %204 : vector<1x32xf32> to vector<16x32xf32>
    %206 = arith.mulf %188, %205 : vector<16x32xf32>
    %cst_113 = arith.constant dense<0.000000e+00> : vector<16x16xf32>
    %207 = tpu.matmul %206, %195, %cst_113 {dimension_numbers = #tpu.dot_dimension_numbers<[1], [1], [0], [0], [0, 0, 1, 0], [], []>} : vector<16x32xf32>, vector<16x32xf32>, vector<16x16xf32> -> vector<16x16xf32>
    %208 = arith.addf %207, %5 : vector<16x16xf32>
    %cst_114 = arith.constant dense<0xFF800000> : vector<16xf32>
    %209 = vector.multi_reduction <maximumf>, %208, %cst_114 [1] : vector<16x16xf32> to vector<16xf32>
    %210 = vector.shape_cast %209 : vector<16xf32> to vector<16x1xf32>
    %211 = vector.broadcast %210 : vector<16x1xf32> to vector<16x16xf32>
    %212 = arith.subf %208, %211 : vector<16x16xf32>
    %213 = math.exp %212 : vector<16x16xf32>
    %cst_115 = arith.constant dense<0.000000e+00> : vector<16xf32>
    %214 = vector.multi_reduction <add>, %213, %cst_115 [1] : vector<16x16xf32> to vector<16xf32>
    %215 = vector.shape_cast %214 : vector<16xf32> to vector<16x1xf32>
    %216 = vector.broadcast %215 : vector<16x1xf32> to vector<16x16xf32>
    %217 = arith.divf %213, %216 : vector<16x16xf32>
    %cst_116 = arith.constant dense<0.000000e+00> : vector<16x32xf32>
    %218 = tpu.matmul %217, %202, %cst_116 {dimension_numbers = #tpu.dot_dimension_numbers<[1], [0], [0], [1], [0, 0, 1, 1], [], []>} : vector<16x16xf32>, vector<16x32xf32>, vector<16x32xf32> -> vector<16x32xf32>
    %219 = vector.broadcast %204 : vector<1x32xf32> to vector<16x32xf32>
    %220 = arith.mulf %218, %219 : vector<16x32xf32>
    %221 = vector.extract_strided_slice %6 {offsets = [1, 0, 0], sizes = [1, 1, 32], strides = [1, 1, 1]} : vector<4x1x32xf32> to vector<1x1x32xf32>
    %222 = vector.shape_cast %221 : vector<1x1x32xf32> to vector<1x32xf32>
    %223 = vector.broadcast %222 : vector<1x32xf32> to vector<16x32xf32>
    %224 = arith.mulf %188, %223 : vector<16x32xf32>
    %cst_117 = arith.constant dense<0.000000e+00> : vector<16x16xf32>
    %225 = tpu.matmul %224, %195, %cst_117 {dimension_numbers = #tpu.dot_dimension_numbers<[1], [1], [0], [0], [0, 0, 1, 0], [], []>} : vector<16x32xf32>, vector<16x32xf32>, vector<16x16xf32> -> vector<16x16xf32>
    %226 = arith.addf %225, %5 : vector<16x16xf32>
    %cst_118 = arith.constant dense<0xFF800000> : vector<16xf32>
    %227 = vector.multi_reduction <maximumf>, %226, %cst_118 [1] : vector<16x16xf32> to vector<16xf32>
    %228 = vector.shape_cast %227 : vector<16xf32> to vector<16x1xf32>
    %229 = vector.broadcast %228 : vector<16x1xf32> to vector<16x16xf32>
    %230 = arith.subf %226, %229 : vector<16x16xf32>
    %231 = math.exp %230 : vector<16x16xf32>
    %cst_119 = arith.constant dense<0.000000e+00> : vector<16xf32>
    %232 = vector.multi_reduction <add>, %231, %cst_119 [1] : vector<16x16xf32> to vector<16xf32>
    %233 = vector.shape_cast %232 : vector<16xf32> to vector<16x1xf32>
    %234 = vector.broadcast %233 : vector<16x1xf32> to vector<16x16xf32>
    %235 = arith.divf %231, %234 : vector<16x16xf32>
    %cst_120 = arith.constant dense<0.000000e+00> : vector<16x32xf32>
    %236 = tpu.matmul %235, %202, %cst_120 {dimension_numbers = #tpu.dot_dimension_numbers<[1], [0], [0], [1], [0, 0, 1, 1], [], []>} : vector<16x16xf32>, vector<16x32xf32>, vector<16x32xf32> -> vector<16x32xf32>
    %237 = vector.broadcast %222 : vector<1x32xf32> to vector<16x32xf32>
    %238 = arith.mulf %236, %237 : vector<16x32xf32>
    %239 = arith.addf %220, %238 : vector<16x32xf32>
    %240 = vector.extract_strided_slice %6 {offsets = [2, 0, 0], sizes = [1, 1, 32], strides = [1, 1, 1]} : vector<4x1x32xf32> to vector<1x1x32xf32>
    %241 = vector.shape_cast %240 : vector<1x1x32xf32> to vector<1x32xf32>
    %242 = vector.broadcast %241 : vector<1x32xf32> to vector<16x32xf32>
    %243 = arith.mulf %188, %242 : vector<16x32xf32>
    %cst_121 = arith.constant dense<0.000000e+00> : vector<16x16xf32>
    %244 = tpu.matmul %243, %195, %cst_121 {dimension_numbers = #tpu.dot_dimension_numbers<[1], [1], [0], [0], [0, 0, 1, 0], [], []>} : vector<16x32xf32>, vector<16x32xf32>, vector<16x16xf32> -> vector<16x16xf32>
    %245 = arith.addf %244, %5 : vector<16x16xf32>
    %cst_122 = arith.constant dense<0xFF800000> : vector<16xf32>
    %246 = vector.multi_reduction <maximumf>, %245, %cst_122 [1] : vector<16x16xf32> to vector<16xf32>
    %247 = vector.shape_cast %246 : vector<16xf32> to vector<16x1xf32>
    %248 = vector.broadcast %247 : vector<16x1xf32> to vector<16x16xf32>
    %249 = arith.subf %245, %248 : vector<16x16xf32>
    %250 = math.exp %249 : vector<16x16xf32>
    %cst_123 = arith.constant dense<0.000000e+00> : vector<16xf32>
    %251 = vector.multi_reduction <add>, %250, %cst_123 [1] : vector<16x16xf32> to vector<16xf32>
    %252 = vector.shape_cast %251 : vector<16xf32> to vector<16x1xf32>
    %253 = vector.broadcast %252 : vector<16x1xf32> to vector<16x16xf32>
    %254 = arith.divf %250, %253 : vector<16x16xf32>
    %cst_124 = arith.constant dense<0.000000e+00> : vector<16x32xf32>
    %255 = tpu.matmul %254, %202, %cst_124 {dimension_numbers = #tpu.dot_dimension_numbers<[1], [0], [0], [1], [0, 0, 1, 1], [], []>} : vector<16x16xf32>, vector<16x32xf32>, vector<16x32xf32> -> vector<16x32xf32>
    %256 = vector.broadcast %241 : vector<1x32xf32> to vector<16x32xf32>
    %257 = arith.mulf %255, %256 : vector<16x32xf32>
    %258 = arith.addf %239, %257 : vector<16x32xf32>
    %259 = vector.extract_strided_slice %6 {offsets = [3, 0, 0], sizes = [1, 1, 32], strides = [1, 1, 1]} : vector<4x1x32xf32> to vector<1x1x32xf32>
    %260 = vector.shape_cast %259 : vector<1x1x32xf32> to vector<1x32xf32>
    %261 = vector.broadcast %260 : vector<1x32xf32> to vector<16x32xf32>
    %262 = arith.mulf %188, %261 : vector<16x32xf32>
    %cst_125 = arith.constant dense<0.000000e+00> : vector<16x16xf32>
    %263 = tpu.matmul %262, %195, %cst_125 {dimension_numbers = #tpu.dot_dimension_numbers<[1], [1], [0], [0], [0, 0, 1, 0], [], []>} : vector<16x32xf32>, vector<16x32xf32>, vector<16x16xf32> -> vector<16x16xf32>
    %264 = arith.addf %263, %5 : vector<16x16xf32>
    %cst_126 = arith.constant dense<0xFF800000> : vector<16xf32>
    %265 = vector.multi_reduction <maximumf>, %264, %cst_126 [1] : vector<16x16xf32> to vector<16xf32>
    %266 = vector.shape_cast %265 : vector<16xf32> to vector<16x1xf32>
    %267 = vector.broadcast %266 : vector<16x1xf32> to vector<16x16xf32>
    %268 = arith.subf %264, %267 : vector<16x16xf32>
    %269 = math.exp %268 : vector<16x16xf32>
    %cst_127 = arith.constant dense<0.000000e+00> : vector<16xf32>
    %270 = vector.multi_reduction <add>, %269, %cst_127 [1] : vector<16x16xf32> to vector<16xf32>
    %271 = vector.shape_cast %270 : vector<16xf32> to vector<16x1xf32>
    %272 = vector.broadcast %271 : vector<16x1xf32> to vector<16x16xf32>
    %273 = arith.divf %269, %272 : vector<16x16xf32>
    %cst_128 = arith.constant dense<0.000000e+00> : vector<16x32xf32>
    %274 = tpu.matmul %273, %202, %cst_128 {dimension_numbers = #tpu.dot_dimension_numbers<[1], [0], [0], [1], [0, 0, 1, 1], [], []>} : vector<16x16xf32>, vector<16x32xf32>, vector<16x32xf32> -> vector<16x32xf32>
    %275 = vector.broadcast %260 : vector<1x32xf32> to vector<16x32xf32>
    %276 = arith.mulf %274, %275 : vector<16x32xf32>
    %277 = arith.addf %258, %276 : vector<16x32xf32>
    %c1_129 = arith.constant 1 : index
    %c0_130 = arith.constant 0 : index
    %c0_131 = arith.constant 0 : index
    %278 = vector.load %arg12[%c1_129, %c0_130, %c0_131] : memref<2x32x32xf32, #tpu.memory_space<vmem>>, vector<1x32x32xf32>
    %279 = vector.shape_cast %278 : vector<1x32x32xf32> to vector<32x32xf32>
    %cst_132 = arith.constant dense<0.000000e+00> : vector<16x32xf32>
    %280 = tpu.matmul %277, %279, %cst_132 {dimension_numbers = #tpu.dot_dimension_numbers<[1], [0], [0], [1], [0, 0, 1, 1], [], []>} : vector<16x32xf32>, vector<32x32xf32>, vector<16x32xf32> -> vector<16x32xf32>
    %c1_133 = arith.constant 1 : index
    %c0_134 = arith.constant 0 : index
    %c0_135 = arith.constant 0 : index
    %281 = vector.load %arg13[%c1_133, %c0_134, %c0_135] : memref<2x1x32xf32, #tpu.memory_space<vmem>>, vector<1x1x32xf32>
    %282 = vector.shape_cast %281 : vector<1x1x32xf32> to vector<1x32xf32>
    %283 = vector.broadcast %282 : vector<1x32xf32> to vector<16x32xf32>
    %284 = arith.addf %280, %283 : vector<16x32xf32>
    %285 = arith.addf %181, %284 : vector<16x32xf32>
    %c1_136 = arith.constant 1 : index
    %c0_137 = arith.constant 0 : index
    %c0_138 = arith.constant 0 : index
    %286 = vector.load %arg14[%c1_136, %c0_137, %c0_138] : memref<2x1x32xf32, #tpu.memory_space<vmem>>, vector<1x1x32xf32>
    %287 = vector.shape_cast %286 : vector<1x1x32xf32> to vector<1x32xf32>
    %c1_139 = arith.constant 1 : index
    %c0_140 = arith.constant 0 : index
    %c0_141 = arith.constant 0 : index
    %288 = vector.load %arg15[%c1_139, %c0_140, %c0_141] : memref<2x1x32xf32, #tpu.memory_space<vmem>>, vector<1x1x32xf32>
    %289 = vector.shape_cast %288 : vector<1x1x32xf32> to vector<1x32xf32>
    %cst_142 = arith.constant dense<0.000000e+00> : vector<16xf32>
    %290 = vector.multi_reduction <add>, %285, %cst_142 [1] : vector<16x32xf32> to vector<16xf32>
    %291 = vector.shape_cast %290 : vector<16xf32> to vector<16x1xf32>
    %cst_143 = arith.constant 3.200000e+01 : f32
    %292 = vector.broadcast %cst_143 : f32 to vector<16x1xf32>
    %293 = arith.divf %291, %292 : vector<16x1xf32>
    %294 = vector.broadcast %293 : vector<16x1xf32> to vector<16x32xf32>
    %295 = arith.subf %285, %294 : vector<16x32xf32>
    %296 = arith.mulf %295, %295 : vector<16x32xf32>
    %cst_144 = arith.constant dense<0.000000e+00> : vector<16xf32>
    %297 = vector.multi_reduction <add>, %296, %cst_144 [1] : vector<16x32xf32> to vector<16xf32>
    %298 = vector.shape_cast %297 : vector<16xf32> to vector<16x1xf32>
    %cst_145 = arith.constant 3.200000e+01 : f32
    %299 = vector.broadcast %cst_145 : f32 to vector<16x1xf32>
    %300 = arith.divf %298, %299 : vector<16x1xf32>
    %cst_146 = arith.constant 9.99999974E-6 : f32
    %301 = vector.broadcast %cst_146 : f32 to vector<16x1xf32>
    %302 = arith.addf %300, %301 : vector<16x1xf32>
    %303 = math.rsqrt %302 : vector<16x1xf32>
    %304 = vector.broadcast %303 : vector<16x1xf32> to vector<16x32xf32>
    %305 = arith.mulf %295, %304 : vector<16x32xf32>
    %306 = vector.broadcast %287 : vector<1x32xf32> to vector<16x32xf32>
    %307 = arith.mulf %305, %306 : vector<16x32xf32>
    %308 = vector.broadcast %289 : vector<1x32xf32> to vector<16x32xf32>
    %309 = arith.addf %307, %308 : vector<16x32xf32>
    %c1_147 = arith.constant 1 : index
    %c0_148 = arith.constant 0 : index
    %c0_149 = arith.constant 0 : index
    %310 = vector.load %arg18[%c1_147, %c0_148, %c0_149] : memref<2x32x128xf32, #tpu.memory_space<vmem>>, vector<1x32x128xf32>
    %311 = vector.shape_cast %310 : vector<1x32x128xf32> to vector<32x128xf32>
    %cst_150 = arith.constant dense<0.000000e+00> : vector<16x128xf32>
    %312 = tpu.matmul %309, %311, %cst_150 {dimension_numbers = #tpu.dot_dimension_numbers<[1], [0], [0], [1], [0, 0, 1, 1], [], []>} : vector<16x32xf32>, vector<32x128xf32>, vector<16x128xf32> -> vector<16x128xf32>
    %c1_151 = arith.constant 1 : index
    %c0_152 = arith.constant 0 : index
    %c0_153 = arith.constant 0 : index
    %313 = vector.load %arg19[%c1_151, %c0_152, %c0_153] : memref<2x1x128xf32, #tpu.memory_space<vmem>>, vector<1x1x128xf32>
    %314 = vector.shape_cast %313 : vector<1x1x128xf32> to vector<1x128xf32>
    %315 = vector.broadcast %314 : vector<1x128xf32> to vector<16x128xf32>
    %316 = arith.addf %312, %315 : vector<16x128xf32>
    %cst_154 = arith.constant 5.000000e-01 : f32
    %317 = vector.broadcast %cst_154 : f32 to vector<16x128xf32>
    %318 = arith.mulf %317, %316 : vector<16x128xf32>
    %cst_155 = arith.constant 0.707106769 : f32
    %319 = vector.broadcast %cst_155 : f32 to vector<16x128xf32>
    %320 = arith.mulf %316, %319 : vector<16x128xf32>
    %321 = math.erf %320 : vector<16x128xf32>
    %cst_156 = arith.constant 1.000000e+00 : f32
    %322 = vector.broadcast %cst_156 : f32 to vector<16x128xf32>
    %323 = arith.addf %322, %321 : vector<16x128xf32>
    %324 = arith.mulf %318, %323 : vector<16x128xf32>
    %c1_157 = arith.constant 1 : index
    %c0_158 = arith.constant 0 : index
    %c0_159 = arith.constant 0 : index
    %325 = vector.load %arg20[%c1_157, %c0_158, %c0_159] : memref<2x128x32xf32, #tpu.memory_space<vmem>>, vector<1x128x32xf32>
    %326 = vector.shape_cast %325 : vector<1x128x32xf32> to vector<128x32xf32>
    %cst_160 = arith.constant dense<0.000000e+00> : vector<16x32xf32>
    %327 = tpu.matmul %324, %326, %cst_160 {dimension_numbers = #tpu.dot_dimension_numbers<[1], [0], [0], [1], [0, 0, 1, 1], [], []>} : vector<16x128xf32>, vector<128x32xf32>, vector<16x32xf32> -> vector<16x32xf32>
    %c1_161 = arith.constant 1 : index
    %c0_162 = arith.constant 0 : index
    %c0_163 = arith.constant 0 : index
    %328 = vector.load %arg21[%c1_161, %c0_162, %c0_163] : memref<2x1x32xf32, #tpu.memory_space<vmem>>, vector<1x1x32xf32>
    %329 = vector.shape_cast %328 : vector<1x1x32xf32> to vector<1x32xf32>
    %330 = vector.broadcast %329 : vector<1x32xf32> to vector<16x32xf32>
    %331 = arith.addf %327, %330 : vector<16x32xf32>
    %332 = arith.addf %309, %331 : vector<16x32xf32>
    %c1_164 = arith.constant 1 : index
    %c0_165 = arith.constant 0 : index
    %c0_166 = arith.constant 0 : index
    %333 = vector.load %arg16[%c1_164, %c0_165, %c0_166] : memref<2x1x32xf32, #tpu.memory_space<vmem>>, vector<1x1x32xf32>
    %334 = vector.shape_cast %333 : vector<1x1x32xf32> to vector<1x32xf32>
    %c1_167 = arith.constant 1 : index
    %c0_168 = arith.constant 0 : index
    %c0_169 = arith.constant 0 : index
    %335 = vector.load %arg17[%c1_167, %c0_168, %c0_169] : memref<2x1x32xf32, #tpu.memory_space<vmem>>, vector<1x1x32xf32>
    %336 = vector.shape_cast %335 : vector<1x1x32xf32> to vector<1x32xf32>
    %cst_170 = arith.constant dense<0.000000e+00> : vector<16xf32>
    %337 = vector.multi_reduction <add>, %332, %cst_170 [1] : vector<16x32xf32> to vector<16xf32>
    %338 = vector.shape_cast %337 : vector<16xf32> to vector<16x1xf32>
    %cst_171 = arith.constant 3.200000e+01 : f32
    %339 = vector.broadcast %cst_171 : f32 to vector<16x1xf32>
    %340 = arith.divf %338, %339 : vector<16x1xf32>
    %341 = vector.broadcast %340 : vector<16x1xf32> to vector<16x32xf32>
    %342 = arith.subf %332, %341 : vector<16x32xf32>
    %343 = arith.mulf %342, %342 : vector<16x32xf32>
    %cst_172 = arith.constant dense<0.000000e+00> : vector<16xf32>
    %344 = vector.multi_reduction <add>, %343, %cst_172 [1] : vector<16x32xf32> to vector<16xf32>
    %345 = vector.shape_cast %344 : vector<16xf32> to vector<16x1xf32>
    %cst_173 = arith.constant 3.200000e+01 : f32
    %346 = vector.broadcast %cst_173 : f32 to vector<16x1xf32>
    %347 = arith.divf %345, %346 : vector<16x1xf32>
    %cst_174 = arith.constant 9.99999974E-6 : f32
    %348 = vector.broadcast %cst_174 : f32 to vector<16x1xf32>
    %349 = arith.addf %347, %348 : vector<16x1xf32>
    %350 = math.rsqrt %349 : vector<16x1xf32>
    %351 = vector.broadcast %350 : vector<16x1xf32> to vector<16x32xf32>
    %352 = arith.mulf %342, %351 : vector<16x32xf32>
    %353 = vector.broadcast %334 : vector<1x32xf32> to vector<16x32xf32>
    %354 = arith.mulf %352, %353 : vector<16x32xf32>
    %355 = vector.broadcast %336 : vector<1x32xf32> to vector<16x32xf32>
    %356 = arith.addf %354, %355 : vector<16x32xf32>
    %c0_175 = arith.constant 0 : index
    %c0_176 = arith.constant 0 : index
    %357 = vector.load %arg1[%c0_175, %c0_176] : memref<2x8xf32, #tpu.memory_space<vmem>>, vector<2x8xf32>
    %cst_177 = arith.constant 1.000000e+00 : f32
    %358 = vector.broadcast %cst_177 : f32 to vector<2x8xf32>
    %359 = arith.subf %358, %357 : vector<2x8xf32>
    %cst_178 = arith.constant dense<0.000000e+00> : vector<2xf32>
    %360 = vector.multi_reduction <add>, %359, %cst_178 [1] : vector<2x8xf32> to vector<2xf32>
    %361 = vector.shape_cast %360 : vector<2xf32> to vector<2x1xf32>
    %362 = arith.fptosi %361 : vector<2x1xf32> to vector<2x1xi32>
    %c1_i32 = arith.constant 1 : i32
    %363 = vector.broadcast %c1_i32 : i32 to vector<2x1xi32>
    %364 = arith.subi %362, %363 : vector<2x1xi32>
    %c0_i32 = arith.constant 0 : i32
    %365 = vector.broadcast %c0_i32 : i32 to vector<2x1xi32>
    %366 = arith.maxsi %364, %365 : vector<2x1xi32>
    %367 = tpu.iota {dimensions = array<i32: 0>} : vector<2x1xi32>
    %c8_i32 = arith.constant 8 : i32
    %368 = vector.broadcast %c8_i32 : i32 to vector<2x1xi32>
    %369 = arith.muli %367, %368 : vector<2x1xi32>
    %370 = arith.addi %369, %366 : vector<2x1xi32>
    %371 = tpu.iota {dimensions = array<i32: 1>} : vector<2x16xi32>
    %372 = vector.broadcast %370 : vector<2x1xi32> to vector<2x16xi32>
    %373 = arith.cmpi eq, %371, %372 : vector<2x16xi32>
    %374 = arith.extui %373 : vector<2x16xi1> to vector<2x16xi32>
    %375 = arith.sitofp %374 : vector<2x16xi32> to vector<2x16xf32>
    %cst_179 = arith.constant dense<0.000000e+00> : vector<2x32xf32>
    %376 = tpu.matmul %375, %356, %cst_179 {dimension_numbers = #tpu.dot_dimension_numbers<[1], [0], [0], [1], [0, 0, 1, 1], [], []>} : vector<2x16xf32>, vector<16x32xf32>, vector<2x32xf32> -> vector<2x32xf32>
    %c0_180 = arith.constant 0 : index
    %c0_181 = arith.constant 0 : index
    %377 = vector.load %arg22[%c0_180, %c0_181] : memref<32x128xf32, #tpu.memory_space<vmem>>, vector<32x128xf32>
    %cst_182 = arith.constant dense<0.000000e+00> : vector<2x128xf32>
    %378 = tpu.matmul %376, %377, %cst_182 {dimension_numbers = #tpu.dot_dimension_numbers<[1], [0], [0], [1], [0, 0, 1, 1], [], []>} : vector<2x32xf32>, vector<32x128xf32>, vector<2x128xf32> -> vector<2x128xf32>
    %c0_183 = arith.constant 0 : index
    %c0_184 = arith.constant 0 : index
    %379 = vector.load %arg23[%c0_183, %c0_184] : memref<1x128xf32, #tpu.memory_space<vmem>>, vector<1x128xf32>
    %380 = vector.broadcast %379 : vector<1x128xf32> to vector<2x128xf32>
    %381 = arith.addf %378, %380 : vector<2x128xf32>
    %c0_185 = arith.constant 0 : index
    %c0_186 = arith.constant 0 : index
    %382 = vector.load %arg24[%c0_185, %c0_186] : memref<2x128xf32, #tpu.memory_space<vmem>>, vector<2x128xf32>
    tpu.vector_store %arg24[%c0_185, %c0_186], %381 {strides = array<i32>} : memref<2x128xf32, #tpu.memory_space<vmem>>, vector<2x128xf32>,
    return
  }
}

</mosaic_0001>

<llo_original>
// kernel: tpu_custom_call.1
$region0: #{tpu_custom_call.1}
  #allocation0 [shape = 'u32[]', space=smem, size = 0x4, offset = 0x4, fixed_abs, tag = 'smem constant byte address 0x4 - core index']
  #allocation1 [shape = 'u32[144,128]{1,0:T(1,128)}', space=vmem, size = 0x12000, scoped, tag = 'internal scratch']
  %s0 = inlined_call_operand.vmem [shape: f32[16,6], index: 0, kind: input, shape index: {}]
  %s1 = inlined_call_operand.vmem [shape: f32[2,8], index: 1, kind: input, shape index: {}]
  %s2 = inlined_call_operand.hbm [shape: f32[16,16], index: 2, kind: input, shape index: {}]
  %s3 = inlined_call_operand.hbm [shape: f32[4,1,32], index: 3, kind: input, shape index: {}]
  %s4 = inlined_call_operand.hbm [shape: f32[6,32], index: 4, kind: input, shape index: {}]
  %s5 = inlined_call_operand.hbm [shape: f32[16,32], index: 5, kind: input, shape index: {}]
  %s6 = inlined_call_operand.vmem [shape: f32[2,32,32], index: 6, kind: input, shape index: {}]
  %s7 = inlined_call_operand.hbm [shape: f32[2,1,32], index: 7, kind: input, shape index: {}]
  %s8 = inlined_call_operand.vmem [shape: f32[2,32,32], index: 8, kind: input, shape index: {}]
  %s9 = inlined_call_operand.hbm [shape: f32[2,1,32], index: 9, kind: input, shape index: {}]
  %s10 = inlined_call_operand.vmem [shape: f32[2,32,32], index: 10, kind: input, shape index: {}]
  %s11 = inlined_call_operand.hbm [shape: f32[2,1,32], index: 11, kind: input, shape index: {}]
  %s12 = inlined_call_operand.vmem [shape: f32[2,32,32], index: 12, kind: input, shape index: {}]
  %s13 = inlined_call_operand.hbm [shape: f32[2,1,32], index: 13, kind: input, shape index: {}]
  %s14 = inlined_call_operand.hbm [shape: f32[2,1,32], index: 14, kind: input, shape index: {}]
  %s15 = inlined_call_operand.hbm [shape: f32[2,1,32], index: 15, kind: input, shape index: {}]
  %s16 = inlined_call_operand.hbm [shape: f32[2,1,32], index: 16, kind: input, shape index: {}]
  %s17 = inlined_call_operand.hbm [shape: f32[2,1,32], index: 17, kind: input, shape index: {}]
  %s18 = inlined_call_operand.vmem [shape: f32[2,32,128], index: 18, kind: input, shape index: {}]
  %s19 = inlined_call_operand.hbm [shape: f32[2,1,128], index: 19, kind: input, shape index: {}]
  %s20 = inlined_call_operand.vmem [shape: f32[2,128,32], index: 20, kind: input, shape index: {}]
  %s21 = inlined_call_operand.hbm [shape: f32[2,1,32], index: 21, kind: input, shape index: {}]
  %s22 = inlined_call_operand.vmem [shape: f32[32,128], index: 22, kind: input, shape index: {}]
  %s23 = inlined_call_operand.vmem [shape: f32[1,128], index: 23, kind: input, shape index: {}]
  %s24 = inlined_call_operand.hbm [shape: f32[2,128], index: 24, kind: output, shape index: {}]
  %s25 = sld [smem:[#allocation0]]
  $region162: #{tpu_custom_call.1} parent=0
    _
  %s27 = ssub.s32 1, %s25
  %s28 = scalar_select 0, %s27, %s25
  $region1: #{tpu_custom_call.1} parent=0
    #allocation2 [shape = 'u8[8192]{0}', space=vmem, size = 0x2000, scoped, tag = 'input window, operand 2, single buffered']
    #allocation3 [shape = 's32[1]{0}', space=sflag, size = 0x4, scoped, tag = 'scoped memory for tpu_custom_call.1']
    #allocation4 [shape = 's32[1]{0}', space=sflag, size = 0x4, scoped, tag = 'scoped memory for tpu_custom_call.1']
    #allocation5 [shape = 'u8[2048]{0}', space=vmem, size = 0x800, scoped, tag = 'input window, operand 3, single buffered']
    #allocation6 [shape = 's32[1]{0}', space=sflag, size = 0x4, scoped, tag = 'scoped memory for tpu_custom_call.1']
    #allocation7 [shape = 'u8[4096]{0}', space=vmem, size = 0x1000, scoped, tag = 'input window, operand 4, single buffered']
    #allocation8 [shape = 'u8[8192]{0}', space=vmem, size = 0x2000, scoped, tag = 'input window, operand 5, single buffered']
    #allocation9 [shape = 's32[1]{0}', space=sflag, size = 0x4, scoped, tag = 'scoped memory for tpu_custom_call.1']
    #allocation10 [shape = 'u8[1024]{0}', space=vmem, size = 0x400, scoped, tag = 'input window, operand 7, single buffered']
    #allocation11 [shape = 'u8[1024]{0}', space=vmem, size = 0x400, scoped, tag = 'input window, operand 9, single buffered']
    #allocation12 [shape = 's32[1]{0}', space=sflag, size = 0x4, scoped, tag = 'scoped memory for tpu_custom_call.1']
    #allocation13 [shape = 'u8[1024]{0}', space=vmem, size = 0x400, scoped, tag = 'input window, operand 11, single buffered']
    #allocation14 [shape = 'u8[1024]{0}', space=vmem, size = 0x400, scoped, tag = 'input window, operand 13, single buffered']
    #allocation15 [shape = 's32[1]{0}', space=sflag, size = 0x4, scoped, tag = 'scoped memory for tpu_custom_call.1']
    #allocation16 [shape = 'u8[1024]{0}', space=vmem, size = 0x400, scoped, tag = 'input window, operand 14, single buffered']
    #allocation17 [shape = 'u8[1024]{0}', space=vmem, size = 0x400, scoped, tag = 'input window, operand 15, single buffered']
    #allocation18 [shape = 's32[1]{0}', space=sflag, size = 0x4, scoped, tag = 'scoped memory for tpu_custom_call.1']
    #allocation19 [shape = 'u8[1024]{0}', space=vmem, size = 0x400, scoped, tag = 'input window, operand 16, single buffered']
    #allocation20 [shape = 'u8[1024]{0}', space=vmem, size = 0x400, scoped, tag = 'input window, operand 17, single buffered']
    #allocation21 [shape = 's32[1]{0}', space=sflag, size = 0x4, scoped, tag = 'scoped memory for tpu_custom_call.1']
    #allocation22 [shape = 'u8[1024]{0}', space=vmem, size = 0x400, scoped, tag = 'input window, operand 19, single buffered']
    #allocation23 [shape = 'u8[1024]{0}', space=vmem, size = 0x400, scoped, tag = 'input window, operand 21, single buffered']
    #allocation24 [shape = 's32[1]{0}', space=sflag, size = 0x4, scoped, tag = 'scoped memory for tpu_custom_call.1']
    #allocation25 [shape = 'u8[1024]{0}', space=vmem, size = 0x400, scoped, tag = 'output window, operand 0, single buffered']
    %29 = vsyncpa [#allocation3], 0
    %30 = vsyncpa [#allocation6], 0
    %31 = vsyncpa [#allocation9], 0
    %32 = vsyncpa [#allocation12], 0
    %33 = vsyncpa [#allocation15], 0
    %34 = vsyncpa [#allocation18], 0
    %35 = vsyncpa [#allocation21], 0
    %36 = vsyncpa [#allocation24], 0
    %37 = vsyncpa [#allocation4], 0
    // Predicated region
    $region2: #{tpu_custom_call.1} parent=1 // pred_check
      _
    $region3: #{tpu_custom_call.1} parent=1 // pred_check_branch
      %39 = sbr.rel (0) target = $region5
    $region4: #{tpu_custom_call.1} parent=1 // pred_region
      _
    $region5: #{tpu_custom_call.1} parent=1 // pred_fallthru
      _
    // Predicated region
    $region6: #{tpu_custom_call.1} parent=1 // pred_check
      _
    $region7: #{tpu_custom_call.1} parent=1 // pred_check_branch
      %41 = sbr.rel (0) target = $region9
    $region8: #{tpu_custom_call.1} parent=1 // pred_region
      _
    $region9: #{tpu_custom_call.1} parent=1 // pred_fallthru
      _
    // Predicated region
    $region10: #{tpu_custom_call.1} parent=1 // pred_check
      _
    $region11: #{tpu_custom_call.1} parent=1 // pred_check_branch
      %43 = sbr.rel (0) target = $region13
    $region12: #{tpu_custom_call.1} parent=1 // pred_region
      %s45 = ssub.s32 256, 256
      %46 = vsyncadd [#allocation3], %s45
      %s47 = sshll.u32 [#allocation2], 4
      %s48 = int_to_ptr.vmem [resolvable:$true] %s47
      %53 = dma.hbm_to_vmem [thread:$0]  %s2, 256, %s48, [#allocation3], 128, 128, 8
    $region13: #{tpu_custom_call.1} parent=1 // pred_fallthru
      _
    // Predicated region
    $region14: #{tpu_custom_call.1} parent=1 // pred_check
      _
    $region15: #{tpu_custom_call.1} parent=1 // pred_check_branch
      %55 = sbr.rel (0) target = $region17
    $region16: #{tpu_custom_call.1} parent=1 // pred_region
      %s57 = ssub.s32 64, 64
      %58 = vsyncadd [#allocation6], %s57
      %s59 = sshll.u32 [#allocation5], 4
      %s60 = int_to_ptr.vmem [resolvable:$true] %s59
      %65 = dma.hbm_to_vmem [thread:$0]  %s3, 64, %s60, [#allocation6], 16, 16, 1
    $region17: #{tpu_custom_call.1} parent=1 // pred_fallthru
      _
    // Predicated region
    $region18: #{tpu_custom_call.1} parent=1 // pred_check
      _
    $region19: #{tpu_custom_call.1} parent=1 // pred_check_branch
      %67 = sbr.rel (0) target = $region21
    $region20: #{tpu_custom_call.1} parent=1 // pred_region
      %s69 = ssub.s32 128, 128
      %70 = vsyncadd [#allocation6], %s69
      %s72 = sshll.u32 [#allocation7], 4
      %s73 = int_to_ptr.vmem [resolvable:$true] %s72
      %75 = dma.hbm_to_vmem [thread:$0]  %s4, 128, %s73, [#allocation6]
    $region21: #{tpu_custom_call.1} parent=1 // pred_fallthru
      _
    // Predicated region
    $region22: #{tpu_custom_call.1} parent=1 // pred_check
      _
    $region23: #{tpu_custom_call.1} parent=1 // pred_check_branch
      %77 = sbr.rel (0) target = $region25
    $region24: #{tpu_custom_call.1} parent=1 // pred_region
      %s79 = ssub.s32 256, 256
      %80 = vsyncadd [#allocation9], %s79
      %s81 = sshll.u32 [#allocation8], 4
      %s82 = int_to_ptr.vmem [resolvable:$true] %s81
      %87 = dma.hbm_to_vmem [thread:$0]  %s5, 256, %s82, [#allocation9], 128, 128, 8
    $region25: #{tpu_custom_call.1} parent=1 // pred_fallthru
      _
    // Predicated region
    $region26: #{tpu_custom_call.1} parent=1 // pred_check
      _
    $region27: #{tpu_custom_call.1} parent=1 // pred_check_branch
      %89 = sbr.rel (0) target = $region29
    $region28: #{tpu_custom_call.1} parent=1 // pred_region
      _
    $region29: #{tpu_custom_call.1} parent=1 // pred_fallthru
      _
    // Predicated region
    $region30: #{tpu_custom_call.1} parent=1 // pred_check
      _
    $region31: #{tpu_custom_call.1} parent=1 // pred_check_branch
      %91 = sbr.rel (0) target = $region33
    $region32: #{tpu_custom_call.1} parent=1 // pred_region
      %s93 = ssub.s32 32, 32
      %94 = vsyncadd [#allocation9], %s93
      %s95 = sshll.u32 [#allocation10], 4
      %s96 = int_to_ptr.vmem [resolvable:$true] %s95
      %101 = dma.hbm_to_vmem [thread:$0]  %s7, 32, %s96, [#allocation9], 16, 16, 1
    $region33: #{tpu_custom_call.1} parent=1 // pred_fallthru
      _
    // Predicated region
    $region34: #{tpu_custom_call.1} parent=1 // pred_check
      _
    $region35: #{tpu_custom_call.1} parent=1 // pred_check_branch
      %103 = sbr.rel (0) target = $region37
    $region36: #{tpu_custom_call.1} parent=1 // pred_region
      _
    $region37: #{tpu_custom_call.1} parent=1 // pred_fallthru
      _
    // Predicated region
    $region38: #{tpu_custom_call.1} parent=1 // pred_check
      _
    $region39: #{tpu_custom_call.1} parent=1 // pred_check_branch
      %105 = sbr.rel (0) target = $region41
    $region40: #{tpu_custom_call.1} parent=1 // pred_region
      %s107 = ssub.s32 32, 32
      %108 = vsyncadd [#allocation12], %s107
      %s109 = sshll.u32 [#allocation11], 4
      %s110 = int_to_ptr.vmem [resolvable:$true] %s109
      %115 = dma.hbm_to_vmem [thread:$0]  %s9, 32, %s110, [#allocation12], 16, 16, 1
    $region41: #{tpu_custom_call.1} parent=1 // pred_fallthru
      _
    // Predicated region
    $region42: #{tpu_custom_call.1} parent=1 // pred_check
      _
    $region43: #{tpu_custom_call.1} parent=1 // pred_check_branch
      %117 = sbr.rel (0) target = $region45
    $region44: #{tpu_custom_call.1} parent=1 // pred_region
      _
    $region45: #{tpu_custom_call.1} parent=1 // pred_fallthru
      _
    // Predicated region
    $region46: #{tpu_custom_call.1} parent=1 // pred_check
      _
    $region47: #{tpu_custom_call.1} parent=1 // pred_check_branch
      %119 = sbr.rel (0) target = $region49
    $region48: #{tpu_custom_call.1} parent=1 // pred_region
      %s121 = ssub.s32 32, 32
      %122 = vsyncadd [#allocation12], %s121
      %s123 = sshll.u32 [#allocation13], 4
      %s124 = int_to_ptr.vmem [resolvable:$true] %s123
      %129 = dma.hbm_to_vmem [thread:$0]  %s11, 32, %s124, [#allocation12], 16, 16, 1
    $region49: #{tpu_custom_call.1} parent=1 // pred_fallthru
      _
    // Predicated region
    $region50: #{tpu_custom_call.1} parent=1 // pred_check
      _
    $region51: #{tpu_custom_call.1} parent=1 // pred_check_branch
      %131 = sbr.rel (0) target = $region53
    $region52: #{tpu_custom_call.1} parent=1 // pred_region
      _
    $region53: #{tpu_custom_call.1} parent=1 // pred_fallthru
      _
    // Predicated region
    $region54: #{tpu_custom_call.1} parent=1 // pred_check
      _
    $region55: #{tpu_custom_call.1} parent=1 // pred_check_branch
      %133 = sbr.rel (0) target = $region57
    $region56: #{tpu_custom_call.1} parent=1 // pred_region
      %s135 = ssub.s32 32, 32
      %136 = vsyncadd [#allocation15], %s135
      %s137 = sshll.u32 [#allocation14], 4
      %s138 = int_to_ptr.vmem [resolvable:$true] %s137
      %143 = dma.hbm_to_vmem [thread:$0]  %s13, 32, %s138, [#allocation15], 16, 16, 1
    $region57: #{tpu_custom_call.1} parent=1 // pred_fallthru
      _
    // Predicated region
    $region58: #{tpu_custom_call.1} parent=1 // pred_check
      _
    $region59: #{tpu_custom_call.1} parent=1 // pred_check_branch
      %145 = sbr.rel (0) target = $region61
    $region60: #{tpu_custom_call.1} parent=1 // pred_region
      %s147 = ssub.s32 32, 32
      %148 = vsyncadd [#allocation15], %s147
      %s149 = sshll.u32 [#allocation16], 4
      %s150 = int_to_ptr.vmem [resolvable:$true] %s149
      %155 = dma.hbm_to_vmem [thread:$0]  %s14, 32, %s150, [#allocation15], 16, 16, 1
    $region61: #{tpu_custom_call.1} parent=1 // pred_fallthru
      _
    // Predicated region
    $region62: #{tpu_custom_call.1} parent=1 // pred_check
      _
    $region63: #{tpu_custom_call.1} parent=1 // pred_check_branch
      %157 = sbr.rel (0) target = $region65
    $region64: #{tpu_custom_call.1} parent=1 // pred_region
      %s159 = ssub.s32 32, 32
      %160 = vsyncadd [#allocation18], %s159
      %s161 = sshll.u32 [#allocation17], 4
      %s162 = int_to_ptr.vmem [resolvable:$true] %s161
      %167 = dma.hbm_to_vmem [thread:$0]  %s15, 32, %s162, [#allocation18], 16, 16, 1
    $region65: #{tpu_custom_call.1} parent=1 // pred_fallthru
      _
    // Predicated region
    $region66: #{tpu_custom_call.1} parent=1 // pred_check
      _
    $region67: #{tpu_custom_call.1} parent=1 // pred_check_branch
      %169 = sbr.rel (0) target = $region69
    $region68: #{tpu_custom_call.1} parent=1 // pred_region
      %s171 = ssub.s32 32, 32
      %172 = vsyncadd [#allocation18], %s171
      %s173 = sshll.u32 [#allocation19], 4
      %s174 = int_to_ptr.vmem [resolvable:$true] %s173
      %179 = dma.hbm_to_vmem [thread:$0]  %s16, 32, %s174, [#allocation18], 16, 16, 1
    $region69: #{tpu_custom_call.1} parent=1 // pred_fallthru
      _
    // Predicated region
    $region70: #{tpu_custom_call.1} parent=1 // pred_check
      _
    $region71: #{tpu_custom_call.1} parent=1 // pred_check_branch
      %181 = sbr.rel (0) target = $region73
    $region72: #{tpu_custom_call.1} parent=1 // pred_region
      %s183 = ssub.s32 32, 32
      %184 = vsyncadd [#allocation21], %s183
      %s185 = sshll.u32 [#allocation20], 4
      %s186 = int_to_ptr.vmem [resolvable:$true] %s185
      %191 = dma.hbm_to_vmem [thread:$0]  %s17, 32, %s186, [#allocation21], 16, 16, 1
    $region73: #{tpu_custom_call.1} parent=1 // pred_fallthru
      _
    // Predicated region
    $region74: #{tpu_custom_call.1} parent=1 // pred_check
      _
    $region75: #{tpu_custom_call.1} parent=1 // pred_check_branch
      %193 = sbr.rel (0) target = $region77
    $region76: #{tpu_custom_call.1} parent=1 // pred_region
      _
    $region77: #{tpu_custom_call.1} parent=1 // pred_fallthru
      _
    // Predicated region
    $region78: #{tpu_custom_call.1} parent=1 // pred_check
      _
    $region79: #{tpu_custom_call.1} parent=1 // pred_check_branch
      %195 = sbr.rel (0) target = $region81
    $region80: #{tpu_custom_call.1} parent=1 // pred_region
      %s197 = ssub.s32 32, 32
      %198 = vsyncadd [#allocation21], %s197
      %s199 = sshll.u32 [#allocation22], 4
      %s200 = int_to_ptr.vmem [resolvable:$true] %s199
      %205 = dma.hbm_to_vmem [thread:$0]  %s19, 32, %s200, [#allocation21], 16, 16, 1
    $region81: #{tpu_custom_call.1} parent=1 // pred_fallthru
      _
    // Predicated region
    $region82: #{tpu_custom_call.1} parent=1 // pred_check
      _
    $region83: #{tpu_custom_call.1} parent=1 // pred_check_branch
      %207 = sbr.rel (0) target = $region85
    $region84: #{tpu_custom_call.1} parent=1 // pred_region
      _
    $region85: #{tpu_custom_call.1} parent=1 // pred_fallthru
      _
    // Predicated region
    $region86: #{tpu_custom_call.1} parent=1 // pred_check
      _
    $region87: #{tpu_custom_call.1} parent=1 // pred_check_branch
      %209 = sbr.rel (0) target = $region89
    $region88: #{tpu_custom_call.1} parent=1 // pred_region
      %s211 = ssub.s32 32, 32
      %212 = vsyncadd [#allocation24], %s211
      %s213 = sshll.u32 [#allocation23], 4
      %s214 = int_to_ptr.vmem [resolvable:$true] %s213
      %219 = dma.hbm_to_vmem [thread:$0]  %s21, 32, %s214, [#allocation24], 16, 16, 1
    $region89: #{tpu_custom_call.1} parent=1 // pred_fallthru
      _
    // Predicated region
    $region90: #{tpu_custom_call.1} parent=1 // pred_check
      _
    $region91: #{tpu_custom_call.1} parent=1 // pred_check_branch
      %221 = sbr.rel (0) target = $region93
    $region92: #{tpu_custom_call.1} parent=1 // pred_region
      _
    $region93: #{tpu_custom_call.1} parent=1 // pred_fallthru
      _
    // Predicated region
    $region94: #{tpu_custom_call.1} parent=1 // pred_check
      _
    $region95: #{tpu_custom_call.1} parent=1 // pred_check_branch
      %223 = sbr.rel (0) target = $region97
    $region96: #{tpu_custom_call.1} parent=1 // pred_region
      _
    $region97: #{tpu_custom_call.1} parent=1 // pred_fallthru
      _
    // Predicated region
    $region98: #{tpu_custom_call.1} parent=1 // pred_check
      _
    $region99: #{tpu_custom_call.1} parent=1 // pred_check_branch
      %225 = sbr.rel (0) target = $region101
    $region100: #{tpu_custom_call.1} parent=1 // pred_region
      %226 = dma.done [#allocation3], 256
    $region101: #{tpu_custom_call.1} parent=1 // pred_fallthru
      _
    // Predicated region
    $region102: #{tpu_custom_call.1} parent=1 // pred_check
      _
    $region103: #{tpu_custom_call.1} parent=1 // pred_check_branch
      %228 = sbr.rel (0) target = $region105
    $region104: #{tpu_custom_call.1} parent=1 // pred_region
      %229 = dma.done [#allocation6], 64
    $region105: #{tpu_custom_call.1} parent=1 // pred_fallthru
      _
    // Predicated region
    $region106: #{tpu_custom_call.1} parent=1 // pred_check
      _
    $region107: #{tpu_custom_call.1} parent=1 // pred_check_branch
      %231 = sbr.rel (0) target = $region109
    $region108: #{tpu_custom_call.1} parent=1 // pred_region
      %232 = dma.done [#allocation6], 128
    $region109: #{tpu_custom_call.1} parent=1 // pred_fallthru
      _
    // Predicated region
    $region110: #{tpu_custom_call.1} parent=1 // pred_check
      _
    $region111: #{tpu_custom_call.1} parent=1 // pred_check_branch
      %234 = sbr.rel (0) target = $region113
    $region112: #{tpu_custom_call.1} parent=1 // pred_region
      %235 = dma.done [#allocation9], 256
    $region113: #{tpu_custom_call.1} parent=1 // pred_fallthru
      _
    // Predicated region
    $region114: #{tpu_custom_call.1} parent=1 // pred_check
      _
    $region115: #{tpu_custom_call.1} parent=1 // pred_check_branch
      %237 = sbr.rel (0) target = $region117
    $region116: #{tpu_custom_call.1} parent=1 // pred_region
      %238 = dma.done [#allocation9], 32
    $region117: #{tpu_custom_call.1} parent=1 // pred_fallthru
      _
    // Predicated region
    $region118: #{tpu_custom_call.1} parent=1 // pred_check
      _
    $region119: #{tpu_custom_call.1} parent=1 // pred_check_branch
      %240 = sbr.rel (0) target = $region121
    $region120: #{tpu_custom_call.1} parent=1 // pred_region
      %241 = dma.done [#allocation12], 32
    $region121: #{tpu_custom_call.1} parent=1 // pred_fallthru
      _
    // Predicated region
    $region122: #{tpu_custom_call.1} parent=1 // pred_check
      _
    $region123: #{tpu_custom_call.1} parent=1 // pred_check_branch
      %243 = sbr.rel (0) target = $region125
    $region124: #{tpu_custom_call.1} parent=1 // pred_region
      %244 = dma.done [#allocation12], 32
    $region125: #{tpu_custom_call.1} parent=1 // pred_fallthru
      _
    // Predicated region
    $region126: #{tpu_custom_call.1} parent=1 // pred_check
      _
    $region127: #{tpu_custom_call.1} parent=1 // pred_check_branch
      %246 = sbr.rel (0) target = $region129
    $region128: #{tpu_custom_call.1} parent=1 // pred_region
      %247 = dma.done [#allocation15], 32
    $region129: #{tpu_custom_call.1} parent=1 // pred_fallthru
      _
    // Predicated region
    $region130: #{tpu_custom_call.1} parent=1 // pred_check
      _
    $region131: #{tpu_custom_call.1} parent=1 // pred_check_branch
      %249 = sbr.rel (0) target = $region133
    $region132: #{tpu_custom_call.1} parent=1 // pred_region
      %250 = dma.done [#allocation15], 32
    $region133: #{tpu_custom_call.1} parent=1 // pred_fallthru
      _
    // Predicated region
    $region134: #{tpu_custom_call.1} parent=1 // pred_check
      _
    $region135: #{tpu_custom_call.1} parent=1 // pred_check_branch
      %252 = sbr.rel (0) target = $region137
    $region136: #{tpu_custom_call.1} parent=1 // pred_region
      %253 = dma.done [#allocation18], 32
    $region137: #{tpu_custom_call.1} parent=1 // pred_fallthru
      _
    // Predicated region
    $region138: #{tpu_custom_call.1} parent=1 // pred_check
      _
    $region139: #{tpu_custom_call.1} parent=1 // pred_check_branch
      %255 = sbr.rel (0) target = $region141
    $region140: #{tpu_custom_call.1} parent=1 // pred_region
      %256 = dma.done [#allocation18], 32
    $region141: #{tpu_custom_call.1} parent=1 // pred_fallthru
      _
    // Predicated region
    $region142: #{tpu_custom_call.1} parent=1 // pred_check
      _
    $region143: #{tpu_custom_call.1} parent=1 // pred_check_branch
      %258 = sbr.rel (0) target = $region145
    $region144: #{tpu_custom_call.1} parent=1 // pred_region
      %259 = dma.done [#allocation21], 32
    $region145: #{tpu_custom_call.1} parent=1 // pred_fallthru
      _
    // Predicated region
    $region146: #{tpu_custom_call.1} parent=1 // pred_check
      _
    $region147: #{tpu_custom_call.1} parent=1 // pred_check_branch
      %261 = sbr.rel (0) target = $region149
    $region148: #{tpu_custom_call.1} parent=1 // pred_region
      %262 = dma.done [#allocation21], 32
    $region149: #{tpu_custom_call.1} parent=1 // pred_fallthru
      _
    // Predicated region
    $region150: #{tpu_custom_call.1} parent=1 // pred_check
      _
    $region151: #{tpu_custom_call.1} parent=1 // pred_check_branch
      %264 = sbr.rel (0) target = $region153
    $region152: #{tpu_custom_call.1} parent=1 // pred_region
      %265 = dma.done [#allocation24], 32
    $region153: #{tpu_custom_call.1} parent=1 // pred_fallthru
      _
    %v266 = vld [vmem:[%s0] sm:$0xff]
    %v267 = vld [vmem:[%s0 + $0x8] sm:$0xff]
    %v268 = vld [vmem:[#allocation7] sm:$0x3f]
    %v269 = vld [vmem:[#allocation8] sm:$0xff]
    %v270 = vld [vmem:[#allocation8 + $0x8] sm:$0xff]
    %vm271 = vcmask 48128
    %v273 = vsel %vm271, %v266, 0
    %v276 = vsel %vm271, %v267, 0
    %vm278 = vcmask 1045504
    %v280 = vsel %vm278, %v268, 0
    %282 = vmatprep.subr.mxu0 0.0
    %283 = vmatpush1.msra.mxu0 %v280
    %284 = vmatprep.subr.mxu0 0.0
    %285 = vmatpush1.msra.mxu0 0.0
    %286 = vmatprep.subr.mxu0 0.0
    %287 = vmatpush1.msra.mxu0 0.0
    %288 = vmatprep.subr.mxu0 0.0
    %289 = vmatpush1.msra.mxu0 0.0
    %290 = vmatprep.subr.mxu0 0.0
    %291 = vmatpush1.msra.mxu0 0.0
    %292 = vmatprep.subr.mxu0 0.0
    %293 = vmatpush1.msra.mxu0 0.0
    %294 = vmatprep.subr.mxu0 0.0
    %295 = vmatpush1.msra.mxu0 0.0
    %296 = vmatprep.subr.mxu0 0.0
    %297 = vmatpush1.msra.mxu0 0.0
    %298 = vmatprep.subr.mxu0 0.0
    %299 = vmatpush1.msra.mxu0 0.0
    %300 = vmatprep.subr.mxu0 0.0
    %301 = vmatpush1.msra.mxu0 0.0
    %302 = vmatprep.subr.mxu0 0.0
    %303 = vmatpush1.msra.mxu0 0.0
    %304 = vmatprep.subr.mxu0 0.0
    %305 = vmatpush1.msra.mxu0 0.0
    %306 = vmatprep.subr.mxu0 0.0
    %307 = vmatpush1.msra.mxu0 0.0
    %308 = vmatprep.subr.mxu0 0.0
    %309 = vmatpush1.msra.mxu0 0.0
    %310 = vmatprep.subr.mxu0 0.0
    %311 = vmatpush1.msra.mxu0 0.0
    %312 = vmatprep.subr.mxu0 0.0
    %313 = vmatpush1.msra.mxu0 0.0
    %314 = vmatprep.subr.mxu0 0.0
    %315 = vmatpush1.msra.mxu0 0.0
    %316 = vmatprep.subr.mxu0 0.0
    %317 = vmatpush1.msra.mxu0 0.0
    %318 = vmatprep.subr.mxu0 0.0
    %319 = vmatpush1.msra.mxu0 0.0
    %320 = vmatprep.subr.mxu0 0.0
    %321 = vmatpush1.msra.mxu0 0.0
    %322 = vmatprep.subr.mxu0 0.0
    %323 = vmatpush1.msra.mxu0 0.0
    %324 = vmatprep.subr.mxu0 0.0
    %325 = vmatpush1.msra.mxu0 0.0
    %326 = vmatprep.subr.mxu0 0.0
    %327 = vmatpush1.msra.mxu0 0.0
    %328 = vmatprep.subr.mxu0 0.0
    %329 = vmatpush1.msra.mxu0 0.0
    %330 = vmatprep.subr.mxu0 0.0
    %331 = vmatpush1.msra.mxu0 0.0
    %332 = vmatprep.subr.mxu0 0.0
    %333 = vmatpush1.msra.mxu0 0.0
    %334 = vmatprep.subr.mxu0 0.0
    %335 = vmatpush1.msra.mxu0 0.0
    %336 = vmatprep.subr.mxu0 0.0
    %337 = vmatpush1.msra.mxu0 0.0
    %338 = vmatprep.subr.mxu0 0.0
    %339 = vmatpush1.msra.mxu0 0.0
    %340 = vmatprep.subr.mxu0 0.0
    %341 = vmatpush1.msra.mxu0 0.0
    %342 = vmatprep.subr.mxu0 0.0
    %343 = vmatpush1.msra.mxu0 0.0
    %344 = vmatprep.subr.mxu0 0.0
    %345 = vmatpush1.msra.mxu0 0.0
    %346 = vmatprep.mubr.f32.mxu0 0.0
    %347 = vmatmul.mubr.f32.gmra.mrb[0].mxu0 %v273
    %v348 = vpop.f32.mrb[0].mxu0
    %v349 = vadd.f32 %v269, %v348
    %v350 = vpop.f32.mrb[0].mxu0
    %351 = vmatprep.mubr.f32.mxu0 0.0
    %352 = vmatmul.mubr.f32.gmra.mrb[0].mxu0 %v276
    %v353 = vpop.f32.mrb[0].mxu0
    %v354 = vadd.f32 %v270, %v353
    %v355 = vpop.f32.mrb[0].mxu0
    %356 = vdwg.mxu0
    %v357 = vld [vmem:[#allocation2] sm:$0xff]
    %v358 = vld [vmem:[#allocation2 + $0x8] sm:$0xff]
    %v359 = vld [vmem:[#allocation5] sm:$0x1]
    %v360 = vld [vmem:[#allocation5 + $0x1] sm:$0x1]
    %v361 = vld [vmem:[#allocation5 + $0x2] sm:$0x1]
    %v362 = vld [vmem:[#allocation5 + $0x3] sm:$0x1]
    %v363 = vld [vmem:[%s6] sm:$0xff]
    %v364 = vld [vmem:[%s6 + $0x8] sm:$0xff]
    %v365 = vld [vmem:[%s6 + $0x10] sm:$0xff]
    %v366 = vld [vmem:[%s6 + $0x18] sm:$0xff]
    %v367 = vld [vmem:[#allocation10] sm:$0x1]
    %v369 = vlaneseq
    %v370 = vshrl.u32 %v369, 7
    %v371 = vsub.s32 0, %v370
    %v372 = vrot.slane %v367, %v371
    %vm374 = vcmask 261120
    %v376 = vsel %vm374, %v349, 0
    %v379 = vsel %vm374, %v354, 0
    %381 = vmatprep.subr.mxu0 0.0
    %382 = vmatpush1.msra.mxu0 %v363
    %383 = vmatprep.subr.mxu0 0.0
    %384 = vmatpush1.msra.mxu0 %v364
    %385 = vmatprep.subr.mxu0 0.0
    %386 = vmatpush1.msra.mxu0 %v365
    %387 = vmatprep.subr.mxu0 0.0
    %388 = vmatpush1.msra.mxu0 %v366
    %389 = vmatprep.subr.mxu0 0.0
    %390 = vmatpush1.msra.mxu0 0.0
    %391 = vmatprep.subr.mxu0 0.0
    %392 = vmatpush1.msra.mxu0 0.0
    %393 = vmatprep.subr.mxu0 0.0
    %394 = vmatpush1.msra.mxu0 0.0
    %395 = vmatprep.subr.mxu0 0.0
    %396 = vmatpush1.msra.mxu0 0.0
    %397 = vmatprep.subr.mxu0 0.0
    %398 = vmatpush1.msra.mxu0 0.0
    %399 = vmatprep.subr.mxu0 0.0
    %400 = vmatpush1.msra.mxu0 0.0
    %401 = vmatprep.subr.mxu0 0.0
    %402 = vmatpush1.msra.mxu0 0.0
    %403 = vmatprep.subr.mxu0 0.0
    %404 = vmatpush1.msra.mxu0 0.0
    %405 = vmatprep.subr.mxu0 0.0
    %406 = vmatpush1.msra.mxu0 0.0
    %407 = vmatprep.subr.mxu0 0.0
    %408 = vmatpush1.msra.mxu0 0.0
    %409 = vmatprep.subr.mxu0 0.0
    %410 = vmatpush1.msra.mxu0 0.0
    %411 = vmatprep.subr.mxu0 0.0
    %412 = vmatpush1.msra.mxu0 0.0
    %413 = vmatprep.subr.mxu0 0.0
    %414 = vmatpush1.msra.mxu0 0.0
    %415 = vmatprep.subr.mxu0 0.0
    %416 = vmatpush1.msra.mxu0 0.0
    %417 = vmatprep.subr.mxu0 0.0
    %418 = vmatpush1.msra.mxu0 0.0
    %419 = vmatprep.subr.mxu0 0.0
    %420 = vmatpush1.msra.mxu0 0.0
    %421 = vmatprep.subr.mxu0 0.0
    %422 = vmatpush1.msra.mxu0 0.0
    %423 = vmatprep.subr.mxu0 0.0
    %424 = vmatpush1.msra.mxu0 0.0
    %425 = vmatprep.subr.mxu0 0.0
    %426 = vmatpush1.msra.mxu0 0.0
    %427 = vmatprep.subr.mxu0 0.0
    %428 = vmatpush1.msra.mxu0 0.0
    %429 = vmatprep.subr.mxu0 0.0
    %430 = vmatpush1.msra.mxu0 0.0
    %431 = vmatprep.subr.mxu0 0.0
    %432 = vmatpush1.msra.mxu0 0.0
    %433 = vmatprep.subr.mxu0 0.0
    %434 = vmatpush1.msra.mxu0 0.0
    %435 = vmatprep.subr.mxu0 0.0
    %436 = vmatpush1.msra.mxu0 0.0
    %437 = vmatprep.subr.mxu0 0.0
    %438 = vmatpush1.msra.mxu0 0.0
    %439 = vmatprep.subr.mxu0 0.0
    %440 = vmatpush1.msra.mxu0 0.0
    %441 = vmatprep.subr.mxu0 0.0
    %442 = vmatpush1.msra.mxu0 0.0
    %443 = vmatprep.subr.mxu0 0.0
    %444 = vmatpush1.msra.mxu0 0.0
    %445 = vmatprep.mubr.f32.mxu0 0.0
    %446 = vmatmul.mubr.f32.gmra.mrb[0].mxu0 %v376
    %v447 = vpop.f32.mrb[0].mxu0
    %v448 = vadd.f32 %v372, %v447
    %v449 = vpop.f32.mrb[0].mxu0
    %450 = vmatprep.mubr.f32.mxu0 0.0
    %451 = vmatmul.mubr.f32.gmra.mrb[0].mxu0 %v379
    %v452 = vpop.f32.mrb[0].mxu0
    %v453 = vadd.f32 %v372, %v452
    %v454 = vpop.f32.mrb[0].mxu0
    %455 = vdwg.mxu0
    %v456 = vld [vmem:[%s8] sm:$0xff]
    %v457 = vld [vmem:[%s8 + $0x8] sm:$0xff]
    %v458 = vld [vmem:[%s8 + $0x10] sm:$0xff]
    %v459 = vld [vmem:[%s8 + $0x18] sm:$0xff]
    %v460 = vld [vmem:[#allocation11] sm:$0x1]
    %v462 = vlaneseq
    %v463 = vshrl.u32 %v462, 7
    %v464 = vsub.s32 0, %v463
    %v465 = vrot.slane %v460, %v464
    %467 = vmatprep.subr.mxu0 0.0
    %468 = vmatpush1.msra.mxu0 %v456
    %469 = vmatprep.subr.mxu0 0.0
    %470 = vmatpush1.msra.mxu0 %v457
    %471 = vmatprep.subr.mxu0 0.0
    %472 = vmatpush1.msra.mxu0 %v458
    %473 = vmatprep.subr.mxu0 0.0
    %474 = vmatpush1.msra.mxu0 %v459
    %475 = vmatprep.subr.mxu0 0.0
    %476 = vmatpush1.msra.mxu0 0.0
    %477 = vmatprep.subr.mxu0 0.0
    %478 = vmatpush1.msra.mxu0 0.0
    %479 = vmatprep.subr.mxu0 0.0
    %480 = vmatpush1.msra.mxu0 0.0
    %481 = vmatprep.subr.mxu0 0.0
    %482 = vmatpush1.msra.mxu0 0.0
    %483 = vmatprep.subr.mxu0 0.0
    %484 = vmatpush1.msra.mxu0 0.0
    %485 = vmatprep.subr.mxu0 0.0
    %486 = vmatpush1.msra.mxu0 0.0
    %487 = vmatprep.subr.mxu0 0.0
    %488 = vmatpush1.msra.mxu0 0.0
    %489 = vmatprep.subr.mxu0 0.0
    %490 = vmatpush1.msra.mxu0 0.0
    %491 = vmatprep.subr.mxu0 0.0
    %492 = vmatpush1.msra.mxu0 0.0
    %493 = vmatprep.subr.mxu0 0.0
    %494 = vmatpush1.msra.mxu0 0.0
    %495 = vmatprep.subr.mxu0 0.0
    %496 = vmatpush1.msra.mxu0 0.0
    %497 = vmatprep.subr.mxu0 0.0
    %498 = vmatpush1.msra.mxu0 0.0
    %499 = vmatprep.subr.mxu0 0.0
    %500 = vmatpush1.msra.mxu0 0.0
    %501 = vmatprep.subr.mxu0 0.0
    %502 = vmatpush1.msra.mxu0 0.0
    %503 = vmatprep.subr.mxu0 0.0
    %504 = vmatpush1.msra.mxu0 0.0
    %505 = vmatprep.subr.mxu0 0.0
    %506 = vmatpush1.msra.mxu0 0.0
    %507 = vmatprep.subr.mxu0 0.0
    %508 = vmatpush1.msra.mxu0 0.0
    %509 = vmatprep.subr.mxu0 0.0
    %510 = vmatpush1.msra.mxu0 0.0
    %511 = vmatprep.subr.mxu0 0.0
    %512 = vmatpush1.msra.mxu0 0.0
    %513 = vmatprep.subr.mxu0 0.0
    %514 = vmatpush1.msra.mxu0 0.0
    %515 = vmatprep.subr.mxu0 0.0
    %516 = vmatpush1.msra.mxu0 0.0
    %517 = vmatprep.subr.mxu0 0.0
    %518 = vmatpush1.msra.mxu0 0.0
    %519 = vmatprep.subr.mxu0 0.0
    %520 = vmatpush1.msra.mxu0 0.0
    %521 = vmatprep.subr.mxu0 0.0
    %522 = vmatpush1.msra.mxu0 0.0
    %523 = vmatprep.subr.mxu0 0.0
    %524 = vmatpush1.msra.mxu0 0.0
    %525 = vmatprep.subr.mxu0 0.0
    %526 = vmatpush1.msra.mxu0 0.0
    %527 = vmatprep.subr.mxu0 0.0
    %528 = vmatpush1.msra.mxu0 0.0
    %529 = vmatprep.subr.mxu0 0.0
    %530 = vmatpush1.msra.mxu0 0.0
    %531 = vmatprep.mubr.f32.mxu0 0.0
    %532 = vmatmul.mubr.f32.gmra.mrb[0].mxu0 %v376
    %v533 = vpop.f32.mrb[0].mxu0
    %v534 = vadd.f32 %v465, %v533
    %v535 = vpop.f32.mrb[0].mxu0
    %536 = vmatprep.mubr.f32.mxu0 0.0
    %537 = vmatmul.mubr.f32.gmra.mrb[0].mxu0 %v379
    %v538 = vpop.f32.mrb[0].mxu0
    %v539 = vadd.f32 %v465, %v538
    %v540 = vpop.f32.mrb[0].mxu0
    %541 = vdwg.mxu0
    %v542 = vld [vmem:[%s10] sm:$0xff]
    %v543 = vld [vmem:[%s10 + $0x8] sm:$0xff]
    %v544 = vld [vmem:[%s10 + $0x10] sm:$0xff]
    %v545 = vld [vmem:[%s10 + $0x18] sm:$0xff]
    %v546 = vld [vmem:[#allocation13] sm:$0x1]
    %v548 = vlaneseq
    %v549 = vshrl.u32 %v548, 7
    %v550 = vsub.s32 0, %v549
    %v551 = vrot.slane %v546, %v550
    %553 = vmatprep.subr.mxu0 0.0
    %554 = vmatpush1.msra.mxu0 %v542
    %555 = vmatprep.subr.mxu0 0.0
    %556 = vmatpush1.msra.mxu0 %v543
    %557 = vmatprep.subr.mxu0 0.0
    %558 = vmatpush1.msra.mxu0 %v544
    %559 = vmatprep.subr.mxu0 0.0
    %560 = vmatpush1.msra.mxu0 %v545
    %561 = vmatprep.subr.mxu0 0.0
    %562 = vmatpush1.msra.mxu0 0.0
    %563 = vmatprep.subr.mxu0 0.0
    %564 = vmatpush1.msra.mxu0 0.0
    %565 = vmatprep.subr.mxu0 0.0
    %566 = vmatpush1.msra.mxu0 0.0
    %567 = vmatprep.subr.mxu0 0.0
    %568 = vmatpush1.msra.mxu0 0.0
    %569 = vmatprep.subr.mxu0 0.0
    %570 = vmatpush1.msra.mxu0 0.0
    %571 = vmatprep.subr.mxu0 0.0
    %572 = vmatpush1.msra.mxu0 0.0
    %573 = vmatprep.subr.mxu0 0.0
    %574 = vmatpush1.msra.mxu0 0.0
    %575 = vmatprep.subr.mxu0 0.0
    %576 = vmatpush1.msra.mxu0 0.0
    %577 = vmatprep.subr.mxu0 0.0
    %578 = vmatpush1.msra.mxu0 0.0
    %579 = vmatprep.subr.mxu0 0.0
    %580 = vmatpush1.msra.mxu0 0.0
    %581 = vmatprep.subr.mxu0 0.0
    %582 = vmatpush1.msra.mxu0 0.0
    %583 = vmatprep.subr.mxu0 0.0
    %584 = vmatpush1.msra.mxu0 0.0
    %585 = vmatprep.subr.mxu0 0.0
    %586 = vmatpush1.msra.mxu0 0.0
    %587 = vmatprep.subr.mxu0 0.0
    %588 = vmatpush1.msra.mxu0 0.0
    %589 = vmatprep.subr.mxu0 0.0
    %590 = vmatpush1.msra.mxu0 0.0
    %591 = vmatprep.subr.mxu0 0.0
    %592 = vmatpush1.msra.mxu0 0.0
    %593 = vmatprep.subr.mxu0 0.0
    %594 = vmatpush1.msra.mxu0 0.0
    %595 = vmatprep.subr.mxu0 0.0
    %596 = vmatpush1.msra.mxu0 0.0
    %597 = vmatprep.subr.mxu0 0.0
    %598 = vmatpush1.msra.mxu0 0.0
    %599 = vmatprep.subr.mxu0 0.0
    %600 = vmatpush1.msra.mxu0 0.0
    %601 = vmatprep.subr.mxu0 0.0
    %602 = vmatpush1.msra.mxu0 0.0
    %603 = vmatprep.subr.mxu0 0.0
    %604 = vmatpush1.msra.mxu0 0.0
    %605 = vmatprep.subr.mxu0 0.0
    %606 = vmatpush1.msra.mxu0 0.0
    %607 = vmatprep.subr.mxu0 0.0
    %608 = vmatpush1.msra.mxu0 0.0
    %609 = vmatprep.subr.mxu0 0.0
    %610 = vmatpush1.msra.mxu0 0.0
    %611 = vmatprep.subr.mxu0 0.0
    %612 = vmatpush1.msra.mxu0 0.0
    %613 = vmatprep.subr.mxu0 0.0
    %614 = vmatpush1.msra.mxu0 0.0
    %615 = vmatprep.subr.mxu0 0.0
    %616 = vmatpush1.msra.mxu0 0.0
    %617 = vmatprep.mubr.f32.mxu0 0.0
    %618 = vmatmul.mubr.f32.gmra.mrb[0].mxu0 %v376
    %v619 = vpop.f32.mrb[0].mxu0
    %v620 = vadd.f32 %v551, %v619
    %v621 = vpop.f32.mrb[0].mxu0
    %622 = vmatprep.mubr.f32.mxu0 0.0
    %623 = vmatmul.mubr.f32.gmra.mrb[0].mxu0 %v379
    %v624 = vpop.f32.mrb[0].mxu0
    %v625 = vadd.f32 %v551, %v624
    %v626 = vpop.f32.mrb[0].mxu0
    %627 = vdwg.mxu0
    %v629 = vlaneseq
    %v630 = vshrl.u32 %v629, 7
    %v631 = vsub.s32 0, %v630
    %v632 = vrot.slane %v359, %v631
    %v634 = vmul.f32 %v448, %v632
    %v635 = vmul.f32 %v453, %v632
    %v637 = vsel %vm374, %v634, 0
    %v640 = vsel %vm374, %v635, 0
    %v643 = vsel %vm374, %v534, 0
    %v646 = vsel %vm374, %v539, 0
    %648 = vmatprep.subr.mxu0 0.0
    %649 = vmatpush1.xpose.msra.mxu0 %v643
    %650 = vmatprep.subr.mxu0 0.0
    %651 = vmatpush1.xpose.msra.mxu0 %v646
    %652 = vmatprep.subr.mxu0 0.0
    %653 = vmatpush1.xpose.msra.mxu0 0.0
    %654 = vmatprep.subr.mxu0 0.0
    %655 = vmatpush1.xpose.msra.mxu0 0.0
    %656 = vmatprep.subr.mxu0 0.0
    %657 = vmatpush1.xpose.msra.mxu0 0.0
    %658 = vmatprep.subr.mxu0 0.0
    %659 = vmatpush1.xpose.msra.mxu0 0.0
    %660 = vmatprep.subr.mxu0 0.0
    %661 = vmatpush1.xpose.msra.mxu0 0.0
    %662 = vmatprep.subr.mxu0 0.0
    %663 = vmatpush1.xpose.msra.mxu0 0.0
    %664 = vmatprep.subr.mxu0 0.0
    %665 = vmatpush1.xpose.msra.mxu0 0.0
    %666 = vmatprep.subr.mxu0 0.0
    %667 = vmatpush1.xpose.msra.mxu0 0.0
    %668 = vmatprep.subr.mxu0 0.0
    %669 = vmatpush1.xpose.msra.mxu0 0.0
    %670 = vmatprep.subr.mxu0 0.0
    %671 = vmatpush1.xpose.msra.mxu0 0.0
    %672 = vmatprep.subr.mxu0 0.0
    %673 = vmatpush1.xpose.msra.mxu0 0.0
    %674 = vmatprep.subr.mxu0 0.0
    %675 = vmatpush1.xpose.msra.mxu0 0.0
    %676 = vmatprep.subr.mxu0 0.0
    %677 = vmatpush1.xpose.msra.mxu0 0.0
    %678 = vmatprep.subr.mxu0 0.0
    %679 = vmatpush1.xpose.msra.mxu0 0.0
    %680 = vmatprep.subr.mxu0 0.0
    %681 = vmatpush1.xpose.msra.mxu0 0.0
    %682 = vmatprep.subr.mxu0 0.0
    %683 = vmatpush1.xpose.msra.mxu0 0.0
    %684 = vmatprep.subr.mxu0 0.0
    %685 = vmatpush1.xpose.msra.mxu0 0.0
    %686 = vmatprep.subr.mxu0 0.0
    %687 = vmatpush1.xpose.msra.mxu0 0.0
    %688 = vmatprep.subr.mxu0 0.0
    %689 = vmatpush1.xpose.msra.mxu0 0.0
    %690 = vmatprep.subr.mxu0 0.0
    %691 = vmatpush1.xpose.msra.mxu0 0.0
    %692 = vmatprep.subr.mxu0 0.0
    %693 = vmatpush1.xpose.msra.mxu0 0.0
    %694 = vmatprep.subr.mxu0 0.0
    %695 = vmatpush1.xpose.msra.mxu0 0.0
    %696 = vmatprep.subr.mxu0 0.0
    %697 = vmatpush1.xpose.msra.mxu0 0.0
    %698 = vmatprep.subr.mxu0 0.0
    %699 = vmatpush1.xpose.msra.mxu0 0.0
    %700 = vmatprep.subr.mxu0 0.0
    %701 = vmatpush1.xpose.msra.mxu0 0.0
    %702 = vmatprep.subr.mxu0 0.0
    %703 = vmatpush1.xpose.msra.mxu0 0.0
    %704 = vmatprep.subr.mxu0 0.0
    %705 = vmatpush1.xpose.msra.mxu0 0.0
    %706 = vmatprep.subr.mxu0 0.0
    %707 = vmatpush1.xpose.msra.mxu0 0.0
    %708 = vmatprep.subr.mxu0 0.0
    %709 = vmatpush1.xpose.msra.mxu0 0.0
    %710 = vmatprep.subr.mxu0 0.0
    %711 = vmatpush1.xpose.msra.mxu0 0.0
    %712 = vmatprep.mubr.f32.mxu0 0.0
    %713 = vmatmul.mubr.f32.gmra.mrb[0].mxu0 %v637
    %v714 = vpop.f32.mrb[0].mxu0
    %v715 = vadd.f32 %v357, %v714
    %v716 = vpop.f32.mrb[0].mxu0
    %717 = vmatprep.mubr.f32.mxu0 0.0
    %718 = vmatmul.mubr.f32.gmra.mrb[0].mxu0 %v640
    %v719 = vpop.f32.mrb[0].mxu0
    %v720 = vadd.f32 %v358, %v719
    %v721 = vpop.f32.mrb[0].mxu0
    %722 = vdwg.mxu0
    %vm723 = vcmask 130048
    %v724 = vsel %vm723, %v715, -inf
    %725 = vmax.xlane.f32.xlu0 %v724
    %v726 = vpop.xlane.xlu0 %725
    %v727 = vsel %vm723, %v720, -inf
    %728 = vmax.xlane.f32.xlu0 %v727
    %v729 = vpop.xlane.xlu0 %728
    %v730 = vsub.f32 %v715, %v726
    %v731 = vsub.f32 %v720, %v729
    %v732 = vmul.f32 %v730, 1.442695
    %v733 = vpow.pop %v732
    %v734 = vmul.f32 %v731, 1.442695
    %v735 = vpow.pop %v734
    %v736 = vsel %vm723, %v733, 0.0
    %737 = vadd.xlane.f32.xlu0 %v736
    %v738 = vpop.xlane.xlu0 %737
    %v739 = vsel %vm723, %v735, 0.0
    %740 = vadd.xlane.f32.xlu0 %v739
    %v741 = vpop.xlane.xlu0 %740
    %v742 = vrcp.pop %v738
    %v743 = vmul.f32 %v733, %v742
    %v744 = vrcp.pop %v741
    %v745 = vmul.f32 %v735, %v744
    %v747 = vsel %vm723, %v743, 0
    %v750 = vsel %vm723, %v745, 0
    %752 = vmatprep.subr.mxu0 0.0
    %753 = vmatpush1.msra.mxu0 %v620
    %754 = vmatprep.subr.mxu0 0.0
    %755 = vmatpush1.msra.mxu0 %v625
    %756 = vmatprep.subr.mxu0 0.0
    %757 = vmatpush1.msra.mxu0 0.0
    %758 = vmatprep.subr.mxu0 0.0
    %759 = vmatpush1.msra.mxu0 0.0
    %760 = vmatprep.subr.mxu0 0.0
    %761 = vmatpush1.msra.mxu0 0.0
    %762 = vmatprep.subr.mxu0 0.0
    %763 = vmatpush1.msra.mxu0 0.0
    %764 = vmatprep.subr.mxu0 0.0
    %765 = vmatpush1.msra.mxu0 0.0
    %766 = vmatprep.subr.mxu0 0.0
    %767 = vmatpush1.msra.mxu0 0.0
    %768 = vmatprep.subr.mxu0 0.0
    %769 = vmatpush1.msra.mxu0 0.0
    %770 = vmatprep.subr.mxu0 0.0
    %771 = vmatpush1.msra.mxu0 0.0
    %772 = vmatprep.subr.mxu0 0.0
    %773 = vmatpush1.msra.mxu0 0.0
    %774 = vmatprep.subr.mxu0 0.0
    %775 = vmatpush1.msra.mxu0 0.0
    %776 = vmatprep.subr.mxu0 0.0
    %777 = vmatpush1.msra.mxu0 0.0
    %778 = vmatprep.subr.mxu0 0.0
    %779 = vmatpush1.msra.mxu0 0.0
    %780 = vmatprep.subr.mxu0 0.0
    %781 = vmatpush1.msra.mxu0 0.0
    %782 = vmatprep.subr.mxu0 0.0
    %783 = vmatpush1.msra.mxu0 0.0
    %784 = vmatprep.subr.mxu0 0.0
    %785 = vmatpush1.msra.mxu0 0.0
    %786 = vmatprep.subr.mxu0 0.0
    %787 = vmatpush1.msra.mxu0 0.0
    %788 = vmatprep.subr.mxu0 0.0
    %789 = vmatpush1.msra.mxu0 0.0
    %790 = vmatprep.subr.mxu0 0.0
    %791 = vmatpush1.msra.mxu0 0.0
    %792 = vmatprep.subr.mxu0 0.0
    %793 = vmatpush1.msra.mxu0 0.0
    %794 = vmatprep.subr.mxu0 0.0
    %795 = vmatpush1.msra.mxu0 0.0
    %796 = vmatprep.subr.mxu0 0.0
    %797 = vmatpush1.msra.mxu0 0.0
    %798 = vmatprep.subr.mxu0 0.0
    %799 = vmatpush1.msra.mxu0 0.0
    %800 = vmatprep.subr.mxu0 0.0
    %801 = vmatpush1.msra.mxu0 0.0
    %802 = vmatprep.subr.mxu0 0.0
    %803 = vmatpush1.msra.mxu0 0.0
    %804 = vmatprep.subr.mxu0 0.0
    %805 = vmatpush1.msra.mxu0 0.0
    %806 = vmatprep.subr.mxu0 0.0
    %807 = vmatpush1.msra.mxu0 0.0
    %808 = vmatprep.subr.mxu0 0.0
    %809 = vmatpush1.msra.mxu0 0.0
    %810 = vmatprep.subr.mxu0 0.0
    %811 = vmatpush1.msra.mxu0 0.0
    %812 = vmatprep.subr.mxu0 0.0
    %813 = vmatpush1.msra.mxu0 0.0
    %814 = vmatprep.subr.mxu0 0.0
    %815 = vmatpush1.msra.mxu0 0.0
    %816 = vmatprep.mubr.f32.mxu0 0.0
    %817 = vmatmul.mubr.f32.gmra.mrb[0].mxu0 %v747
    %v818 = vpop.f32.mrb[0].mxu0
    %v819 = vadd.f32 0.0, %v818
    %v820 = vpop.f32.mrb[0].mxu0
    %821 = vmatprep.mubr.f32.mxu0 0.0
    %822 = vmatmul.mubr.f32.gmra.mrb[0].mxu0 %v750
    %v823 = vpop.f32.mrb[0].mxu0
    %v824 = vadd.f32 0.0, %v823
    %v825 = vpop.f32.mrb[0].mxu0
    %826 = vdwg.mxu0
    %v827 = vmul.f32 %v819, %v632
    %v828 = vmul.f32 %v824, %v632
    %v830 = vlaneseq
    %v831 = vshrl.u32 %v830, 7
    %v832 = vsub.s32 0, %v831
    %v833 = vrot.slane %v360, %v832
    %v835 = vmul.f32 %v448, %v833
    %v836 = vmul.f32 %v453, %v833
    %v838 = vsel %vm374, %v835, 0
    %v841 = vsel %vm374, %v836, 0
    %843 = vmatprep.subr.mxu0 0.0
    %844 = vmatpush1.xpose.msra.mxu0 %v643
    %845 = vmatprep.subr.mxu0 0.0
    %846 = vmatpush1.xpose.msra.mxu0 %v646
    %847 = vmatprep.subr.mxu0 0.0
    %848 = vmatpush1.xpose.msra.mxu0 0.0
    %849 = vmatprep.subr.mxu0 0.0
    %850 = vmatpush1.xpose.msra.mxu0 0.0
    %851 = vmatprep.subr.mxu0 0.0
    %852 = vmatpush1.xpose.msra.mxu0 0.0
    %853 = vmatprep.subr.mxu0 0.0
    %854 = vmatpush1.xpose.msra.mxu0 0.0
    %855 = vmatprep.subr.mxu0 0.0
    %856 = vmatpush1.xpose.msra.mxu0 0.0
    %857 = vmatprep.subr.mxu0 0.0
    %858 = vmatpush1.xpose.msra.mxu0 0.0
    %859 = vmatprep.subr.mxu0 0.0
    %860 = vmatpush1.xpose.msra.mxu0 0.0
    %861 = vmatprep.subr.mxu0 0.0
    %862 = vmatpush1.xpose.msra.mxu0 0.0
    %863 = vmatprep.subr.mxu0 0.0
    %864 = vmatpush1.xpose.msra.mxu0 0.0
    %865 = vmatprep.subr.mxu0 0.0
    %866 = vmatpush1.xpose.msra.mxu0 0.0
    %867 = vmatprep.subr.mxu0 0.0
    %868 = vmatpush1.xpose.msra.mxu0 0.0
    %869 = vmatprep.subr.mxu0 0.0
    %870 = vmatpush1.xpose.msra.mxu0 0.0
    %871 = vmatprep.subr.mxu0 0.0
    %872 = vmatpush1.xpose.msra.mxu0 0.0
    %873 = vmatprep.subr.mxu0 0.0
    %874 = vmatpush1.xpose.msra.mxu0 0.0
    %875 = vmatprep.subr.mxu0 0.0
    %876 = vmatpush1.xpose.msra.mxu0 0.0
    %877 = vmatprep.subr.mxu0 0.0
    %878 = vmatpush1.xpose.msra.mxu0 0.0
    %879 = vmatprep.subr.mxu0 0.0
    %880 = vmatpush1.xpose.msra.mxu0 0.0
    %881 = vmatprep.subr.mxu0 0.0
    %882 = vmatpush1.xpose.msra.mxu0 0.0
    %883 = vmatprep.subr.mxu0 0.0
    %884 = vmatpush1.xpose.msra.mxu0 0.0
    %885 = vmatprep.subr.mxu0 0.0
    %886 = vmatpush1.xpose.msra.mxu0 0.0
    %887 = vmatprep.subr.mxu0 0.0
    %888 = vmatpush1.xpose.msra.mxu0 0.0
    %889 = vmatprep.subr.mxu0 0.0
    %890 = vmatpush1.xpose.msra.mxu0 0.0
    %891 = vmatprep.subr.mxu0 0.0
    %892 = vmatpush1.xpose.msra.mxu0 0.0
    %893 = vmatprep.subr.mxu0 0.0
    %894 = vmatpush1.xpose.msra.mxu0 0.0
    %895 = vmatprep.subr.mxu0 0.0
    %896 = vmatpush1.xpose.msra.mxu0 0.0
    %897 = vmatprep.subr.mxu0 0.0
    %898 = vmatpush1.xpose.msra.mxu0 0.0
    %899 = vmatprep.subr.mxu0 0.0
    %900 = vmatpush1.xpose.msra.mxu0 0.0
    %901 = vmatprep.subr.mxu0 0.0
    %902 = vmatpush1.xpose.msra.mxu0 0.0
    %903 = vmatprep.subr.mxu0 0.0
    %904 = vmatpush1.xpose.msra.mxu0 0.0
    %905 = vmatprep.subr.mxu0 0.0
    %906 = vmatpush1.xpose.msra.mxu0 0.0
    %907 = vmatprep.mubr.f32.mxu0 0.0
    %908 = vmatmul.mubr.f32.gmra.mrb[0].mxu0 %v838
    %v909 = vpop.f32.mrb[0].mxu0
    %v910 = vadd.f32 %v357, %v909
    %v911 = vpop.f32.mrb[0].mxu0
    %912 = vmatprep.mubr.f32.mxu0 0.0
    %913 = vmatmul.mubr.f32.gmra.mrb[0].mxu0 %v841
    %v914 = vpop.f32.mrb[0].mxu0
    %v915 = vadd.f32 %v358, %v914
    %v916 = vpop.f32.mrb[0].mxu0
    %917 = vdwg.mxu0
    %v918 = vsel %vm723, %v910, -inf
    %919 = vmax.xlane.f32.xlu0 %v918
    %v920 = vpop.xlane.xlu0 %919
    %v921 = vsel %vm723, %v915, -inf
    %922 = vmax.xlane.f32.xlu0 %v921
    %v923 = vpop.xlane.xlu0 %922
    %v924 = vsub.f32 %v910, %v920
    %v925 = vsub.f32 %v915, %v923
    %v926 = vmul.f32 %v924, 1.442695
    %v927 = vpow.pop %v926
    %v928 = vmul.f32 %v925, 1.442695
    %v929 = vpow.pop %v928
    %v930 = vsel %vm723, %v927, 0.0
    %931 = vadd.xlane.f32.xlu0 %v930
    %v932 = vpop.xlane.xlu0 %931
    %v933 = vsel %vm723, %v929, 0.0
    %934 = vadd.xlane.f32.xlu0 %v933
    %v935 = vpop.xlane.xlu0 %934
    %v936 = vrcp.pop %v932
    %v937 = vmul.f32 %v927, %v936
    %v938 = vrcp.pop %v935
    %v939 = vmul.f32 %v929, %v938
    %v941 = vsel %vm723, %v937, 0
    %v944 = vsel %vm723, %v939, 0
    %946 = vmatprep.subr.mxu0 0.0
    %947 = vmatpush1.msra.mxu0 %v620
    %948 = vmatprep.subr.mxu0 0.0
    %949 = vmatpush1.msra.mxu0 %v625
    %950 = vmatprep.subr.mxu0 0.0
    %951 = vmatpush1.msra.mxu0 0.0
    %952 = vmatprep.subr.mxu0 0.0
    %953 = vmatpush1.msra.mxu0 0.0
    %954 = vmatprep.subr.mxu0 0.0
    %955 = vmatpush1.msra.mxu0 0.0
    %956 = vmatprep.subr.mxu0 0.0
    %957 = vmatpush1.msra.mxu0 0.0
    %958 = vmatprep.subr.mxu0 0.0
    %959 = vmatpush1.msra.mxu0 0.0
    %960 = vmatprep.subr.mxu0 0.0
    %961 = vmatpush1.msra.mxu0 0.0
    %962 = vmatprep.subr.mxu0 0.0
    %963 = vmatpush1.msra.mxu0 0.0
    %964 = vmatprep.subr.mxu0 0.0
    %965 = vmatpush1.msra.mxu0 0.0
    %966 = vmatprep.subr.mxu0 0.0
    %967 = vmatpush1.msra.mxu0 0.0
    %968 = vmatprep.subr.mxu0 0.0
    %969 = vmatpush1.msra.mxu0 0.0
    %970 = vmatprep.subr.mxu0 0.0
    %971 = vmatpush1.msra.mxu0 0.0
    %972 = vmatprep.subr.mxu0 0.0
    %973 = vmatpush1.msra.mxu0 0.0
    %974 = vmatprep.subr.mxu0 0.0
    %975 = vmatpush1.msra.mxu0 0.0
    %976 = vmatprep.subr.mxu0 0.0
    %977 = vmatpush1.msra.mxu0 0.0
    %978 = vmatprep.subr.mxu0 0.0
    %979 = vmatpush1.msra.mxu0 0.0
    %980 = vmatprep.subr.mxu0 0.0
    %981 = vmatpush1.msra.mxu0 0.0
    %982 = vmatprep.subr.mxu0 0.0
    %983 = vmatpush1.msra.mxu0 0.0
    %984 = vmatprep.subr.mxu0 0.0
    %985 = vmatpush1.msra.mxu0 0.0
    %986 = vmatprep.subr.mxu0 0.0
    %987 = vmatpush1.msra.mxu0 0.0
    %988 = vmatprep.subr.mxu0 0.0
    %989 = vmatpush1.msra.mxu0 0.0
    %990 = vmatprep.subr.mxu0 0.0
    %991 = vmatpush1.msra.mxu0 0.0
    %992 = vmatprep.subr.mxu0 0.0
    %993 = vmatpush1.msra.mxu0 0.0
    %994 = vmatprep.subr.mxu0 0.0
    %995 = vmatpush1.msra.mxu0 0.0
    %996 = vmatprep.subr.mxu0 0.0
    %997 = vmatpush1.msra.mxu0 0.0
    %998 = vmatprep.subr.mxu0 0.0
    %999 = vmatpush1.msra.mxu0 0.0
    %1000 = vmatprep.subr.mxu0 0.0
    %1001 = vmatpush1.msra.mxu0 0.0
    %1002 = vmatprep.subr.mxu0 0.0
    %1003 = vmatpush1.msra.mxu0 0.0
    %1004 = vmatprep.subr.mxu0 0.0
    %1005 = vmatpush1.msra.mxu0 0.0
    %1006 = vmatprep.subr.mxu0 0.0
    %1007 = vmatpush1.msra.mxu0 0.0
    %1008 = vmatprep.subr.mxu0 0.0
    %1009 = vmatpush1.msra.mxu0 0.0
    %1010 = vmatprep.mubr.f32.mxu0 0.0
    %1011 = vmatmul.mubr.f32.gmra.mrb[0].mxu0 %v941
    %v1012 = vpop.f32.mrb[0].mxu0
    %v1013 = vadd.f32 0.0, %v1012
    %v1014 = vpop.f32.mrb[0].mxu0
    %1015 = vmatprep.mubr.f32.mxu0 0.0
    %1016 = vmatmul.mubr.f32.gmra.mrb[0].mxu0 %v944
    %v1017 = vpop.f32.mrb[0].mxu0
    %v1018 = vadd.f32 0.0, %v1017
    %v1019 = vpop.f32.mrb[0].mxu0
    %1020 = vdwg.mxu0
    %v1021 = vmul.f32 %v1013, %v833
    %v1022 = vmul.f32 %v1018, %v833
    %v1023 = vadd.f32 %v827, %v1021
    %v1024 = vadd.f32 %v828, %v1022
    %v1026 = vlaneseq
    %v1027 = vshrl.u32 %v1026, 7
    %v1028 = vsub.s32 0, %v1027
    %v1029 = vrot.slane %v361, %v1028
    %v1031 = vmul.f32 %v448, %v1029
    %v1032 = vmul.f32 %v453, %v1029
    %v1034 = vsel %vm374, %v1031, 0
    %v1037 = vsel %vm374, %v1032, 0
    %1039 = vmatprep.subr.mxu0 0.0
    %1040 = vmatpush1.xpose.msra.mxu0 %v643
    %1041 = vmatprep.subr.mxu0 0.0
    %1042 = vmatpush1.xpose.msra.mxu0 %v646
    %1043 = vmatprep.subr.mxu0 0.0
    %1044 = vmatpush1.xpose.msra.mxu0 0.0
    %1045 = vmatprep.subr.mxu0 0.0
    %1046 = vmatpush1.xpose.msra.mxu0 0.0
    %1047 = vmatprep.subr.mxu0 0.0
    %1048 = vmatpush1.xpose.msra.mxu0 0.0
    %1049 = vmatprep.subr.mxu0 0.0
    %1050 = vmatpush1.xpose.msra.mxu0 0.0
    %1051 = vmatprep.subr.mxu0 0.0
    %1052 = vmatpush1.xpose.msra.mxu0 0.0
    %1053 = vmatprep.subr.mxu0 0.0
    %1054 = vmatpush1.xpose.msra.mxu0 0.0
    %1055 = vmatprep.subr.mxu0 0.0
    %1056 = vmatpush1.xpose.msra.mxu0 0.0
    %1057 = vmatprep.subr.mxu0 0.0
    %1058 = vmatpush1.xpose.msra.mxu0 0.0
    %1059 = vmatprep.subr.mxu0 0.0
    %1060 = vmatpush1.xpose.msra.mxu0 0.0
    %1061 = vmatprep.subr.mxu0 0.0
    %1062 = vmatpush1.xpose.msra.mxu0 0.0
    %1063 = vmatprep.subr.mxu0 0.0
    %1064 = vmatpush1.xpose.msra.mxu0 0.0
    %1065 = vmatprep.subr.mxu0 0.0
    %1066 = vmatpush1.xpose.msra.mxu0 0.0
    %1067 = vmatprep.subr.mxu0 0.0
    %1068 = vmatpush1.xpose.msra.mxu0 0.0
    %1069 = vmatprep.subr.mxu0 0.0
    %1070 = vmatpush1.xpose.msra.mxu0 0.0
    %1071 = vmatprep.subr.mxu0 0.0
    %1072 = vmatpush1.xpose.msra.mxu0 0.0
    %1073 = vmatprep.subr.mxu0 0.0
    %1074 = vmatpush1.xpose.msra.mxu0 0.0
    %1075 = vmatprep.subr.mxu0 0.0
    %1076 = vmatpush1.xpose.msra.mxu0 0.0
    %1077 = vmatprep.subr.mxu0 0.0
    %1078 = vmatpush1.xpose.msra.mxu0 0.0
    %1079 = vmatprep.subr.mxu0 0.0
    %1080 = vmatpush1.xpose.msra.mxu0 0.0
    %1081 = vmatprep.subr.mxu0 0.0
    %1082 = vmatpush1.xpose.msra.mxu0 0.0
    %1083 = vmatprep.subr.mxu0 0.0
    %1084 = vmatpush1.xpose.msra.mxu0 0.0
    %1085 = vmatprep.subr.mxu0 0.0
    %1086 = vmatpush1.xpose.msra.mxu0 0.0
    %1087 = vmatprep.subr.mxu0 0.0
    %1088 = vmatpush1.xpose.msra.mxu0 0.0
    %1089 = vmatprep.subr.mxu0 0.0
    %1090 = vmatpush1.xpose.msra.mxu0 0.0
    %1091 = vmatprep.subr.mxu0 0.0
    %1092 = vmatpush1.xpose.msra.mxu0 0.0
    %1093 = vmatprep.subr.mxu0 0.0
    %1094 = vmatpush1.xpose.msra.mxu0 0.0
    %1095 = vmatprep.subr.mxu0 0.0
    %1096 = vmatpush1.xpose.msra.mxu0 0.0
    %1097 = vmatprep.subr.mxu0 0.0
    %1098 = vmatpush1.xpose.msra.mxu0 0.0
    %1099 = vmatprep.subr.mxu0 0.0
    %1100 = vmatpush1.xpose.msra.mxu0 0.0
    %1101 = vmatprep.subr.mxu0 0.0
    %1102 = vmatpush1.xpose.msra.mxu0 0.0
    %1103 = vmatprep.mubr.f32.mxu0 0.0
    %1104 = vmatmul.mubr.f32.gmra.mrb[0].mxu0 %v1034
    %v1105 = vpop.f32.mrb[0].mxu0
    %v1106 = vadd.f32 %v357, %v1105
    %v1107 = vpop.f32.mrb[0].mxu0
    %1108 = vmatprep.mubr.f32.mxu0 0.0
    %1109 = vmatmul.mubr.f32.gmra.mrb[0].mxu0 %v1037
    %v1110 = vpop.f32.mrb[0].mxu0
    %v1111 = vadd.f32 %v358, %v1110
    %v1112 = vpop.f32.mrb[0].mxu0
    %1113 = vdwg.mxu0
    %v1114 = vsel %vm723, %v1106, -inf
    %1115 = vmax.xlane.f32.xlu0 %v1114
    %v1116 = vpop.xlane.xlu0 %1115
    %v1117 = vsel %vm723, %v1111, -inf
    %1118 = vmax.xlane.f32.xlu0 %v1117
    %v1119 = vpop.xlane.xlu0 %1118
    %v1120 = vsub.f32 %v1106, %v1116
    %v1121 = vsub.f32 %v1111, %v1119
    %v1122 = vmul.f32 %v1120, 1.442695
    %v1123 = vpow.pop %v1122
    %v1124 = vmul.f32 %v1121, 1.442695
    %v1125 = vpow.pop %v1124
    %v1126 = vsel %vm723, %v1123, 0.0
    %1127 = vadd.xlane.f32.xlu0 %v1126
    %v1128 = vpop.xlane.xlu0 %1127
    %v1129 = vsel %vm723, %v1125, 0.0
    %1130 = vadd.xlane.f32.xlu0 %v1129
    %v1131 = vpop.xlane.xlu0 %1130
    %v1132 = vrcp.pop %v1128
    %v1133 = vmul.f32 %v1123, %v1132
    %v1134 = vrcp.pop %v1131
    %v1135 = vmul.f32 %v1125, %v1134
    %v1137 = vsel %vm723, %v1133, 0
    %v1140 = vsel %vm723, %v1135, 0
    %1142 = vmatprep.subr.mxu0 0.0
    %1143 = vmatpush1.msra.mxu0 %v620
    %1144 = vmatprep.subr.mxu0 0.0
    %1145 = vmatpush1.msra.mxu0 %v625
    %1146 = vmatprep.subr.mxu0 0.0
    %1147 = vmatpush1.msra.mxu0 0.0
    %1148 = vmatprep.subr.mxu0 0.0
    %1149 = vmatpush1.msra.mxu0 0.0
    %1150 = vmatprep.subr.mxu0 0.0
    %1151 = vmatpush1.msra.mxu0 0.0
    %1152 = vmatprep.subr.mxu0 0.0
    %1153 = vmatpush1.msra.mxu0 0.0
    %1154 = vmatprep.subr.mxu0 0.0
    %1155 = vmatpush1.msra.mxu0 0.0
    %1156 = vmatprep.subr.mxu0 0.0
    %1157 = vmatpush1.msra.mxu0 0.0
    %1158 = vmatprep.subr.mxu0 0.0
    %1159 = vmatpush1.msra.mxu0 0.0
    %1160 = vmatprep.subr.mxu0 0.0
    %1161 = vmatpush1.msra.mxu0 0.0
    %1162 = vmatprep.subr.mxu0 0.0
    %1163 = vmatpush1.msra.mxu0 0.0
    %1164 = vmatprep.subr.mxu0 0.0
    %1165 = vmatpush1.msra.mxu0 0.0
    %1166 = vmatprep.subr.mxu0 0.0
    %1167 = vmatpush1.msra.mxu0 0.0
    %1168 = vmatprep.subr.mxu0 0.0
    %1169 = vmatpush1.msra.mxu0 0.0
    %1170 = vmatprep.subr.mxu0 0.0
    %1171 = vmatpush1.msra.mxu0 0.0
    %1172 = vmatprep.subr.mxu0 0.0
    %1173 = vmatpush1.msra.mxu0 0.0
    %1174 = vmatprep.subr.mxu0 0.0
    %1175 = vmatpush1.msra.mxu0 0.0
    %1176 = vmatprep.subr.mxu0 0.0
    %1177 = vmatpush1.msra.mxu0 0.0
    %1178 = vmatprep.subr.mxu0 0.0
    %1179 = vmatpush1.msra.mxu0 0.0
    %1180 = vmatprep.subr.mxu0 0.0
    %1181 = vmatpush1.msra.mxu0 0.0
    %1182 = vmatprep.subr.mxu0 0.0
    %1183 = vmatpush1.msra.mxu0 0.0
    %1184 = vmatprep.subr.mxu0 0.0
    %1185 = vmatpush1.msra.mxu0 0.0
    %1186 = vmatprep.subr.mxu0 0.0
    %1187 = vmatpush1.msra.mxu0 0.0
    %1188 = vmatprep.subr.mxu0 0.0
    %1189 = vmatpush1.msra.mxu0 0.0
    %1190 = vmatprep.subr.mxu0 0.0
    %1191 = vmatpush1.msra.mxu0 0.0
    %1192 = vmatprep.subr.mxu0 0.0
    %1193 = vmatpush1.msra.mxu0 0.0
    %1194 = vmatprep.subr.mxu0 0.0
    %1195 = vmatpush1.msra.mxu0 0.0
    %1196 = vmatprep.subr.mxu0 0.0
    %1197 = vmatpush1.msra.mxu0 0.0
    %1198 = vmatprep.subr.mxu0 0.0
    %1199 = vmatpush1.msra.mxu0 0.0
    %1200 = vmatprep.subr.mxu0 0.0
    %1201 = vmatpush1.msra.mxu0 0.0
    %1202 = vmatprep.subr.mxu0 0.0
    %1203 = vmatpush1.msra.mxu0 0.0
    %1204 = vmatprep.subr.mxu0 0.0
    %1205 = vmatpush1.msra.mxu0 0.0
    %1206 = vmatprep.mubr.f32.mxu0 0.0
    %1207 = vmatmul.mubr.f32.gmra.mrb[0].mxu0 %v1137
    %v1208 = vpop.f32.mrb[0].mxu0
    %v1209 = vadd.f32 0.0, %v1208
    %v1210 = vpop.f32.mrb[0].mxu0
    %1211 = vmatprep.mubr.f32.mxu0 0.0
    %1212 = vmatmul.mubr.f32.gmra.mrb[0].mxu0 %v1140
    %v1213 = vpop.f32.mrb[0].mxu0
    %v1214 = vadd.f32 0.0, %v1213
    %v1215 = vpop.f32.mrb[0].mxu0
    %1216 = vdwg.mxu0
    %v1217 = vmul.f32 %v1209, %v1029
    %v1218 = vmul.f32 %v1214, %v1029
    %v1219 = vadd.f32 %v1023, %v1217
    %v1220 = vadd.f32 %v1024, %v1218
    %v1222 = vlaneseq
    %v1223 = vshrl.u32 %v1222, 7
    %v1224 = vsub.s32 0, %v1223
    %v1225 = vrot.slane %v362, %v1224
    %v1227 = vmul.f32 %v448, %v1225
    %v1228 = vmul.f32 %v453, %v1225
    %v1230 = vsel %vm374, %v1227, 0
    %v1233 = vsel %vm374, %v1228, 0
    %1235 = vmatprep.subr.mxu0 0.0
    %1236 = vmatpush1.xpose.msra.mxu0 %v643
    %1237 = vmatprep.subr.mxu0 0.0
    %1238 = vmatpush1.xpose.msra.mxu0 %v646
    %1239 = vmatprep.subr.mxu0 0.0
    %1240 = vmatpush1.xpose.msra.mxu0 0.0
    %1241 = vmatprep.subr.mxu0 0.0
    %1242 = vmatpush1.xpose.msra.mxu0 0.0
    %1243 = vmatprep.subr.mxu0 0.0
    %1244 = vmatpush1.xpose.msra.mxu0 0.0
    %1245 = vmatprep.subr.mxu0 0.0
    %1246 = vmatpush1.xpose.msra.mxu0 0.0
    %1247 = vmatprep.subr.mxu0 0.0
    %1248 = vmatpush1.xpose.msra.mxu0 0.0
    %1249 = vmatprep.subr.mxu0 0.0
    %1250 = vmatpush1.xpose.msra.mxu0 0.0
    %1251 = vmatprep.subr.mxu0 0.0
    %1252 = vmatpush1.xpose.msra.mxu0 0.0
    %1253 = vmatprep.subr.mxu0 0.0
    %1254 = vmatpush1.xpose.msra.mxu0 0.0
    %1255 = vmatprep.subr.mxu0 0.0
    %1256 = vmatpush1.xpose.msra.mxu0 0.0
    %1257 = vmatprep.subr.mxu0 0.0
    %1258 = vmatpush1.xpose.msra.mxu0 0.0
    %1259 = vmatprep.subr.mxu0 0.0
    %1260 = vmatpush1.xpose.msra.mxu0 0.0
    %1261 = vmatprep.subr.mxu0 0.0
    %1262 = vmatpush1.xpose.msra.mxu0 0.0
    %1263 = vmatprep.subr.mxu0 0.0
    %1264 = vmatpush1.xpose.msra.mxu0 0.0
    %1265 = vmatprep.subr.mxu0 0.0
    %1266 = vmatpush1.xpose.msra.mxu0 0.0
    %1267 = vmatprep.subr.mxu0 0.0
    %1268 = vmatpush1.xpose.msra.mxu0 0.0
    %1269 = vmatprep.subr.mxu0 0.0
    %1270 = vmatpush1.xpose.msra.mxu0 0.0
    %1271 = vmatprep.subr.mxu0 0.0
    %1272 = vmatpush1.xpose.msra.mxu0 0.0
    %1273 = vmatprep.subr.mxu0 0.0
    %1274 = vmatpush1.xpose.msra.mxu0 0.0
    %1275 = vmatprep.subr.mxu0 0.0
    %1276 = vmatpush1.xpose.msra.mxu0 0.0
    %1277 = vmatprep.subr.mxu0 0.0
    %1278 = vmatpush1.xpose.msra.mxu0 0.0
    %1279 = vmatprep.subr.mxu0 0.0
    %1280 = vmatpush1.xpose.msra.mxu0 0.0
    %1281 = vmatprep.subr.mxu0 0.0
    %1282 = vmatpush1.xpose.msra.mxu0 0.0
    %1283 = vmatprep.subr.mxu0 0.0
    %1284 = vmatpush1.xpose.msra.mxu0 0.0
    %1285 = vmatprep.subr.mxu0 0.0
    %1286 = vmatpush1.xpose.msra.mxu0 0.0
    %1287 = vmatprep.subr.mxu0 0.0
    %1288 = vmatpush1.xpose.msra.mxu0 0.0
    %1289 = vmatprep.subr.mxu0 0.0
    %1290 = vmatpush1.xpose.msra.mxu0 0.0
    %1291 = vmatprep.subr.mxu0 0.0
    %1292 = vmatpush1.xpose.msra.mxu0 0.0
    %1293 = vmatprep.subr.mxu0 0.0
    %1294 = vmatpush1.xpose.msra.mxu0 0.0
    %1295 = vmatprep.subr.mxu0 0.0
    %1296 = vmatpush1.xpose.msra.mxu0 0.0
    %1297 = vmatprep.subr.mxu0 0.0
    %1298 = vmatpush1.xpose.msra.mxu0 0.0
    %1299 = vmatprep.mubr.f32.mxu0 0.0
    %1300 = vmatmul.mubr.f32.gmra.mrb[0].mxu0 %v1230
    %v1301 = vpop.f32.mrb[0].mxu0
    %v1302 = vadd.f32 %v357, %v1301
    %v1303 = vpop.f32.mrb[0].mxu0
    %1304 = vmatprep.mubr.f32.mxu0 0.0
    %1305 = vmatmul.mubr.f32.gmra.mrb[0].mxu0 %v1233
    %v1306 = vpop.f32.mrb[0].mxu0
    %v1307 = vadd.f32 %v358, %v1306
    %v1308 = vpop.f32.mrb[0].mxu0
    %1309 = vdwg.mxu0
    %v1310 = vsel %vm723, %v1302, -inf
    %1311 = vmax.xlane.f32.xlu0 %v1310
    %v1312 = vpop.xlane.xlu0 %1311
    %v1313 = vsel %vm723, %v1307, -inf
    %1314 = vmax.xlane.f32.xlu0 %v1313
    %v1315 = vpop.xlane.xlu0 %1314
    %v1316 = vsub.f32 %v1302, %v1312
    %v1317 = vsub.f32 %v1307, %v1315
    %v1318 = vmul.f32 %v1316, 1.442695
    %v1319 = vpow.pop %v1318
    %v1320 = vmul.f32 %v1317, 1.442695
    %v1321 = vpow.pop %v1320
    %v1322 = vsel %vm723, %v1319, 0.0
    %1323 = vadd.xlane.f32.xlu0 %v1322
    %v1324 = vpop.xlane.xlu0 %1323
    %v1325 = vsel %vm723, %v1321, 0.0
    %1326 = vadd.xlane.f32.xlu0 %v1325
    %v1327 = vpop.xlane.xlu0 %1326
    %v1328 = vrcp.pop %v1324
    %v1329 = vmul.f32 %v1319, %v1328
    %v1330 = vrcp.pop %v1327
    %v1331 = vmul.f32 %v1321, %v1330
    %v1333 = vsel %vm723, %v1329, 0
    %v1336 = vsel %vm723, %v1331, 0
    %1338 = vmatprep.subr.mxu0 0.0
    %1339 = vmatpush1.msra.mxu0 %v620
    %1340 = vmatprep.subr.mxu0 0.0
    %1341 = vmatpush1.msra.mxu0 %v625
    %1342 = vmatprep.subr.mxu0 0.0
    %1343 = vmatpush1.msra.mxu0 0.0
    %1344 = vmatprep.subr.mxu0 0.0
    %1345 = vmatpush1.msra.mxu0 0.0
    %1346 = vmatprep.subr.mxu0 0.0
    %1347 = vmatpush1.msra.mxu0 0.0
    %1348 = vmatprep.subr.mxu0 0.0
    %1349 = vmatpush1.msra.mxu0 0.0
    %1350 = vmatprep.subr.mxu0 0.0
    %1351 = vmatpush1.msra.mxu0 0.0
    %1352 = vmatprep.subr.mxu0 0.0
    %1353 = vmatpush1.msra.mxu0 0.0
    %1354 = vmatprep.subr.mxu0 0.0
    %1355 = vmatpush1.msra.mxu0 0.0
    %1356 = vmatprep.subr.mxu0 0.0
    %1357 = vmatpush1.msra.mxu0 0.0
    %1358 = vmatprep.subr.mxu0 0.0
    %1359 = vmatpush1.msra.mxu0 0.0
    %1360 = vmatprep.subr.mxu0 0.0
    %1361 = vmatpush1.msra.mxu0 0.0
    %1362 = vmatprep.subr.mxu0 0.0
    %1363 = vmatpush1.msra.mxu0 0.0
    %1364 = vmatprep.subr.mxu0 0.0
    %1365 = vmatpush1.msra.mxu0 0.0
    %1366 = vmatprep.subr.mxu0 0.0
    %1367 = vmatpush1.msra.mxu0 0.0
    %1368 = vmatprep.subr.mxu0 0.0
    %1369 = vmatpush1.msra.mxu0 0.0
    %1370 = vmatprep.subr.mxu0 0.0
    %1371 = vmatpush1.msra.mxu0 0.0
    %1372 = vmatprep.subr.mxu0 0.0
    %1373 = vmatpush1.msra.mxu0 0.0
    %1374 = vmatprep.subr.mxu0 0.0
    %1375 = vmatpush1.msra.mxu0 0.0
    %1376 = vmatprep.subr.mxu0 0.0
    %1377 = vmatpush1.msra.mxu0 0.0
    %1378 = vmatprep.subr.mxu0 0.0
    %1379 = vmatpush1.msra.mxu0 0.0
    %1380 = vmatprep.subr.mxu0 0.0
    %1381 = vmatpush1.msra.mxu0 0.0
    %1382 = vmatprep.subr.mxu0 0.0
    %1383 = vmatpush1.msra.mxu0 0.0
    %1384 = vmatprep.subr.mxu0 0.0
    %1385 = vmatpush1.msra.mxu0 0.0
    %1386 = vmatprep.subr.mxu0 0.0
    %1387 = vmatpush1.msra.mxu0 0.0
    %1388 = vmatprep.subr.mxu0 0.0
    %1389 = vmatpush1.msra.mxu0 0.0
    %1390 = vmatprep.subr.mxu0 0.0
    %1391 = vmatpush1.msra.mxu0 0.0
    %1392 = vmatprep.subr.mxu0 0.0
    %1393 = vmatpush1.msra.mxu0 0.0
    %1394 = vmatprep.subr.mxu0 0.0
    %1395 = vmatpush1.msra.mxu0 0.0
    %1396 = vmatprep.subr.mxu0 0.0
    %1397 = vmatpush1.msra.mxu0 0.0
    %1398 = vmatprep.subr.mxu0 0.0
    %1399 = vmatpush1.msra.mxu0 0.0
    %1400 = vmatprep.subr.mxu0 0.0
    %1401 = vmatpush1.msra.mxu0 0.0
    %1402 = vmatprep.mubr.f32.mxu0 0.0
    %1403 = vmatmul.mubr.f32.gmra.mrb[0].mxu0 %v1333
    %v1404 = vpop.f32.mrb[0].mxu0
    %v1405 = vadd.f32 0.0, %v1404
    %v1406 = vpop.f32.mrb[0].mxu0
    %1407 = vmatprep.mubr.f32.mxu0 0.0
    %1408 = vmatmul.mubr.f32.gmra.mrb[0].mxu0 %v1336
    %v1409 = vpop.f32.mrb[0].mxu0
    %v1410 = vadd.f32 0.0, %v1409
    %v1411 = vpop.f32.mrb[0].mxu0
    %1412 = vdwg.mxu0
    %v1413 = vmul.f32 %v1405, %v1225
    %v1414 = vmul.f32 %v1410, %v1225
    %v1415 = vadd.f32 %v1219, %v1413
    %v1416 = vadd.f32 %v1220, %v1414
    %v1417 = vld [vmem:[%s12] sm:$0xff]
    %v1418 = vld [vmem:[%s12 + $0x8] sm:$0xff]
    %v1419 = vld [vmem:[%s12 + $0x10] sm:$0xff]
    %v1420 = vld [vmem:[%s12 + $0x18] sm:$0xff]
    %v1421 = vld [vmem:[#allocation14] sm:$0x1]
    %v1423 = vlaneseq
    %v1424 = vshrl.u32 %v1423, 7
    %v1425 = vsub.s32 0, %v1424
    %v1426 = vrot.slane %v1421, %v1425
    %v1429 = vsel %vm374, %v1415, 0
    %v1432 = vsel %vm374, %v1416, 0
    %1434 = vmatprep.subr.mxu0 0.0
    %1435 = vmatpush1.msra.mxu0 %v1417
    %1436 = vmatprep.subr.mxu0 0.0
    %1437 = vmatpush1.msra.mxu0 %v1418
    %1438 = vmatprep.subr.mxu0 0.0
    %1439 = vmatpush1.msra.mxu0 %v1419
    %1440 = vmatprep.subr.mxu0 0.0
    %1441 = vmatpush1.msra.mxu0 %v1420
    %1442 = vmatprep.subr.mxu0 0.0
    %1443 = vmatpush1.msra.mxu0 0.0
    %1444 = vmatprep.subr.mxu0 0.0
    %1445 = vmatpush1.msra.mxu0 0.0
    %1446 = vmatprep.subr.mxu0 0.0
    %1447 = vmatpush1.msra.mxu0 0.0
    %1448 = vmatprep.subr.mxu0 0.0
    %1449 = vmatpush1.msra.mxu0 0.0
    %1450 = vmatprep.subr.mxu0 0.0
    %1451 = vmatpush1.msra.mxu0 0.0
    %1452 = vmatprep.subr.mxu0 0.0
    %1453 = vmatpush1.msra.mxu0 0.0
    %1454 = vmatprep.subr.mxu0 0.0
    %1455 = vmatpush1.msra.mxu0 0.0
    %1456 = vmatprep.subr.mxu0 0.0
    %1457 = vmatpush1.msra.mxu0 0.0
    %1458 = vmatprep.subr.mxu0 0.0
    %1459 = vmatpush1.msra.mxu0 0.0
    %1460 = vmatprep.subr.mxu0 0.0
    %1461 = vmatpush1.msra.mxu0 0.0
    %1462 = vmatprep.subr.mxu0 0.0
    %1463 = vmatpush1.msra.mxu0 0.0
    %1464 = vmatprep.subr.mxu0 0.0
    %1465 = vmatpush1.msra.mxu0 0.0
    %1466 = vmatprep.subr.mxu0 0.0
    %1467 = vmatpush1.msra.mxu0 0.0
    %1468 = vmatprep.subr.mxu0 0.0
    %1469 = vmatpush1.msra.mxu0 0.0
    %1470 = vmatprep.subr.mxu0 0.0
    %1471 = vmatpush1.msra.mxu0 0.0
    %1472 = vmatprep.subr.mxu0 0.0
    %1473 = vmatpush1.msra.mxu0 0.0
    %1474 = vmatprep.subr.mxu0 0.0
    %1475 = vmatpush1.msra.mxu0 0.0
    %1476 = vmatprep.subr.mxu0 0.0
    %1477 = vmatpush1.msra.mxu0 0.0
    %1478 = vmatprep.subr.mxu0 0.0
    %1479 = vmatpush1.msra.mxu0 0.0
    %1480 = vmatprep.subr.mxu0 0.0
    %1481 = vmatpush1.msra.mxu0 0.0
    %1482 = vmatprep.subr.mxu0 0.0
    %1483 = vmatpush1.msra.mxu0 0.0
    %1484 = vmatprep.subr.mxu0 0.0
    %1485 = vmatpush1.msra.mxu0 0.0
    %1486 = vmatprep.subr.mxu0 0.0
    %1487 = vmatpush1.msra.mxu0 0.0
    %1488 = vmatprep.subr.mxu0 0.0
    %1489 = vmatpush1.msra.mxu0 0.0
    %1490 = vmatprep.subr.mxu0 0.0
    %1491 = vmatpush1.msra.mxu0 0.0
    %1492 = vmatprep.subr.mxu0 0.0
    %1493 = vmatpush1.msra.mxu0 0.0
    %1494 = vmatprep.subr.mxu0 0.0
    %1495 = vmatpush1.msra.mxu0 0.0
    %1496 = vmatprep.subr.mxu0 0.0
    %1497 = vmatpush1.msra.mxu0 0.0
    %1498 = vmatprep.mubr.f32.mxu0 0.0
    %1499 = vmatmul.mubr.f32.gmra.mrb[0].mxu0 %v1429
    %v1500 = vpop.f32.mrb[0].mxu0
    %v1501 = vadd.f32 %v1426, %v1500
    %v1502 = vpop.f32.mrb[0].mxu0
    %1503 = vmatprep.mubr.f32.mxu0 0.0
    %1504 = vmatmul.mubr.f32.gmra.mrb[0].mxu0 %v1432
    %v1505 = vpop.f32.mrb[0].mxu0
    %v1506 = vadd.f32 %v1426, %v1505
    %v1507 = vpop.f32.mrb[0].mxu0
    %1508 = vdwg.mxu0
    %v1509 = vadd.f32 %v349, %v1501
    %v1510 = vadd.f32 %v354, %v1506
    %v1511 = vld [vmem:[#allocation16] sm:$0x1]
    %v1512 = vld [vmem:[#allocation17] sm:$0x1]
    %v1513 = vsel %vm374, %v1509, 0.0
    %1514 = vadd.xlane.f32.xlu0 %v1513
    %v1515 = vpop.xlane.xlu0 %1514
    %v1516 = vsel %vm374, %v1510, 0.0
    %1517 = vadd.xlane.f32.xlu0 %v1516
    %v1518 = vpop.xlane.xlu0 %1517
    %v1519 = vrcp.pop 32.0
    %v1520 = vmul.f32 %v1515, %v1519
    %v1521 = vmul.f32 %v1518, %v1519
    %v1522 = vsub.f32 %v1509, %v1520
    %v1523 = vsub.f32 %v1510, %v1521
    %v1524 = vmul.f32 %v1522, %v1522
    %v1525 = vmul.f32 %v1523, %v1523
    %v1526 = vsel %vm374, %v1524, 0.0
    %1527 = vadd.xlane.f32.xlu0 %v1526
    %v1528 = vpop.xlane.xlu0 %1527
    %v1529 = vsel %vm374, %v1525, 0.0
    %1530 = vadd.xlane.f32.xlu0 %v1529
    %v1531 = vpop.xlane.xlu0 %1530
    %v1532 = vmul.f32 %v1528, %v1519
    %v1533 = vmul.f32 %v1531, %v1519
    %v1534 = vadd.f32 %v1532, 1e-05
    %v1535 = vadd.f32 %v1533, 1e-05
    %v1536 = vrsqrt.pop %v1534
    %v1537 = vrsqrt.pop %v1535
    %v1538 = vmul.f32 %v1522, %v1536
    %v1539 = vmul.f32 %v1523, %v1537
    %v1541 = vlaneseq
    %v1542 = vshrl.u32 %v1541, 7
    %v1543 = vsub.s32 0, %v1542
    %v1544 = vrot.slane %v1511, %v1543
    %v1546 = vmul.f32 %v1538, %v1544
    %v1547 = vmul.f32 %v1539, %v1544
    %v1549 = vlaneseq
    %v1550 = vshrl.u32 %v1549, 7
    %v1551 = vsub.s32 0, %v1550
    %v1552 = vrot.slane %v1512, %v1551
    %v1554 = vadd.f32 %v1546, %v1552
    %v1555 = vadd.f32 %v1547, %v1552
    %v1556 = vld [vmem:[%s18] sm:$0xff]
    %v1557 = vld [vmem:[%s18 + $0x8] sm:$0xff]
    %v1558 = vld [vmem:[%s18 + $0x10] sm:$0xff]
    %v1559 = vld [vmem:[%s18 + $0x18] sm:$0xff]
    %v1560 = vld [vmem:[#allocation22] sm:$0x1]
    %v1562 = vlaneseq
    %v1563 = vshrl.u32 %v1562, 7
    %v1564 = vsub.s32 0, %v1563
    %v1565 = vrot.slane %v1560, %v1564
    %v1568 = vsel %vm374, %v1554, 0
    %v1571 = vsel %vm374, %v1555, 0
    %1573 = vmatprep.subr.mxu0 0.0
    %1574 = vmatpush1.msra.mxu0 %v1556
    %1575 = vmatprep.subr.mxu0 0.0
    %1576 = vmatpush1.msra.mxu0 %v1557
    %1577 = vmatprep.subr.mxu0 0.0
    %1578 = vmatpush1.msra.mxu0 %v1558
    %1579 = vmatprep.subr.mxu0 0.0
    %1580 = vmatpush1.msra.mxu0 %v1559
    %1581 = vmatprep.subr.mxu0 0.0
    %1582 = vmatpush1.msra.mxu0 0.0
    %1583 = vmatprep.subr.mxu0 0.0
    %1584 = vmatpush1.msra.mxu0 0.0
    %1585 = vmatprep.subr.mxu0 0.0
    %1586 = vmatpush1.msra.mxu0 0.0
    %1587 = vmatprep.subr.mxu0 0.0
    %1588 = vmatpush1.msra.mxu0 0.0
    %1589 = vmatprep.subr.mxu0 0.0
    %1590 = vmatpush1.msra.mxu0 0.0
    %1591 = vmatprep.subr.mxu0 0.0
    %1592 = vmatpush1.msra.mxu0 0.0
    %1593 = vmatprep.subr.mxu0 0.0
    %1594 = vmatpush1.msra.mxu0 0.0
    %1595 = vmatprep.subr.mxu0 0.0
    %1596 = vmatpush1.msra.mxu0 0.0
    %1597 = vmatprep.subr.mxu0 0.0
    %1598 = vmatpush1.msra.mxu0 0.0
    %1599 = vmatprep.subr.mxu0 0.0
    %1600 = vmatpush1.msra.mxu0 0.0
    %1601 = vmatprep.subr.mxu0 0.0
    %1602 = vmatpush1.msra.mxu0 0.0
    %1603 = vmatprep.subr.mxu0 0.0
    %1604 = vmatpush1.msra.mxu0 0.0
    %1605 = vmatprep.subr.mxu0 0.0
    %1606 = vmatpush1.msra.mxu0 0.0
    %1607 = vmatprep.subr.mxu0 0.0
    %1608 = vmatpush1.msra.mxu0 0.0
    %1609 = vmatprep.subr.mxu0 0.0
    %1610 = vmatpush1.msra.mxu0 0.0
    %1611 = vmatprep.subr.mxu0 0.0
    %1612 = vmatpush1.msra.mxu0 0.0
    %1613 = vmatprep.subr.mxu0 0.0
    %1614 = vmatpush1.msra.mxu0 0.0
    %1615 = vmatprep.subr.mxu0 0.0
    %1616 = vmatpush1.msra.mxu0 0.0
    %1617 = vmatprep.subr.mxu0 0.0
    %1618 = vmatpush1.msra.mxu0 0.0
    %1619 = vmatprep.subr.mxu0 0.0
    %1620 = vmatpush1.msra.mxu0 0.0
    %1621 = vmatprep.subr.mxu0 0.0
    %1622 = vmatpush1.msra.mxu0 0.0
    %1623 = vmatprep.subr.mxu0 0.0
    %1624 = vmatpush1.msra.mxu0 0.0
    %1625 = vmatprep.subr.mxu0 0.0
    %1626 = vmatpush1.msra.mxu0 0.0
    %1627 = vmatprep.subr.mxu0 0.0
    %1628 = vmatpush1.msra.mxu0 0.0
    %1629 = vmatprep.subr.mxu0 0.0
    %1630 = vmatpush1.msra.mxu0 0.0
    %1631 = vmatprep.subr.mxu0 0.0
    %1632 = vmatpush1.msra.mxu0 0.0
    %1633 = vmatprep.subr.mxu0 0.0
    %1634 = vmatpush1.msra.mxu0 0.0
    %1635 = vmatprep.subr.mxu0 0.0
    %1636 = vmatpush1.msra.mxu0 0.0
    %1637 = vmatprep.mubr.f32.mxu0 0.0
    %1638 = vmatmul.mubr.f32.gmra.mrb[0].mxu0 %v1568
    %v1639 = vpop.f32.mrb[0].mxu0
    %v1640 = vadd.f32 %v1565, %v1639
    %v1641 = vpop.f32.mrb[0].mxu0
    %1642 = vmatprep.mubr.f32.mxu0 0.0
    %1643 = vmatmul.mubr.f32.gmra.mrb[0].mxu0 %v1571
    %v1644 = vpop.f32.mrb[0].mxu0
    %v1645 = vadd.f32 %v1565, %v1644
    %v1646 = vpop.f32.mrb[0].mxu0
    %1647 = vdwg.mxu0
    %v1648 = vmul.f32 %v1640, 0.5
    %v1649 = vmul.f32 %v1645, 0.5
    %v1650 = vmul.f32 %v1640, 0.70710677
    %v1651 = vmul.f32 %v1645, 0.70710677
    %v1652 = verf.f32.pop %v1650
    %v1653 = verf.f32.pop %v1651
    %v1654 = vadd.f32 %v1652, 1.0
    %v1655 = vadd.f32 %v1653, 1.0
    %v1656 = vmul.f32 %v1648, %v1654
    %v1657 = vmul.f32 %v1649, %v1655
    %v1658 = vld [vmem:[%s20] sm:$0xff]
    %v1659 = vld [vmem:[%s20 + $0x8] sm:$0xff]
    %v1660 = vld [vmem:[%s20 + $0x10] sm:$0xff]
    %v1661 = vld [vmem:[%s20 + $0x18] sm:$0xff]
    %v1662 = vld [vmem:[%s20 + $0x20] sm:$0xff]
    %v1663 = vld [vmem:[%s20 + $0x28] sm:$0xff]
    %v1664 = vld [vmem:[%s20 + $0x30] sm:$0xff]
    %v1665 = vld [vmem:[%s20 + $0x38] sm:$0xff]
    %v1666 = vld [vmem:[%s20 + $0x40] sm:$0xff]
    %v1667 = vld [vmem:[%s20 + $0x48] sm:$0xff]
    %v1668 = vld [vmem:[%s20 + $0x50] sm:$0xff]
    %v1669 = vld [vmem:[%s20 + $0x58] sm:$0xff]
    %v1670 = vld [vmem:[%s20 + $0x60] sm:$0xff]
    %v1671 = vld [vmem:[%s20 + $0x68] sm:$0xff]
    %v1672 = vld [vmem:[%s20 + $0x70] sm:$0xff]
    %v1673 = vld [vmem:[%s20 + $0x78] sm:$0xff]
    %v1674 = vld [vmem:[#allocation23] sm:$0x1]
    %v1676 = vlaneseq
    %v1677 = vshrl.u32 %v1676, 7
    %v1678 = vsub.s32 0, %v1677
    %v1679 = vrot.slane %v1674, %v1678
    %1681 = vmatprep.subr.mxu0 0.0
    %1682 = vmatpush1.msra.mxu0 %v1658
    %1683 = vmatprep.subr.mxu0 0.0
    %1684 = vmatpush1.msra.mxu0 %v1659
    %1685 = vmatprep.subr.mxu0 0.0
    %1686 = vmatpush1.msra.mxu0 %v1660
    %1687 = vmatprep.subr.mxu0 0.0
    %1688 = vmatpush1.msra.mxu0 %v1661
    %1689 = vmatprep.subr.mxu0 0.0
    %1690 = vmatpush1.msra.mxu0 %v1662
    %1691 = vmatprep.subr.mxu0 0.0
    %1692 = vmatpush1.msra.mxu0 %v1663
    %1693 = vmatprep.subr.mxu0 0.0
    %1694 = vmatpush1.msra.mxu0 %v1664
    %1695 = vmatprep.subr.mxu0 0.0
    %1696 = vmatpush1.msra.mxu0 %v1665
    %1697 = vmatprep.subr.mxu0 0.0
    %1698 = vmatpush1.msra.mxu0 %v1666
    %1699 = vmatprep.subr.mxu0 0.0
    %1700 = vmatpush1.msra.mxu0 %v1667
    %1701 = vmatprep.subr.mxu0 0.0
    %1702 = vmatpush1.msra.mxu0 %v1668
    %1703 = vmatprep.subr.mxu0 0.0
    %1704 = vmatpush1.msra.mxu0 %v1669
    %1705 = vmatprep.subr.mxu0 0.0
    %1706 = vmatpush1.msra.mxu0 %v1670
    %1707 = vmatprep.subr.mxu0 0.0
    %1708 = vmatpush1.msra.mxu0 %v1671
    %1709 = vmatprep.subr.mxu0 0.0
    %1710 = vmatpush1.msra.mxu0 %v1672
    %1711 = vmatprep.subr.mxu0 0.0
    %1712 = vmatpush1.msra.mxu0 %v1673
    %1713 = vmatprep.subr.mxu0 0.0
    %1714 = vmatpush1.msra.mxu0 0.0
    %1715 = vmatprep.subr.mxu0 0.0
    %1716 = vmatpush1.msra.mxu0 0.0
    %1717 = vmatprep.subr.mxu0 0.0
    %1718 = vmatpush1.msra.mxu0 0.0
    %1719 = vmatprep.subr.mxu0 0.0
    %1720 = vmatpush1.msra.mxu0 0.0
    %1721 = vmatprep.subr.mxu0 0.0
    %1722 = vmatpush1.msra.mxu0 0.0
    %1723 = vmatprep.subr.mxu0 0.0
    %1724 = vmatpush1.msra.mxu0 0.0
    %1725 = vmatprep.subr.mxu0 0.0
    %1726 = vmatpush1.msra.mxu0 0.0
    %1727 = vmatprep.subr.mxu0 0.0
    %1728 = vmatpush1.msra.mxu0 0.0
    %1729 = vmatprep.subr.mxu0 0.0
    %1730 = vmatpush1.msra.mxu0 0.0
    %1731 = vmatprep.subr.mxu0 0.0
    %1732 = vmatpush1.msra.mxu0 0.0
    %1733 = vmatprep.subr.mxu0 0.0
    %1734 = vmatpush1.msra.mxu0 0.0
    %1735 = vmatprep.subr.mxu0 0.0
    %1736 = vmatpush1.msra.mxu0 0.0
    %1737 = vmatprep.subr.mxu0 0.0
    %1738 = vmatpush1.msra.mxu0 0.0
    %1739 = vmatprep.subr.mxu0 0.0
    %1740 = vmatpush1.msra.mxu0 0.0
    %1741 = vmatprep.subr.mxu0 0.0
    %1742 = vmatpush1.msra.mxu0 0.0
    %1743 = vmatprep.subr.mxu0 0.0
    %1744 = vmatpush1.msra.mxu0 0.0
    %1745 = vmatprep.mubr.f32.mxu0 0.0
    %1746 = vmatmul.mubr.f32.gmra.mrb[0].mxu0 %v1656
    %v1747 = vpop.f32.mrb[0].mxu0
    %v1748 = vadd.f32 %v1679, %v1747
    %v1749 = vpop.f32.mrb[0].mxu0
    %1750 = vmatprep.mubr.f32.mxu0 0.0
    %1751 = vmatmul.mubr.f32.gmra.mrb[0].mxu0 %v1657
    %v1752 = vpop.f32.mrb[0].mxu0
    %v1753 = vadd.f32 %v1679, %v1752
    %v1754 = vpop.f32.mrb[0].mxu0
    %1755 = vdwg.mxu0
    %v1756 = vadd.f32 %v1554, %v1748
    %v1757 = vadd.f32 %v1555, %v1753
    %v1758 = vld [vmem:[#allocation19] sm:$0x1]
    %v1759 = vld [vmem:[#allocation20] sm:$0x1]
    %v1760 = vsel %vm374, %v1756, 0.0
    %1761 = vadd.xlane.f32.xlu0 %v1760
    %v1762 = vpop.xlane.xlu0 %1761
    %v1763 = vsel %vm374, %v1757, 0.0
    %1764 = vadd.xlane.f32.xlu0 %v1763
    %v1765 = vpop.xlane.xlu0 %1764
    %v1766 = vmul.f32 %v1762, %v1519
    %v1767 = vmul.f32 %v1765, %v1519
    %v1768 = vsub.f32 %v1756, %v1766
    %v1769 = vsub.f32 %v1757, %v1767
    %v1770 = vmul.f32 %v1768, %v1768
    %v1771 = vmul.f32 %v1769, %v1769
    %v1772 = vsel %vm374, %v1770, 0.0
    %1773 = vadd.xlane.f32.xlu0 %v1772
    %v1774 = vpop.xlane.xlu0 %1773
    %v1775 = vsel %vm374, %v1771, 0.0
    %1776 = vadd.xlane.f32.xlu0 %v1775
    %v1777 = vpop.xlane.xlu0 %1776
    %v1778 = vmul.f32 %v1774, %v1519
    %v1779 = vmul.f32 %v1777, %v1519
    %v1780 = vadd.f32 %v1778, 1e-05
    %v1781 = vadd.f32 %v1779, 1e-05
    %v1782 = vrsqrt.pop %v1780
    %v1783 = vrsqrt.pop %v1781
    %v1784 = vmul.f32 %v1768, %v1782
    %v1785 = vmul.f32 %v1769, %v1783
    %v1787 = vlaneseq
    %v1788 = vshrl.u32 %v1787, 7
    %v1789 = vsub.s32 0, %v1788
    %v1790 = vrot.slane %v1758, %v1789
    %v1792 = vmul.f32 %v1784, %v1790
    %v1793 = vmul.f32 %v1785, %v1790
    %v1795 = vlaneseq
    %v1796 = vshrl.u32 %v1795, 7
    %v1797 = vsub.s32 0, %v1796
    %v1798 = vrot.slane %v1759, %v1797
    %v1800 = vadd.f32 %v1792, %v1798
    %v1801 = vadd.f32 %v1793, %v1798
    %s1802 = scalar_lea.vmem %s6, 32
    %v1803 = vld [vmem:[%s1802] sm:$0xff]
    %v1804 = vld [vmem:[%s1802 + $0x8] sm:$0xff]
    %v1805 = vld [vmem:[%s1802 + $0x10] sm:$0xff]
    %v1806 = vld [vmem:[%s1802 + $0x18] sm:$0xff]
    %s1807 = scalar_lea.vmem [#allocation10], 1
    %v1808 = vld [vmem:[%s1807] sm:$0x1]
    %v1810 = vlaneseq
    %v1811 = vshrl.u32 %v1810, 7
    %v1812 = vsub.s32 0, %v1811
    %v1813 = vrot.slane %v1808, %v1812
    %v1816 = vsel %vm374, %v1800, 0
    %v1819 = vsel %vm374, %v1801, 0
    %1821 = vmatprep.subr.mxu0 0.0
    %1822 = vmatpush1.msra.mxu0 %v1803
    %1823 = vmatprep.subr.mxu0 0.0
    %1824 = vmatpush1.msra.mxu0 %v1804
    %1825 = vmatprep.subr.mxu0 0.0
    %1826 = vmatpush1.msra.mxu0 %v1805
    %1827 = vmatprep.subr.mxu0 0.0
    %1828 = vmatpush1.msra.mxu0 %v1806
    %1829 = vmatprep.subr.mxu0 0.0
    %1830 = vmatpush1.msra.mxu0 0.0
    %1831 = vmatprep.subr.mxu0 0.0
    %1832 = vmatpush1.msra.mxu0 0.0
    %1833 = vmatprep.subr.mxu0 0.0
    %1834 = vmatpush1.msra.mxu0 0.0
    %1835 = vmatprep.subr.mxu0 0.0
    %1836 = vmatpush1.msra.mxu0 0.0
    %1837 = vmatprep.subr.mxu0 0.0
    %1838 = vmatpush1.msra.mxu0 0.0
    %1839 = vmatprep.subr.mxu0 0.0
    %1840 = vmatpush1.msra.mxu0 0.0
    %1841 = vmatprep.subr.mxu0 0.0
    %1842 = vmatpush1.msra.mxu0 0.0
    %1843 = vmatprep.subr.mxu0 0.0
    %1844 = vmatpush1.msra.mxu0 0.0
    %1845 = vmatprep.subr.mxu0 0.0
    %1846 = vmatpush1.msra.mxu0 0.0
    %1847 = vmatprep.subr.mxu0 0.0
    %1848 = vmatpush1.msra.mxu0 0.0
    %1849 = vmatprep.subr.mxu0 0.0
    %1850 = vmatpush1.msra.mxu0 0.0
    %1851 = vmatprep.subr.mxu0 0.0
    %1852 = vmatpush1.msra.mxu0 0.0
    %1853 = vmatprep.subr.mxu0 0.0
    %1854 = vmatpush1.msra.mxu0 0.0
    %1855 = vmatprep.subr.mxu0 0.0
    %1856 = vmatpush1.msra.mxu0 0.0
    %1857 = vmatprep.subr.mxu0 0.0
    %1858 = vmatpush1.msra.mxu0 0.0
    %1859 = vmatprep.subr.mxu0 0.0
    %1860 = vmatpush1.msra.mxu0 0.0
    %1861 = vmatprep.subr.mxu0 0.0
    %1862 = vmatpush1.msra.mxu0 0.0
    %1863 = vmatprep.subr.mxu0 0.0
    %1864 = vmatpush1.msra.mxu0 0.0
    %1865 = vmatprep.subr.mxu0 0.0
    %1866 = vmatpush1.msra.mxu0 0.0
    %1867 = vmatprep.subr.mxu0 0.0
    %1868 = vmatpush1.msra.mxu0 0.0
    %1869 = vmatprep.subr.mxu0 0.0
    %1870 = vmatpush1.msra.mxu0 0.0
    %1871 = vmatprep.subr.mxu0 0.0
    %1872 = vmatpush1.msra.mxu0 0.0
    %1873 = vmatprep.subr.mxu0 0.0
    %1874 = vmatpush1.msra.mxu0 0.0
    %1875 = vmatprep.subr.mxu0 0.0
    %1876 = vmatpush1.msra.mxu0 0.0
    %1877 = vmatprep.subr.mxu0 0.0
    %1878 = vmatpush1.msra.mxu0 0.0
    %1879 = vmatprep.subr.mxu0 0.0
    %1880 = vmatpush1.msra.mxu0 0.0
    %1881 = vmatprep.subr.mxu0 0.0
    %1882 = vmatpush1.msra.mxu0 0.0
    %1883 = vmatprep.subr.mxu0 0.0
    %1884 = vmatpush1.msra.mxu0 0.0
    %1885 = vmatprep.mubr.f32.mxu0 0.0
    %1886 = vmatmul.mubr.f32.gmra.mrb[0].mxu0 %v1816
    %v1887 = vpop.f32.mrb[0].mxu0
    %v1888 = vadd.f32 %v1813, %v1887
    %v1889 = vpop.f32.mrb[0].mxu0
    %1890 = vmatprep.mubr.f32.mxu0 0.0
    %1891 = vmatmul.mubr.f32.gmra.mrb[0].mxu0 %v1819
    %v1892 = vpop.f32.mrb[0].mxu0
    %v1893 = vadd.f32 %v1813, %v1892
    %v1894 = vpop.f32.mrb[0].mxu0
    %1895 = vdwg.mxu0
    %s1896 = scalar_lea.vmem %s8, 32
    %v1897 = vld [vmem:[%s1896] sm:$0xff]
    %v1898 = vld [vmem:[%s1896 + $0x8] sm:$0xff]
    %v1899 = vld [vmem:[%s1896 + $0x10] sm:$0xff]
    %v1900 = vld [vmem:[%s1896 + $0x18] sm:$0xff]
    %s1901 = scalar_lea.vmem [#allocation11], 1
    %v1902 = vld [vmem:[%s1901] sm:$0x1]
    %v1904 = vlaneseq
    %v1905 = vshrl.u32 %v1904, 7
    %v1906 = vsub.s32 0, %v1905
    %v1907 = vrot.slane %v1902, %v1906
    %1909 = vmatprep.subr.mxu0 0.0
    %1910 = vmatpush1.msra.mxu0 %v1897
    %1911 = vmatprep.subr.mxu0 0.0
    %1912 = vmatpush1.msra.mxu0 %v1898
    %1913 = vmatprep.subr.mxu0 0.0
    %1914 = vmatpush1.msra.mxu0 %v1899
    %1915 = vmatprep.subr.mxu0 0.0
    %1916 = vmatpush1.msra.mxu0 %v1900
    %1917 = vmatprep.subr.mxu0 0.0
    %1918 = vmatpush1.msra.mxu0 0.0
    %1919 = vmatprep.subr.mxu0 0.0
    %1920 = vmatpush1.msra.mxu0 0.0
    %1921 = vmatprep.subr.mxu0 0.0
    %1922 = vmatpush1.msra.mxu0 0.0
    %1923 = vmatprep.subr.mxu0 0.0
    %1924 = vmatpush1.msra.mxu0 0.0
    %1925 = vmatprep.subr.mxu0 0.0
    %1926 = vmatpush1.msra.mxu0 0.0
    %1927 = vmatprep.subr.mxu0 0.0
    %1928 = vmatpush1.msra.mxu0 0.0
    %1929 = vmatprep.subr.mxu0 0.0
    %1930 = vmatpush1.msra.mxu0 0.0
    %1931 = vmatprep.subr.mxu0 0.0
    %1932 = vmatpush1.msra.mxu0 0.0
    %1933 = vmatprep.subr.mxu0 0.0
    %1934 = vmatpush1.msra.mxu0 0.0
    %1935 = vmatprep.subr.mxu0 0.0
    %1936 = vmatpush1.msra.mxu0 0.0
    %1937 = vmatprep.subr.mxu0 0.0
    %1938 = vmatpush1.msra.mxu0 0.0
    %1939 = vmatprep.subr.mxu0 0.0
    %1940 = vmatpush1.msra.mxu0 0.0
    %1941 = vmatprep.subr.mxu0 0.0
    %1942 = vmatpush1.msra.mxu0 0.0
    %1943 = vmatprep.subr.mxu0 0.0
    %1944 = vmatpush1.msra.mxu0 0.0
    %1945 = vmatprep.subr.mxu0 0.0
    %1946 = vmatpush1.msra.mxu0 0.0
    %1947 = vmatprep.subr.mxu0 0.0
    %1948 = vmatpush1.msra.mxu0 0.0
    %1949 = vmatprep.subr.mxu0 0.0
    %1950 = vmatpush1.msra.mxu0 0.0
    %1951 = vmatprep.subr.mxu0 0.0
    %1952 = vmatpush1.msra.mxu0 0.0
    %1953 = vmatprep.subr.mxu0 0.0
    %1954 = vmatpush1.msra.mxu0 0.0
    %1955 = vmatprep.subr.mxu0 0.0
    %1956 = vmatpush1.msra.mxu0 0.0
    %1957 = vmatprep.subr.mxu0 0.0
    %1958 = vmatpush1.msra.mxu0 0.0
    %1959 = vmatprep.subr.mxu0 0.0
    %1960 = vmatpush1.msra.mxu0 0.0
    %1961 = vmatprep.subr.mxu0 0.0
    %1962 = vmatpush1.msra.mxu0 0.0
    %1963 = vmatprep.subr.mxu0 0.0
    %1964 = vmatpush1.msra.mxu0 0.0
    %1965 = vmatprep.subr.mxu0 0.0
    %1966 = vmatpush1.msra.mxu0 0.0
    %1967 = vmatprep.subr.mxu0 0.0
    %1968 = vmatpush1.msra.mxu0 0.0
    %1969 = vmatprep.subr.mxu0 0.0
    %1970 = vmatpush1.msra.mxu0 0.0
    %1971 = vmatprep.subr.mxu0 0.0
    %1972 = vmatpush1.msra.mxu0 0.0
    %1973 = vmatprep.mubr.f32.mxu0 0.0
    %1974 = vmatmul.mubr.f32.gmra.mrb[0].mxu0 %v1816
    %v1975 = vpop.f32.mrb[0].mxu0
    %v1976 = vadd.f32 %v1907, %v1975
    %v1977 = vpop.f32.mrb[0].mxu0
    %1978 = vmatprep.mubr.f32.mxu0 0.0
    %1979 = vmatmul.mubr.f32.gmra.mrb[0].mxu0 %v1819
    %v1980 = vpop.f32.mrb[0].mxu0
    %v1981 = vadd.f32 %v1907, %v1980
    %v1982 = vpop.f32.mrb[0].mxu0
    %1983 = vdwg.mxu0
    %s1984 = scalar_lea.vmem %s10, 32
    %v1985 = vld [vmem:[%s1984] sm:$0xff]
    %v1986 = vld [vmem:[%s1984 + $0x8] sm:$0xff]
    %v1987 = vld [vmem:[%s1984 + $0x10] sm:$0xff]
    %v1988 = vld [vmem:[%s1984 + $0x18] sm:$0xff]
    %s1989 = scalar_lea.vmem [#allocation13], 1
    %v1990 = vld [vmem:[%s1989] sm:$0x1]
    %v1992 = vlaneseq
    %v1993 = vshrl.u32 %v1992, 7
    %v1994 = vsub.s32 0, %v1993
    %v1995 = vrot.slane %v1990, %v1994
    %1997 = vmatprep.subr.mxu0 0.0
    %1998 = vmatpush1.msra.mxu0 %v1985
    %1999 = vmatprep.subr.mxu0 0.0
    %2000 = vmatpush1.msra.mxu0 %v1986
    %2001 = vmatprep.subr.mxu0 0.0
    %2002 = vmatpush1.msra.mxu0 %v1987
    %2003 = vmatprep.subr.mxu0 0.0
    %2004 = vmatpush1.msra.mxu0 %v1988
    %2005 = vmatprep.subr.mxu0 0.0
    %2006 = vmatpush1.msra.mxu0 0.0
    %2007 = vmatprep.subr.mxu0 0.0
    %2008 = vmatpush1.msra.mxu0 0.0
    %2009 = vmatprep.subr.mxu0 0.0
    %2010 = vmatpush1.msra.mxu0 0.0
    %2011 = vmatprep.subr.mxu0 0.0
    %2012 = vmatpush1.msra.mxu0 0.0
    %2013 = vmatprep.subr.mxu0 0.0
    %2014 = vmatpush1.msra.mxu0 0.0
    %2015 = vmatprep.subr.mxu0 0.0
    %2016 = vmatpush1.msra.mxu0 0.0
    %2017 = vmatprep.subr.mxu0 0.0
    %2018 = vmatpush1.msra.mxu0 0.0
    %2019 = vmatprep.subr.mxu0 0.0
    %2020 = vmatpush1.msra.mxu0 0.0
    %2021 = vmatprep.subr.mxu0 0.0
    %2022 = vmatpush1.msra.mxu0 0.0
    %2023 = vmatprep.subr.mxu0 0.0
    %2024 = vmatpush1.msra.mxu0 0.0
    %2025 = vmatprep.subr.mxu0 0.0
    %2026 = vmatpush1.msra.mxu0 0.0
    %2027 = vmatprep.subr.mxu0 0.0
    %2028 = vmatpush1.msra.mxu0 0.0
    %2029 = vmatprep.subr.mxu0 0.0
    %2030 = vmatpush1.msra.mxu0 0.0
    %2031 = vmatprep.subr.mxu0 0.0
    %2032 = vmatpush1.msra.mxu0 0.0
    %2033 = vmatprep.subr.mxu0 0.0
    %2034 = vmatpush1.msra.mxu0 0.0
    %2035 = vmatprep.subr.mxu0 0.0
    %2036 = vmatpush1.msra.mxu0 0.0
    %2037 = vmatprep.subr.mxu0 0.0
    %2038 = vmatpush1.msra.mxu0 0.0
    %2039 = vmatprep.subr.mxu0 0.0
    %2040 = vmatpush1.msra.mxu0 0.0
    %2041 = vmatprep.subr.mxu0 0.0
    %2042 = vmatpush1.msra.mxu0 0.0
    %2043 = vmatprep.subr.mxu0 0.0
    %2044 = vmatpush1.msra.mxu0 0.0
    %2045 = vmatprep.subr.mxu0 0.0
    %2046 = vmatpush1.msra.mxu0 0.0
    %2047 = vmatprep.subr.mxu0 0.0
    %2048 = vmatpush1.msra.mxu0 0.0
    %2049 = vmatprep.subr.mxu0 0.0
    %2050 = vmatpush1.msra.mxu0 0.0
    %2051 = vmatprep.subr.mxu0 0.0
    %2052 = vmatpush1.msra.mxu0 0.0
    %2053 = vmatprep.subr.mxu0 0.0
    %2054 = vmatpush1.msra.mxu0 0.0
    %2055 = vmatprep.subr.mxu0 0.0
    %2056 = vmatpush1.msra.mxu0 0.0
    %2057 = vmatprep.subr.mxu0 0.0
    %2058 = vmatpush1.msra.mxu0 0.0
    %2059 = vmatprep.subr.mxu0 0.0
    %2060 = vmatpush1.msra.mxu0 0.0
    %2061 = vmatprep.mubr.f32.mxu0 0.0
    %2062 = vmatmul.mubr.f32.gmra.mrb[0].mxu0 %v1816
    %v2063 = vpop.f32.mrb[0].mxu0
    %v2064 = vadd.f32 %v1995, %v2063
    %v2065 = vpop.f32.mrb[0].mxu0
    %2066 = vmatprep.mubr.f32.mxu0 0.0
    %2067 = vmatmul.mubr.f32.gmra.mrb[0].mxu0 %v1819
    %v2068 = vpop.f32.mrb[0].mxu0
    %v2069 = vadd.f32 %v1995, %v2068
    %v2070 = vpop.f32.mrb[0].mxu0
    %2071 = vdwg.mxu0
    %v2072 = vmul.f32 %v1888, %v632
    %v2073 = vmul.f32 %v1893, %v632
    %v2075 = vsel %vm374, %v2072, 0
    %v2078 = vsel %vm374, %v2073, 0
    %v2081 = vsel %vm374, %v1976, 0
    %v2084 = vsel %vm374, %v1981, 0
    %2086 = vmatprep.subr.mxu0 0.0
    %2087 = vmatpush1.xpose.msra.mxu0 %v2081
    %2088 = vmatprep.subr.mxu0 0.0
    %2089 = vmatpush1.xpose.msra.mxu0 %v2084
    %2090 = vmatprep.subr.mxu0 0.0
    %2091 = vmatpush1.xpose.msra.mxu0 0.0
    %2092 = vmatprep.subr.mxu0 0.0
    %2093 = vmatpush1.xpose.msra.mxu0 0.0
    %2094 = vmatprep.subr.mxu0 0.0
    %2095 = vmatpush1.xpose.msra.mxu0 0.0
    %2096 = vmatprep.subr.mxu0 0.0
    %2097 = vmatpush1.xpose.msra.mxu0 0.0
    %2098 = vmatprep.subr.mxu0 0.0
    %2099 = vmatpush1.xpose.msra.mxu0 0.0
    %2100 = vmatprep.subr.mxu0 0.0
    %2101 = vmatpush1.xpose.msra.mxu0 0.0
    %2102 = vmatprep.subr.mxu0 0.0
    %2103 = vmatpush1.xpose.msra.mxu0 0.0
    %2104 = vmatprep.subr.mxu0 0.0
    %2105 = vmatpush1.xpose.msra.mxu0 0.0
    %2106 = vmatprep.subr.mxu0 0.0
    %2107 = vmatpush1.xpose.msra.mxu0 0.0
    %2108 = vmatprep.subr.mxu0 0.0
    %2109 = vmatpush1.xpose.msra.mxu0 0.0
    %2110 = vmatprep.subr.mxu0 0.0
    %2111 = vmatpush1.xpose.msra.mxu0 0.0
    %2112 = vmatprep.subr.mxu0 0.0
    %2113 = vmatpush1.xpose.msra.mxu0 0.0
    %2114 = vmatprep.subr.mxu0 0.0
    %2115 = vmatpush1.xpose.msra.mxu0 0.0
    %2116 = vmatprep.subr.mxu0 0.0
    %2117 = vmatpush1.xpose.msra.mxu0 0.0
    %2118 = vmatprep.subr.mxu0 0.0
    %2119 = vmatpush1.xpose.msra.mxu0 0.0
    %2120 = vmatprep.subr.mxu0 0.0
    %2121 = vmatpush1.xpose.msra.mxu0 0.0
    %2122 = vmatprep.subr.mxu0 0.0
    %2123 = vmatpush1.xpose.msra.mxu0 0.0
    %2124 = vmatprep.subr.mxu0 0.0
    %2125 = vmatpush1.xpose.msra.mxu0 0.0
    %2126 = vmatprep.subr.mxu0 0.0
    %2127 = vmatpush1.xpose.msra.mxu0 0.0
    %2128 = vmatprep.subr.mxu0 0.0
    %2129 = vmatpush1.xpose.msra.mxu0 0.0
    %2130 = vmatprep.subr.mxu0 0.0
    %2131 = vmatpush1.xpose.msra.mxu0 0.0
    %2132 = vmatprep.subr.mxu0 0.0
    %2133 = vmatpush1.xpose.msra.mxu0 0.0
    %2134 = vmatprep.subr.mxu0 0.0
    %2135 = vmatpush1.xpose.msra.mxu0 0.0
    %2136 = vmatprep.subr.mxu0 0.0
    %2137 = vmatpush1.xpose.msra.mxu0 0.0
    %2138 = vmatprep.subr.mxu0 0.0
    %2139 = vmatpush1.xpose.msra.mxu0 0.0
    %2140 = vmatprep.subr.mxu0 0.0
    %2141 = vmatpush1.xpose.msra.mxu0 0.0
    %2142 = vmatprep.subr.mxu0 0.0
    %2143 = vmatpush1.xpose.msra.mxu0 0.0
    %2144 = vmatprep.subr.mxu0 0.0
    %2145 = vmatpush1.xpose.msra.mxu0 0.0
    %2146 = vmatprep.subr.mxu0 0.0
    %2147 = vmatpush1.xpose.msra.mxu0 0.0
    %2148 = vmatprep.subr.mxu0 0.0
    %2149 = vmatpush1.xpose.msra.mxu0 0.0
    %2150 = vmatprep.mubr.f32.mxu0 0.0
    %2151 = vmatmul.mubr.f32.gmra.mrb[0].mxu0 %v2075
    %v2152 = vpop.f32.mrb[0].mxu0
    %v2153 = vadd.f32 %v357, %v2152
    %v2154 = vpop.f32.mrb[0].mxu0
    %2155 = vmatprep.mubr.f32.mxu0 0.0
    %2156 = vmatmul.mubr.f32.gmra.mrb[0].mxu0 %v2078
    %v2157 = vpop.f32.mrb[0].mxu0
    %v2158 = vadd.f32 %v358, %v2157
    %v2159 = vpop.f32.mrb[0].mxu0
    %2160 = vdwg.mxu0
    %v2161 = vsel %vm723, %v2153, -inf
    %2162 = vmax.xlane.f32.xlu0 %v2161
    %v2163 = vpop.xlane.xlu0 %2162
    %v2164 = vsel %vm723, %v2158, -inf
    %2165 = vmax.xlane.f32.xlu0 %v2164
    %v2166 = vpop.xlane.xlu0 %2165
    %v2167 = vsub.f32 %v2153, %v2163
    %v2168 = vsub.f32 %v2158, %v2166
    %v2169 = vmul.f32 %v2167, 1.442695
    %v2170 = vpow.pop %v2169
    %v2171 = vmul.f32 %v2168, 1.442695
    %v2172 = vpow.pop %v2171
    %v2173 = vsel %vm723, %v2170, 0.0
    %2174 = vadd.xlane.f32.xlu0 %v2173
    %v2175 = vpop.xlane.xlu0 %2174
    %v2176 = vsel %vm723, %v2172, 0.0
    %2177 = vadd.xlane.f32.xlu0 %v2176
    %v2178 = vpop.xlane.xlu0 %2177
    %v2179 = vrcp.pop %v2175
    %v2180 = vmul.f32 %v2170, %v2179
    %v2181 = vrcp.pop %v2178
    %v2182 = vmul.f32 %v2172, %v2181
    %v2184 = vsel %vm723, %v2180, 0
    %v2187 = vsel %vm723, %v2182, 0
    %2189 = vmatprep.subr.mxu0 0.0
    %2190 = vmatpush1.msra.mxu0 %v2064
    %2191 = vmatprep.subr.mxu0 0.0
    %2192 = vmatpush1.msra.mxu0 %v2069
    %2193 = vmatprep.subr.mxu0 0.0
    %2194 = vmatpush1.msra.mxu0 0.0
    %2195 = vmatprep.subr.mxu0 0.0
    %2196 = vmatpush1.msra.mxu0 0.0
    %2197 = vmatprep.subr.mxu0 0.0
    %2198 = vmatpush1.msra.mxu0 0.0
    %2199 = vmatprep.subr.mxu0 0.0
    %2200 = vmatpush1.msra.mxu0 0.0
    %2201 = vmatprep.subr.mxu0 0.0
    %2202 = vmatpush1.msra.mxu0 0.0
    %2203 = vmatprep.subr.mxu0 0.0
    %2204 = vmatpush1.msra.mxu0 0.0
    %2205 = vmatprep.subr.mxu0 0.0
    %2206 = vmatpush1.msra.mxu0 0.0
    %2207 = vmatprep.subr.mxu0 0.0
    %2208 = vmatpush1.msra.mxu0 0.0
    %2209 = vmatprep.subr.mxu0 0.0
    %2210 = vmatpush1.msra.mxu0 0.0
    %2211 = vmatprep.subr.mxu0 0.0
    %2212 = vmatpush1.msra.mxu0 0.0
    %2213 = vmatprep.subr.mxu0 0.0
    %2214 = vmatpush1.msra.mxu0 0.0
    %2215 = vmatprep.subr.mxu0 0.0
    %2216 = vmatpush1.msra.mxu0 0.0
    %2217 = vmatprep.subr.mxu0 0.0
    %2218 = vmatpush1.msra.mxu0 0.0
    %2219 = vmatprep.subr.mxu0 0.0
    %2220 = vmatpush1.msra.mxu0 0.0
    %2221 = vmatprep.subr.mxu0 0.0
    %2222 = vmatpush1.msra.mxu0 0.0
    %2223 = vmatprep.subr.mxu0 0.0
    %2224 = vmatpush1.msra.mxu0 0.0
    %2225 = vmatprep.subr.mxu0 0.0
    %2226 = vmatpush1.msra.mxu0 0.0
    %2227 = vmatprep.subr.mxu0 0.0
    %2228 = vmatpush1.msra.mxu0 0.0
    %2229 = vmatprep.subr.mxu0 0.0
    %2230 = vmatpush1.msra.mxu0 0.0
    %2231 = vmatprep.subr.mxu0 0.0
    %2232 = vmatpush1.msra.mxu0 0.0
    %2233 = vmatprep.subr.mxu0 0.0
    %2234 = vmatpush1.msra.mxu0 0.0
    %2235 = vmatprep.subr.mxu0 0.0
    %2236 = vmatpush1.msra.mxu0 0.0
    %2237 = vmatprep.subr.mxu0 0.0
    %2238 = vmatpush1.msra.mxu0 0.0
    %2239 = vmatprep.subr.mxu0 0.0
    %2240 = vmatpush1.msra.mxu0 0.0
    %2241 = vmatprep.subr.mxu0 0.0
    %2242 = vmatpush1.msra.mxu0 0.0
    %2243 = vmatprep.subr.mxu0 0.0
    %2244 = vmatpush1.msra.mxu0 0.0
    %2245 = vmatprep.subr.mxu0 0.0
    %2246 = vmatpush1.msra.mxu0 0.0
    %2247 = vmatprep.subr.mxu0 0.0
    %2248 = vmatpush1.msra.mxu0 0.0
    %2249 = vmatprep.subr.mxu0 0.0
    %2250 = vmatpush1.msra.mxu0 0.0
    %2251 = vmatprep.subr.mxu0 0.0
    %2252 = vmatpush1.msra.mxu0 0.0
    %2253 = vmatprep.mubr.f32.mxu0 0.0
    %2254 = vmatmul.mubr.f32.gmra.mrb[0].mxu0 %v2184
    %v2255 = vpop.f32.mrb[0].mxu0
    %v2256 = vadd.f32 0.0, %v2255
    %v2257 = vpop.f32.mrb[0].mxu0
    %2258 = vmatprep.mubr.f32.mxu0 0.0
    %2259 = vmatmul.mubr.f32.gmra.mrb[0].mxu0 %v2187
    %v2260 = vpop.f32.mrb[0].mxu0
    %v2261 = vadd.f32 0.0, %v2260
    %v2262 = vpop.f32.mrb[0].mxu0
    %2263 = vdwg.mxu0
    %v2264 = vmul.f32 %v2256, %v632
    %v2265 = vmul.f32 %v2261, %v632
    %v2266 = vmul.f32 %v1888, %v833
    %v2267 = vmul.f32 %v1893, %v833
    %v2269 = vsel %vm374, %v2266, 0
    %v2272 = vsel %vm374, %v2267, 0
    %2274 = vmatprep.subr.mxu0 0.0
    %2275 = vmatpush1.xpose.msra.mxu0 %v2081
    %2276 = vmatprep.subr.mxu0 0.0
    %2277 = vmatpush1.xpose.msra.mxu0 %v2084
    %2278 = vmatprep.subr.mxu0 0.0
    %2279 = vmatpush1.xpose.msra.mxu0 0.0
    %2280 = vmatprep.subr.mxu0 0.0
    %2281 = vmatpush1.xpose.msra.mxu0 0.0
    %2282 = vmatprep.subr.mxu0 0.0
    %2283 = vmatpush1.xpose.msra.mxu0 0.0
    %2284 = vmatprep.subr.mxu0 0.0
    %2285 = vmatpush1.xpose.msra.mxu0 0.0
    %2286 = vmatprep.subr.mxu0 0.0
    %2287 = vmatpush1.xpose.msra.mxu0 0.0
    %2288 = vmatprep.subr.mxu0 0.0
    %2289 = vmatpush1.xpose.msra.mxu0 0.0
    %2290 = vmatprep.subr.mxu0 0.0
    %2291 = vmatpush1.xpose.msra.mxu0 0.0
    %2292 = vmatprep.subr.mxu0 0.0
    %2293 = vmatpush1.xpose.msra.mxu0 0.0
    %2294 = vmatprep.subr.mxu0 0.0
    %2295 = vmatpush1.xpose.msra.mxu0 0.0
    %2296 = vmatprep.subr.mxu0 0.0
    %2297 = vmatpush1.xpose.msra.mxu0 0.0
    %2298 = vmatprep.subr.mxu0 0.0
    %2299 = vmatpush1.xpose.msra.mxu0 0.0
    %2300 = vmatprep.subr.mxu0 0.0
    %2301 = vmatpush1.xpose.msra.mxu0 0.0
    %2302 = vmatprep.subr.mxu0 0.0
    %2303 = vmatpush1.xpose.msra.mxu0 0.0
    %2304 = vmatprep.subr.mxu0 0.0
    %2305 = vmatpush1.xpose.msra.mxu0 0.0
    %2306 = vmatprep.subr.mxu0 0.0
    %2307 = vmatpush1.xpose.msra.mxu0 0.0
    %2308 = vmatprep.subr.mxu0 0.0
    %2309 = vmatpush1.xpose.msra.mxu0 0.0
    %2310 = vmatprep.subr.mxu0 0.0
    %2311 = vmatpush1.xpose.msra.mxu0 0.0
    %2312 = vmatprep.subr.mxu0 0.0
    %2313 = vmatpush1.xpose.msra.mxu0 0.0
    %2314 = vmatprep.subr.mxu0 0.0
    %2315 = vmatpush1.xpose.msra.mxu0 0.0
    %2316 = vmatprep.subr.mxu0 0.0
    %2317 = vmatpush1.xpose.msra.mxu0 0.0
    %2318 = vmatprep.subr.mxu0 0.0
    %2319 = vmatpush1.xpose.msra.mxu0 0.0
    %2320 = vmatprep.subr.mxu0 0.0
    %2321 = vmatpush1.xpose.msra.mxu0 0.0
    %2322 = vmatprep.subr.mxu0 0.0
    %2323 = vmatpush1.xpose.msra.mxu0 0.0
    %2324 = vmatprep.subr.mxu0 0.0
    %2325 = vmatpush1.xpose.msra.mxu0 0.0
    %2326 = vmatprep.subr.mxu0 0.0
    %2327 = vmatpush1.xpose.msra.mxu0 0.0
    %2328 = vmatprep.subr.mxu0 0.0
    %2329 = vmatpush1.xpose.msra.mxu0 0.0
    %2330 = vmatprep.subr.mxu0 0.0
    %2331 = vmatpush1.xpose.msra.mxu0 0.0
    %2332 = vmatprep.subr.mxu0 0.0
    %2333 = vmatpush1.xpose.msra.mxu0 0.0
    %2334 = vmatprep.subr.mxu0 0.0
    %2335 = vmatpush1.xpose.msra.mxu0 0.0
    %2336 = vmatprep.subr.mxu0 0.0
    %2337 = vmatpush1.xpose.msra.mxu0 0.0
    %2338 = vmatprep.mubr.f32.mxu0 0.0
    %2339 = vmatmul.mubr.f32.gmra.mrb[0].mxu0 %v2269
    %v2340 = vpop.f32.mrb[0].mxu0
    %v2341 = vadd.f32 %v357, %v2340
    %v2342 = vpop.f32.mrb[0].mxu0
    %2343 = vmatprep.mubr.f32.mxu0 0.0
    %2344 = vmatmul.mubr.f32.gmra.mrb[0].mxu0 %v2272
    %v2345 = vpop.f32.mrb[0].mxu0
    %v2346 = vadd.f32 %v358, %v2345
    %v2347 = vpop.f32.mrb[0].mxu0
    %2348 = vdwg.mxu0
    %v2349 = vsel %vm723, %v2341, -inf
    %2350 = vmax.xlane.f32.xlu0 %v2349
    %v2351 = vpop.xlane.xlu0 %2350
    %v2352 = vsel %vm723, %v2346, -inf
    %2353 = vmax.xlane.f32.xlu0 %v2352
    %v2354 = vpop.xlane.xlu0 %2353
    %v2355 = vsub.f32 %v2341, %v2351
    %v2356 = vsub.f32 %v2346, %v2354
    %v2357 = vmul.f32 %v2355, 1.442695
    %v2358 = vpow.pop %v2357
    %v2359 = vmul.f32 %v2356, 1.442695
    %v2360 = vpow.pop %v2359
    %v2361 = vsel %vm723, %v2358, 0.0
    %2362 = vadd.xlane.f32.xlu0 %v2361
    %v2363 = vpop.xlane.xlu0 %2362
    %v2364 = vsel %vm723, %v2360, 0.0
    %2365 = vadd.xlane.f32.xlu0 %v2364
    %v2366 = vpop.xlane.xlu0 %2365
    %v2367 = vrcp.pop %v2363
    %v2368 = vmul.f32 %v2358, %v2367
    %v2369 = vrcp.pop %v2366
    %v2370 = vmul.f32 %v2360, %v2369
    %v2372 = vsel %vm723, %v2368, 0
    %v2375 = vsel %vm723, %v2370, 0
    %2377 = vmatprep.subr.mxu0 0.0
    %2378 = vmatpush1.msra.mxu0 %v2064
    %2379 = vmatprep.subr.mxu0 0.0
    %2380 = vmatpush1.msra.mxu0 %v2069
    %2381 = vmatprep.subr.mxu0 0.0
    %2382 = vmatpush1.msra.mxu0 0.0
    %2383 = vmatprep.subr.mxu0 0.0
    %2384 = vmatpush1.msra.mxu0 0.0
    %2385 = vmatprep.subr.mxu0 0.0
    %2386 = vmatpush1.msra.mxu0 0.0
    %2387 = vmatprep.subr.mxu0 0.0
    %2388 = vmatpush1.msra.mxu0 0.0
    %2389 = vmatprep.subr.mxu0 0.0
    %2390 = vmatpush1.msra.mxu0 0.0
    %2391 = vmatprep.subr.mxu0 0.0
    %2392 = vmatpush1.msra.mxu0 0.0
    %2393 = vmatprep.subr.mxu0 0.0
    %2394 = vmatpush1.msra.mxu0 0.0
    %2395 = vmatprep.subr.mxu0 0.0
    %2396 = vmatpush1.msra.mxu0 0.0
    %2397 = vmatprep.subr.mxu0 0.0
    %2398 = vmatpush1.msra.mxu0 0.0
    %2399 = vmatprep.subr.mxu0 0.0
    %2400 = vmatpush1.msra.mxu0 0.0
    %2401 = vmatprep.subr.mxu0 0.0
    %2402 = vmatpush1.msra.mxu0 0.0
    %2403 = vmatprep.subr.mxu0 0.0
    %2404 = vmatpush1.msra.mxu0 0.0
    %2405 = vmatprep.subr.mxu0 0.0
    %2406 = vmatpush1.msra.mxu0 0.0
    %2407 = vmatprep.subr.mxu0 0.0
    %2408 = vmatpush1.msra.mxu0 0.0
    %2409 = vmatprep.subr.mxu0 0.0
    %2410 = vmatpush1.msra.mxu0 0.0
    %2411 = vmatprep.subr.mxu0 0.0
    %2412 = vmatpush1.msra.mxu0 0.0
    %2413 = vmatprep.subr.mxu0 0.0
    %2414 = vmatpush1.msra.mxu0 0.0
    %2415 = vmatprep.subr.mxu0 0.0
    %2416 = vmatpush1.msra.mxu0 0.0
    %2417 = vmatprep.subr.mxu0 0.0
    %2418 = vmatpush1.msra.mxu0 0.0
    %2419 = vmatprep.subr.mxu0 0.0
    %2420 = vmatpush1.msra.mxu0 0.0
    %2421 = vmatprep.subr.mxu0 0.0
    %2422 = vmatpush1.msra.mxu0 0.0
    %2423 = vmatprep.subr.mxu0 0.0
    %2424 = vmatpush1.msra.mxu0 0.0
    %2425 = vmatprep.subr.mxu0 0.0
    %2426 = vmatpush1.msra.mxu0 0.0
    %2427 = vmatprep.subr.mxu0 0.0
    %2428 = vmatpush1.msra.mxu0 0.0
    %2429 = vmatprep.subr.mxu0 0.0
    %2430 = vmatpush1.msra.mxu0 0.0
    %2431 = vmatprep.subr.mxu0 0.0
    %2432 = vmatpush1.msra.mxu0 0.0
    %2433 = vmatprep.subr.mxu0 0.0
    %2434 = vmatpush1.msra.mxu0 0.0
    %2435 = vmatprep.subr.mxu0 0.0
    %2436 = vmatpush1.msra.mxu0 0.0
    %2437 = vmatprep.subr.mxu0 0.0
    %2438 = vmatpush1.msra.mxu0 0.0
    %2439 = vmatprep.subr.mxu0 0.0
    %2440 = vmatpush1.msra.mxu0 0.0
    %2441 = vmatprep.mubr.f32.mxu0 0.0
    %2442 = vmatmul.mubr.f32.gmra.mrb[0].mxu0 %v2372
    %v2443 = vpop.f32.mrb[0].mxu0
    %v2444 = vadd.f32 0.0, %v2443
    %v2445 = vpop.f32.mrb[0].mxu0
    %2446 = vmatprep.mubr.f32.mxu0 0.0
    %2447 = vmatmul.mubr.f32.gmra.mrb[0].mxu0 %v2375
    %v2448 = vpop.f32.mrb[0].mxu0
    %v2449 = vadd.f32 0.0, %v2448
    %v2450 = vpop.f32.mrb[0].mxu0
    %2451 = vdwg.mxu0
    %v2452 = vmul.f32 %v2444, %v833
    %v2453 = vmul.f32 %v2449, %v833
    %v2454 = vadd.f32 %v2264, %v2452
    %v2455 = vadd.f32 %v2265, %v2453
    %v2456 = vmul.f32 %v1888, %v1029
    %v2457 = vmul.f32 %v1893, %v1029
    %v2459 = vsel %vm374, %v2456, 0
    %v2462 = vsel %vm374, %v2457, 0
    %2464 = vmatprep.subr.mxu0 0.0
    %2465 = vmatpush1.xpose.msra.mxu0 %v2081
    %2466 = vmatprep.subr.mxu0 0.0
    %2467 = vmatpush1.xpose.msra.mxu0 %v2084
    %2468 = vmatprep.subr.mxu0 0.0
    %2469 = vmatpush1.xpose.msra.mxu0 0.0
    %2470 = vmatprep.subr.mxu0 0.0
    %2471 = vmatpush1.xpose.msra.mxu0 0.0
    %2472 = vmatprep.subr.mxu0 0.0
    %2473 = vmatpush1.xpose.msra.mxu0 0.0
    %2474 = vmatprep.subr.mxu0 0.0
    %2475 = vmatpush1.xpose.msra.mxu0 0.0
    %2476 = vmatprep.subr.mxu0 0.0
    %2477 = vmatpush1.xpose.msra.mxu0 0.0
    %2478 = vmatprep.subr.mxu0 0.0
    %2479 = vmatpush1.xpose.msra.mxu0 0.0
    %2480 = vmatprep.subr.mxu0 0.0
    %2481 = vmatpush1.xpose.msra.mxu0 0.0
    %2482 = vmatprep.subr.mxu0 0.0
    %2483 = vmatpush1.xpose.msra.mxu0 0.0
    %2484 = vmatprep.subr.mxu0 0.0
    %2485 = vmatpush1.xpose.msra.mxu0 0.0
    %2486 = vmatprep.subr.mxu0 0.0
    %2487 = vmatpush1.xpose.msra.mxu0 0.0
    %2488 = vmatprep.subr.mxu0 0.0
    %2489 = vmatpush1.xpose.msra.mxu0 0.0
    %2490 = vmatprep.subr.mxu0 0.0
    %2491 = vmatpush1.xpose.msra.mxu0 0.0
    %2492 = vmatprep.subr.mxu0 0.0
    %2493 = vmatpush1.xpose.msra.mxu0 0.0
    %2494 = vmatprep.subr.mxu0 0.0
    %2495 = vmatpush1.xpose.msra.mxu0 0.0
    %2496 = vmatprep.subr.mxu0 0.0
    %2497 = vmatpush1.xpose.msra.mxu0 0.0
    %2498 = vmatprep.subr.mxu0 0.0
    %2499 = vmatpush1.xpose.msra.mxu0 0.0
    %2500 = vmatprep.subr.mxu0 0.0
    %2501 = vmatpush1.xpose.msra.mxu0 0.0
    %2502 = vmatprep.subr.mxu0 0.0
    %2503 = vmatpush1.xpose.msra.mxu0 0.0
    %2504 = vmatprep.subr.mxu0 0.0
    %2505 = vmatpush1.xpose.msra.mxu0 0.0
    %2506 = vmatprep.subr.mxu0 0.0
    %2507 = vmatpush1.xpose.msra.mxu0 0.0
    %2508 = vmatprep.subr.mxu0 0.0
    %2509 = vmatpush1.xpose.msra.mxu0 0.0
    %2510 = vmatprep.subr.mxu0 0.0
    %2511 = vmatpush1.xpose.msra.mxu0 0.0
    %2512 = vmatprep.subr.mxu0 0.0
    %2513 = vmatpush1.xpose.msra.mxu0 0.0
    %2514 = vmatprep.subr.mxu0 0.0
    %2515 = vmatpush1.xpose.msra.mxu0 0.0
    %2516 = vmatprep.subr.mxu0 0.0
    %2517 = vmatpush1.xpose.msra.mxu0 0.0
    %2518 = vmatprep.subr.mxu0 0.0
    %2519 = vmatpush1.xpose.msra.mxu0 0.0
    %2520 = vmatprep.subr.mxu0 0.0
    %2521 = vmatpush1.xpose.msra.mxu0 0.0
    %2522 = vmatprep.subr.mxu0 0.0
    %2523 = vmatpush1.xpose.msra.mxu0 0.0
    %2524 = vmatprep.subr.mxu0 0.0
    %2525 = vmatpush1.xpose.msra.mxu0 0.0
    %2526 = vmatprep.subr.mxu0 0.0
    %2527 = vmatpush1.xpose.msra.mxu0 0.0
    %2528 = vmatprep.mubr.f32.mxu0 0.0
    %2529 = vmatmul.mubr.f32.gmra.mrb[0].mxu0 %v2459
    %v2530 = vpop.f32.mrb[0].mxu0
    %v2531 = vadd.f32 %v357, %v2530
    %v2532 = vpop.f32.mrb[0].mxu0
    %2533 = vmatprep.mubr.f32.mxu0 0.0
    %2534 = vmatmul.mubr.f32.gmra.mrb[0].mxu0 %v2462
    %v2535 = vpop.f32.mrb[0].mxu0
    %v2536 = vadd.f32 %v358, %v2535
    %v2537 = vpop.f32.mrb[0].mxu0
    %2538 = vdwg.mxu0
    %v2539 = vsel %vm723, %v2531, -inf
    %2540 = vmax.xlane.f32.xlu0 %v2539
    %v2541 = vpop.xlane.xlu0 %2540
    %v2542 = vsel %vm723, %v2536, -inf
    %2543 = vmax.xlane.f32.xlu0 %v2542
    %v2544 = vpop.xlane.xlu0 %2543
    %v2545 = vsub.f32 %v2531, %v2541
    %v2546 = vsub.f32 %v2536, %v2544
    %v2547 = vmul.f32 %v2545, 1.442695
    %v2548 = vpow.pop %v2547
    %v2549 = vmul.f32 %v2546, 1.442695
    %v2550 = vpow.pop %v2549
    %v2551 = vsel %vm723, %v2548, 0.0
    %2552 = vadd.xlane.f32.xlu0 %v2551
    %v2553 = vpop.xlane.xlu0 %2552
    %v2554 = vsel %vm723, %v2550, 0.0
    %2555 = vadd.xlane.f32.xlu0 %v2554
    %v2556 = vpop.xlane.xlu0 %2555
    %v2557 = vrcp.pop %v2553
    %v2558 = vmul.f32 %v2548, %v2557
    %v2559 = vrcp.pop %v2556
    %v2560 = vmul.f32 %v2550, %v2559
    %v2562 = vsel %vm723, %v2558, 0
    %v2565 = vsel %vm723, %v2560, 0
    %2567 = vmatprep.subr.mxu0 0.0
    %2568 = vmatpush1.msra.mxu0 %v2064
    %2569 = vmatprep.subr.mxu0 0.0
    %2570 = vmatpush1.msra.mxu0 %v2069
    %2571 = vmatprep.subr.mxu0 0.0
    %2572 = vmatpush1.msra.mxu0 0.0
    %2573 = vmatprep.subr.mxu0 0.0
    %2574 = vmatpush1.msra.mxu0 0.0
    %2575 = vmatprep.subr.mxu0 0.0
    %2576 = vmatpush1.msra.mxu0 0.0
    %2577 = vmatprep.subr.mxu0 0.0
    %2578 = vmatpush1.msra.mxu0 0.0
    %2579 = vmatprep.subr.mxu0 0.0
    %2580 = vmatpush1.msra.mxu0 0.0
    %2581 = vmatprep.subr.mxu0 0.0
    %2582 = vmatpush1.msra.mxu0 0.0
    %2583 = vmatprep.subr.mxu0 0.0
    %2584 = vmatpush1.msra.mxu0 0.0
    %2585 = vmatprep.subr.mxu0 0.0
    %2586 = vmatpush1.msra.mxu0 0.0
    %2587 = vmatprep.subr.mxu0 0.0
    %2588 = vmatpush1.msra.mxu0 0.0
    %2589 = vmatprep.subr.mxu0 0.0
    %2590 = vmatpush1.msra.mxu0 0.0
    %2591 = vmatprep.subr.mxu0 0.0
    %2592 = vmatpush1.msra.mxu0 0.0
    %2593 = vmatprep.subr.mxu0 0.0
    %2594 = vmatpush1.msra.mxu0 0.0
    %2595 = vmatprep.subr.mxu0 0.0
    %2596 = vmatpush1.msra.mxu0 0.0
    %2597 = vmatprep.subr.mxu0 0.0
    %2598 = vmatpush1.msra.mxu0 0.0
    %2599 = vmatprep.subr.mxu0 0.0
    %2600 = vmatpush1.msra.mxu0 0.0
    %2601 = vmatprep.subr.mxu0 0.0
    %2602 = vmatpush1.msra.mxu0 0.0
    %2603 = vmatprep.subr.mxu0 0.0
    %2604 = vmatpush1.msra.mxu0 0.0
    %2605 = vmatprep.subr.mxu0 0.0
    %2606 = vmatpush1.msra.mxu0 0.0
    %2607 = vmatprep.subr.mxu0 0.0
    %2608 = vmatpush1.msra.mxu0 0.0
    %2609 = vmatprep.subr.mxu0 0.0
    %2610 = vmatpush1.msra.mxu0 0.0
    %2611 = vmatprep.subr.mxu0 0.0
    %2612 = vmatpush1.msra.mxu0 0.0
    %2613 = vmatprep.subr.mxu0 0.0
    %2614 = vmatpush1.msra.mxu0 0.0
    %2615 = vmatprep.subr.mxu0 0.0
    %2616 = vmatpush1.msra.mxu0 0.0
    %2617 = vmatprep.subr.mxu0 0.0
    %2618 = vmatpush1.msra.mxu0 0.0
    %2619 = vmatprep.subr.mxu0 0.0
    %2620 = vmatpush1.msra.mxu0 0.0
    %2621 = vmatprep.subr.mxu0 0.0
    %2622 = vmatpush1.msra.mxu0 0.0
    %2623 = vmatprep.subr.mxu0 0.0
    %2624 = vmatpush1.msra.mxu0 0.0
    %2625 = vmatprep.subr.mxu0 0.0
    %2626 = vmatpush1.msra.mxu0 0.0
    %2627 = vmatprep.subr.mxu0 0.0
    %2628 = vmatpush1.msra.mxu0 0.0
    %2629 = vmatprep.subr.mxu0 0.0
    %2630 = vmatpush1.msra.mxu0 0.0
    %2631 = vmatprep.mubr.f32.mxu0 0.0
    %2632 = vmatmul.mubr.f32.gmra.mrb[0].mxu0 %v2562
    %v2633 = vpop.f32.mrb[0].mxu0
    %v2634 = vadd.f32 0.0, %v2633
    %v2635 = vpop.f32.mrb[0].mxu0
    %2636 = vmatprep.mubr.f32.mxu0 0.0
    %2637 = vmatmul.mubr.f32.gmra.mrb[0].mxu0 %v2565
    %v2638 = vpop.f32.mrb[0].mxu0
    %v2639 = vadd.f32 0.0, %v2638
    %v2640 = vpop.f32.mrb[0].mxu0
    %2641 = vdwg.mxu0
    %v2642 = vmul.f32 %v2634, %v1029
    %v2643 = vmul.f32 %v2639, %v1029
    %v2644 = vadd.f32 %v2454, %v2642
    %v2645 = vadd.f32 %v2455, %v2643
    %v2646 = vmul.f32 %v1888, %v1225
    %v2647 = vmul.f32 %v1893, %v1225
    %v2649 = vsel %vm374, %v2646, 0
    %v2652 = vsel %vm374, %v2647, 0
    %2654 = vmatprep.subr.mxu0 0.0
    %2655 = vmatpush1.xpose.msra.mxu0 %v2081
    %2656 = vmatprep.subr.mxu0 0.0
    %2657 = vmatpush1.xpose.msra.mxu0 %v2084
    %2658 = vmatprep.subr.mxu0 0.0
    %2659 = vmatpush1.xpose.msra.mxu0 0.0
    %2660 = vmatprep.subr.mxu0 0.0
    %2661 = vmatpush1.xpose.msra.mxu0 0.0
    %2662 = vmatprep.subr.mxu0 0.0
    %2663 = vmatpush1.xpose.msra.mxu0 0.0
    %2664 = vmatprep.subr.mxu0 0.0
    %2665 = vmatpush1.xpose.msra.mxu0 0.0
    %2666 = vmatprep.subr.mxu0 0.0
    %2667 = vmatpush1.xpose.msra.mxu0 0.0
    %2668 = vmatprep.subr.mxu0 0.0
    %2669 = vmatpush1.xpose.msra.mxu0 0.0
    %2670 = vmatprep.subr.mxu0 0.0
    %2671 = vmatpush1.xpose.msra.mxu0 0.0
    %2672 = vmatprep.subr.mxu0 0.0
    %2673 = vmatpush1.xpose.msra.mxu0 0.0
    %2674 = vmatprep.subr.mxu0 0.0
    %2675 = vmatpush1.xpose.msra.mxu0 0.0
    %2676 = vmatprep.subr.mxu0 0.0
    %2677 = vmatpush1.xpose.msra.mxu0 0.0
    %2678 = vmatprep.subr.mxu0 0.0
    %2679 = vmatpush1.xpose.msra.mxu0 0.0
    %2680 = vmatprep.subr.mxu0 0.0
    %2681 = vmatpush1.xpose.msra.mxu0 0.0
    %2682 = vmatprep.subr.mxu0 0.0
    %2683 = vmatpush1.xpose.msra.mxu0 0.0
    %2684 = vmatprep.subr.mxu0 0.0
    %2685 = vmatpush1.xpose.msra.mxu0 0.0
    %2686 = vmatprep.subr.mxu0 0.0
    %2687 = vmatpush1.xpose.msra.mxu0 0.0
    %2688 = vmatprep.subr.mxu0 0.0
    %2689 = vmatpush1.xpose.msra.mxu0 0.0
    %2690 = vmatprep.subr.mxu0 0.0
    %2691 = vmatpush1.xpose.msra.mxu0 0.0
    %2692 = vmatprep.subr.mxu0 0.0
    %2693 = vmatpush1.xpose.msra.mxu0 0.0
    %2694 = vmatprep.subr.mxu0 0.0
    %2695 = vmatpush1.xpose.msra.mxu0 0.0
    %2696 = vmatprep.subr.mxu0 0.0
    %2697 = vmatpush1.xpose.msra.mxu0 0.0
    %2698 = vmatprep.subr.mxu0 0.0
    %2699 = vmatpush1.xpose.msra.mxu0 0.0
    %2700 = vmatprep.subr.mxu0 0.0
    %2701 = vmatpush1.xpose.msra.mxu0 0.0
    %2702 = vmatprep.subr.mxu0 0.0
    %2703 = vmatpush1.xpose.msra.mxu0 0.0
    %2704 = vmatprep.subr.mxu0 0.0
    %2705 = vmatpush1.xpose.msra.mxu0 0.0
    %2706 = vmatprep.subr.mxu0 0.0
    %2707 = vmatpush1.xpose.msra.mxu0 0.0
    %2708 = vmatprep.subr.mxu0 0.0
    %2709 = vmatpush1.xpose.msra.mxu0 0.0
    %2710 = vmatprep.subr.mxu0 0.0
    %2711 = vmatpush1.xpose.msra.mxu0 0.0
    %2712 = vmatprep.subr.mxu0 0.0
    %2713 = vmatpush1.xpose.msra.mxu0 0.0
    %2714 = vmatprep.subr.mxu0 0.0
    %2715 = vmatpush1.xpose.msra.mxu0 0.0
    %2716 = vmatprep.subr.mxu0 0.0
    %2717 = vmatpush1.xpose.msra.mxu0 0.0
    %2718 = vmatprep.mubr.f32.mxu0 0.0
    %2719 = vmatmul.mubr.f32.gmra.mrb[0].mxu0 %v2649
    %v2720 = vpop.f32.mrb[0].mxu0
    %v2721 = vadd.f32 %v357, %v2720
    %v2722 = vpop.f32.mrb[0].mxu0
    %2723 = vmatprep.mubr.f32.mxu0 0.0
    %2724 = vmatmul.mubr.f32.gmra.mrb[0].mxu0 %v2652
    %v2725 = vpop.f32.mrb[0].mxu0
    %v2726 = vadd.f32 %v358, %v2725
    %v2727 = vpop.f32.mrb[0].mxu0
    %2728 = vdwg.mxu0
    %v2729 = vsel %vm723, %v2721, -inf
    %2730 = vmax.xlane.f32.xlu0 %v2729
    %v2731 = vpop.xlane.xlu0 %2730
    %v2732 = vsel %vm723, %v2726, -inf
    %2733 = vmax.xlane.f32.xlu0 %v2732
    %v2734 = vpop.xlane.xlu0 %2733
    %v2735 = vsub.f32 %v2721, %v2731
    %v2736 = vsub.f32 %v2726, %v2734
    %v2737 = vmul.f32 %v2735, 1.442695
    %v2738 = vpow.pop %v2737
    %v2739 = vmul.f32 %v2736, 1.442695
    %v2740 = vpow.pop %v2739
    %v2741 = vsel %vm723, %v2738, 0.0
    %2742 = vadd.xlane.f32.xlu0 %v2741
    %v2743 = vpop.xlane.xlu0 %2742
    %v2744 = vsel %vm723, %v2740, 0.0
    %2745 = vadd.xlane.f32.xlu0 %v2744
    %v2746 = vpop.xlane.xlu0 %2745
    %v2747 = vrcp.pop %v2743
    %v2748 = vmul.f32 %v2738, %v2747
    %v2749 = vrcp.pop %v2746
    %v2750 = vmul.f32 %v2740, %v2749
    %v2752 = vsel %vm723, %v2748, 0
    %v2755 = vsel %vm723, %v2750, 0
    %2757 = vmatprep.subr.mxu0 0.0
    %2758 = vmatpush1.msra.mxu0 %v2064
    %2759 = vmatprep.subr.mxu0 0.0
    %2760 = vmatpush1.msra.mxu0 %v2069
    %2761 = vmatprep.subr.mxu0 0.0
    %2762 = vmatpush1.msra.mxu0 0.0
    %2763 = vmatprep.subr.mxu0 0.0
    %2764 = vmatpush1.msra.mxu0 0.0
    %2765 = vmatprep.subr.mxu0 0.0
    %2766 = vmatpush1.msra.mxu0 0.0
    %2767 = vmatprep.subr.mxu0 0.0
    %2768 = vmatpush1.msra.mxu0 0.0
    %2769 = vmatprep.subr.mxu0 0.0
    %2770 = vmatpush1.msra.mxu0 0.0
    %2771 = vmatprep.subr.mxu0 0.0
    %2772 = vmatpush1.msra.mxu0 0.0
    %2773 = vmatprep.subr.mxu0 0.0
    %2774 = vmatpush1.msra.mxu0 0.0
    %2775 = vmatprep.subr.mxu0 0.0
    %2776 = vmatpush1.msra.mxu0 0.0
    %2777 = vmatprep.subr.mxu0 0.0
    %2778 = vmatpush1.msra.mxu0 0.0
    %2779 = vmatprep.subr.mxu0 0.0
    %2780 = vmatpush1.msra.mxu0 0.0
    %2781 = vmatprep.subr.mxu0 0.0
    %2782 = vmatpush1.msra.mxu0 0.0
    %2783 = vmatprep.subr.mxu0 0.0
    %2784 = vmatpush1.msra.mxu0 0.0
    %2785 = vmatprep.subr.mxu0 0.0
    %2786 = vmatpush1.msra.mxu0 0.0
    %2787 = vmatprep.subr.mxu0 0.0
    %2788 = vmatpush1.msra.mxu0 0.0
    %2789 = vmatprep.subr.mxu0 0.0
    %2790 = vmatpush1.msra.mxu0 0.0
    %2791 = vmatprep.subr.mxu0 0.0
    %2792 = vmatpush1.msra.mxu0 0.0
    %2793 = vmatprep.subr.mxu0 0.0
    %2794 = vmatpush1.msra.mxu0 0.0
    %2795 = vmatprep.subr.mxu0 0.0
    %2796 = vmatpush1.msra.mxu0 0.0
    %2797 = vmatprep.subr.mxu0 0.0
    %2798 = vmatpush1.msra.mxu0 0.0
    %2799 = vmatprep.subr.mxu0 0.0
    %2800 = vmatpush1.msra.mxu0 0.0
    %2801 = vmatprep.subr.mxu0 0.0
    %2802 = vmatpush1.msra.mxu0 0.0
    %2803 = vmatprep.subr.mxu0 0.0
    %2804 = vmatpush1.msra.mxu0 0.0
    %2805 = vmatprep.subr.mxu0 0.0
    %2806 = vmatpush1.msra.mxu0 0.0
    %2807 = vmatprep.subr.mxu0 0.0
    %2808 = vmatpush1.msra.mxu0 0.0
    %2809 = vmatprep.subr.mxu0 0.0
    %2810 = vmatpush1.msra.mxu0 0.0
    %2811 = vmatprep.subr.mxu0 0.0
    %2812 = vmatpush1.msra.mxu0 0.0
    %2813 = vmatprep.subr.mxu0 0.0
    %2814 = vmatpush1.msra.mxu0 0.0
    %2815 = vmatprep.subr.mxu0 0.0
    %2816 = vmatpush1.msra.mxu0 0.0
    %2817 = vmatprep.subr.mxu0 0.0
    %2818 = vmatpush1.msra.mxu0 0.0
    %2819 = vmatprep.subr.mxu0 0.0
    %2820 = vmatpush1.msra.mxu0 0.0
    %2821 = vmatprep.mubr.f32.mxu0 0.0
    %2822 = vmatmul.mubr.f32.gmra.mrb[0].mxu0 %v2752
    %v2823 = vpop.f32.mrb[0].mxu0
    %v2824 = vadd.f32 0.0, %v2823
    %v2825 = vpop.f32.mrb[0].mxu0
    %2826 = vmatprep.mubr.f32.mxu0 0.0
    %2827 = vmatmul.mubr.f32.gmra.mrb[0].mxu0 %v2755
    %v2828 = vpop.f32.mrb[0].mxu0
    %v2829 = vadd.f32 0.0, %v2828
    %v2830 = vpop.f32.mrb[0].mxu0
    %2831 = vdwg.mxu0
    %v2832 = vmul.f32 %v2824, %v1225
    %v2833 = vmul.f32 %v2829, %v1225
    %v2834 = vadd.f32 %v2644, %v2832
    %v2835 = vadd.f32 %v2645, %v2833
    %s2836 = scalar_lea.vmem %s12, 32
    %v2837 = vld [vmem:[%s2836] sm:$0xff]
    %v2838 = vld [vmem:[%s2836 + $0x8] sm:$0xff]
    %v2839 = vld [vmem:[%s2836 + $0x10] sm:$0xff]
    %v2840 = vld [vmem:[%s2836 + $0x18] sm:$0xff]
    %s2841 = scalar_lea.vmem [#allocation14], 1
    %v2842 = vld [vmem:[%s2841] sm:$0x1]
    %v2844 = vlaneseq
    %v2845 = vshrl.u32 %v2844, 7
    %v2846 = vsub.s32 0, %v2845
    %v2847 = vrot.slane %v2842, %v2846
    %v2850 = vsel %vm374, %v2834, 0
    %v2853 = vsel %vm374, %v2835, 0
    %2855 = vmatprep.subr.mxu0 0.0
    %2856 = vmatpush1.msra.mxu0 %v2837
    %2857 = vmatprep.subr.mxu0 0.0
    %2858 = vmatpush1.msra.mxu0 %v2838
    %2859 = vmatprep.subr.mxu0 0.0
    %2860 = vmatpush1.msra.mxu0 %v2839
    %2861 = vmatprep.subr.mxu0 0.0
    %2862 = vmatpush1.msra.mxu0 %v2840
    %2863 = vmatprep.subr.mxu0 0.0
    %2864 = vmatpush1.msra.mxu0 0.0
    %2865 = vmatprep.subr.mxu0 0.0
    %2866 = vmatpush1.msra.mxu0 0.0
    %2867 = vmatprep.subr.mxu0 0.0
    %2868 = vmatpush1.msra.mxu0 0.0
    %2869 = vmatprep.subr.mxu0 0.0
    %2870 = vmatpush1.msra.mxu0 0.0
    %2871 = vmatprep.subr.mxu0 0.0
    %2872 = vmatpush1.msra.mxu0 0.0
    %2873 = vmatprep.subr.mxu0 0.0
    %2874 = vmatpush1.msra.mxu0 0.0
    %2875 = vmatprep.subr.mxu0 0.0
    %2876 = vmatpush1.msra.mxu0 0.0
    %2877 = vmatprep.subr.mxu0 0.0
    %2878 = vmatpush1.msra.mxu0 0.0
    %2879 = vmatprep.subr.mxu0 0.0
    %2880 = vmatpush1.msra.mxu0 0.0
    %2881 = vmatprep.subr.mxu0 0.0
    %2882 = vmatpush1.msra.mxu0 0.0
    %2883 = vmatprep.subr.mxu0 0.0
    %2884 = vmatpush1.msra.mxu0 0.0
    %2885 = vmatprep.subr.mxu0 0.0
    %2886 = vmatpush1.msra.mxu0 0.0
    %2887 = vmatprep.subr.mxu0 0.0
    %2888 = vmatpush1.msra.mxu0 0.0
    %2889 = vmatprep.subr.mxu0 0.0
    %2890 = vmatpush1.msra.mxu0 0.0
    %2891 = vmatprep.subr.mxu0 0.0
    %2892 = vmatpush1.msra.mxu0 0.0
    %2893 = vmatprep.subr.mxu0 0.0
    %2894 = vmatpush1.msra.mxu0 0.0
    %2895 = vmatprep.subr.mxu0 0.0
    %2896 = vmatpush1.msra.mxu0 0.0
    %2897 = vmatprep.subr.mxu0 0.0
    %2898 = vmatpush1.msra.mxu0 0.0
    %2899 = vmatprep.subr.mxu0 0.0
    %2900 = vmatpush1.msra.mxu0 0.0
    %2901 = vmatprep.subr.mxu0 0.0
    %2902 = vmatpush1.msra.mxu0 0.0
    %2903 = vmatprep.subr.mxu0 0.0
    %2904 = vmatpush1.msra.mxu0 0.0
    %2905 = vmatprep.subr.mxu0 0.0
    %2906 = vmatpush1.msra.mxu0 0.0
    %2907 = vmatprep.subr.mxu0 0.0
    %2908 = vmatpush1.msra.mxu0 0.0
    %2909 = vmatprep.subr.mxu0 0.0
    %2910 = vmatpush1.msra.mxu0 0.0
    %2911 = vmatprep.subr.mxu0 0.0
    %2912 = vmatpush1.msra.mxu0 0.0
    %2913 = vmatprep.subr.mxu0 0.0
    %2914 = vmatpush1.msra.mxu0 0.0
    %2915 = vmatprep.subr.mxu0 0.0
    %2916 = vmatpush1.msra.mxu0 0.0
    %2917 = vmatprep.subr.mxu0 0.0
    %2918 = vmatpush1.msra.mxu0 0.0
    %2919 = vmatprep.mubr.f32.mxu0 0.0
    %2920 = vmatmul.mubr.f32.gmra.mrb[0].mxu0 %v2850
    %v2921 = vpop.f32.mrb[0].mxu0
    %v2922 = vadd.f32 %v2847, %v2921
    %v2923 = vpop.f32.mrb[0].mxu0
    %2924 = vmatprep.mubr.f32.mxu0 0.0
    %2925 = vmatmul.mubr.f32.gmra.mrb[0].mxu0 %v2853
    %v2926 = vpop.f32.mrb[0].mxu0
    %v2927 = vadd.f32 %v2847, %v2926
    %v2928 = vpop.f32.mrb[0].mxu0
    %2929 = vdwg.mxu0
    %v2930 = vadd.f32 %v1800, %v2922
    %v2931 = vadd.f32 %v1801, %v2927
    %s2932 = scalar_lea.vmem [#allocation16], 1
    %v2933 = vld [vmem:[%s2932] sm:$0x1]
    %s2934 = scalar_lea.vmem [#allocation17], 1
    %v2935 = vld [vmem:[%s2934] sm:$0x1]
    %v2936 = vsel %vm374, %v2930, 0.0
    %2937 = vadd.xlane.f32.xlu0 %v2936
    %v2938 = vpop.xlane.xlu0 %2937
    %v2939 = vsel %vm374, %v2931, 0.0
    %2940 = vadd.xlane.f32.xlu0 %v2939
    %v2941 = vpop.xlane.xlu0 %2940
    %v2942 = vmul.f32 %v2938, %v1519
    %v2943 = vmul.f32 %v2941, %v1519
    %v2944 = vsub.f32 %v2930, %v2942
    %v2945 = vsub.f32 %v2931, %v2943
    %v2946 = vmul.f32 %v2944, %v2944
    %v2947 = vmul.f32 %v2945, %v2945
    %v2948 = vsel %vm374, %v2946, 0.0
    %2949 = vadd.xlane.f32.xlu0 %v2948
    %v2950 = vpop.xlane.xlu0 %2949
    %v2951 = vsel %vm374, %v2947, 0.0
    %2952 = vadd.xlane.f32.xlu0 %v2951
    %v2953 = vpop.xlane.xlu0 %2952
    %v2954 = vmul.f32 %v2950, %v1519
    %v2955 = vmul.f32 %v2953, %v1519
    %v2956 = vadd.f32 %v2954, 1e-05
    %v2957 = vadd.f32 %v2955, 1e-05
    %v2958 = vrsqrt.pop %v2956
    %v2959 = vrsqrt.pop %v2957
    %v2960 = vmul.f32 %v2944, %v2958
    %v2961 = vmul.f32 %v2945, %v2959
    %v2963 = vlaneseq
    %v2964 = vshrl.u32 %v2963, 7
    %v2965 = vsub.s32 0, %v2964
    %v2966 = vrot.slane %v2933, %v2965
    %v2968 = vmul.f32 %v2960, %v2966
    %v2969 = vmul.f32 %v2961, %v2966
    %v2971 = vlaneseq
    %v2972 = vshrl.u32 %v2971, 7
    %v2973 = vsub.s32 0, %v2972
    %v2974 = vrot.slane %v2935, %v2973
    %v2976 = vadd.f32 %v2968, %v2974
    %v2977 = vadd.f32 %v2969, %v2974
    %s2978 = scalar_lea.vmem %s18, 32
    %v2979 = vld [vmem:[%s2978] sm:$0xff]
    %v2980 = vld [vmem:[%s2978 + $0x8] sm:$0xff]
    %v2981 = vld [vmem:[%s2978 + $0x10] sm:$0xff]
    %v2982 = vld [vmem:[%s2978 + $0x18] sm:$0xff]
    %s2983 = scalar_lea.vmem [#allocation22], 1
    %v2984 = vld [vmem:[%s2983] sm:$0x1]
    %v2986 = vlaneseq
    %v2987 = vshrl.u32 %v2986, 7
    %v2988 = vsub.s32 0, %v2987
    %v2989 = vrot.slane %v2984, %v2988
    %v2992 = vsel %vm374, %v2976, 0
    %v2995 = vsel %vm374, %v2977, 0
    %2997 = vmatprep.subr.mxu0 0.0
    %2998 = vmatpush1.msra.mxu0 %v2979
    %2999 = vmatprep.subr.mxu0 0.0
    %3000 = vmatpush1.msra.mxu0 %v2980
    %3001 = vmatprep.subr.mxu0 0.0
    %3002 = vmatpush1.msra.mxu0 %v2981
    %3003 = vmatprep.subr.mxu0 0.0
    %3004 = vmatpush1.msra.mxu0 %v2982
    %3005 = vmatprep.subr.mxu0 0.0
    %3006 = vmatpush1.msra.mxu0 0.0
    %3007 = vmatprep.subr.mxu0 0.0
    %3008 = vmatpush1.msra.mxu0 0.0
    %3009 = vmatprep.subr.mxu0 0.0
    %3010 = vmatpush1.msra.mxu0 0.0
    %3011 = vmatprep.subr.mxu0 0.0
    %3012 = vmatpush1.msra.mxu0 0.0
    %3013 = vmatprep.subr.mxu0 0.0
    %3014 = vmatpush1.msra.mxu0 0.0
    %3015 = vmatprep.subr.mxu0 0.0
    %3016 = vmatpush1.msra.mxu0 0.0
    %3017 = vmatprep.subr.mxu0 0.0
    %3018 = vmatpush1.msra.mxu0 0.0
    %3019 = vmatprep.subr.mxu0 0.0
    %3020 = vmatpush1.msra.mxu0 0.0
    %3021 = vmatprep.subr.mxu0 0.0
    %3022 = vmatpush1.msra.mxu0 0.0
    %3023 = vmatprep.subr.mxu0 0.0
    %3024 = vmatpush1.msra.mxu0 0.0
    %3025 = vmatprep.subr.mxu0 0.0
    %3026 = vmatpush1.msra.mxu0 0.0
    %3027 = vmatprep.subr.mxu0 0.0
    %3028 = vmatpush1.msra.mxu0 0.0
    %3029 = vmatprep.subr.mxu0 0.0
    %3030 = vmatpush1.msra.mxu0 0.0
    %3031 = vmatprep.subr.mxu0 0.0
    %3032 = vmatpush1.msra.mxu0 0.0
    %3033 = vmatprep.subr.mxu0 0.0
    %3034 = vmatpush1.msra.mxu0 0.0
    %3035 = vmatprep.subr.mxu0 0.0
    %3036 = vmatpush1.msra.mxu0 0.0
    %3037 = vmatprep.subr.mxu0 0.0
    %3038 = vmatpush1.msra.mxu0 0.0
    %3039 = vmatprep.subr.mxu0 0.0
    %3040 = vmatpush1.msra.mxu0 0.0
    %3041 = vmatprep.subr.mxu0 0.0
    %3042 = vmatpush1.msra.mxu0 0.0
    %3043 = vmatprep.subr.mxu0 0.0
    %3044 = vmatpush1.msra.mxu0 0.0
    %3045 = vmatprep.subr.mxu0 0.0
    %3046 = vmatpush1.msra.mxu0 0.0
    %3047 = vmatprep.subr.mxu0 0.0
    %3048 = vmatpush1.msra.mxu0 0.0
    %3049 = vmatprep.subr.mxu0 0.0
    %3050 = vmatpush1.msra.mxu0 0.0
    %3051 = vmatprep.subr.mxu0 0.0
    %3052 = vmatpush1.msra.mxu0 0.0
    %3053 = vmatprep.subr.mxu0 0.0
    %3054 = vmatpush1.msra.mxu0 0.0
    %3055 = vmatprep.subr.mxu0 0.0
    %3056 = vmatpush1.msra.mxu0 0.0
    %3057 = vmatprep.subr.mxu0 0.0
    %3058 = vmatpush1.msra.mxu0 0.0
    %3059 = vmatprep.subr.mxu0 0.0
    %3060 = vmatpush1.msra.mxu0 0.0
    %3061 = vmatprep.mubr.f32.mxu0 0.0
    %3062 = vmatmul.mubr.f32.gmra.mrb[0].mxu0 %v2992
    %v3063 = vpop.f32.mrb[0].mxu0
    %v3064 = vadd.f32 %v2989, %v3063
    %v3065 = vpop.f32.mrb[0].mxu0
    %3066 = vmatprep.mubr.f32.mxu0 0.0
    %3067 = vmatmul.mubr.f32.gmra.mrb[0].mxu0 %v2995
    %v3068 = vpop.f32.mrb[0].mxu0
    %v3069 = vadd.f32 %v2989, %v3068
    %v3070 = vpop.f32.mrb[0].mxu0
    %3071 = vdwg.mxu0
    %v3072 = vmul.f32 %v3064, 0.5
    %v3073 = vmul.f32 %v3069, 0.5
    %v3074 = vmul.f32 %v3064, 0.70710677
    %v3075 = vmul.f32 %v3069, 0.70710677
    %v3076 = verf.f32.pop %v3074
    %v3077 = verf.f32.pop %v3075
    %v3078 = vadd.f32 %v3076, 1.0
    %v3079 = vadd.f32 %v3077, 1.0
    %v3080 = vmul.f32 %v3072, %v3078
    %v3081 = vmul.f32 %v3073, %v3079
    %s3082 = scalar_lea.vmem %s20, 128
    %v3083 = vld [vmem:[%s3082] sm:$0xff]
    %v3084 = vld [vmem:[%s3082 + $0x8] sm:$0xff]
    %v3085 = vld [vmem:[%s3082 + $0x10] sm:$0xff]
    %v3086 = vld [vmem:[%s3082 + $0x18] sm:$0xff]
    %v3087 = vld [vmem:[%s3082 + $0x20] sm:$0xff]
    %v3088 = vld [vmem:[%s3082 + $0x28] sm:$0xff]
    %v3089 = vld [vmem:[%s3082 + $0x30] sm:$0xff]
    %v3090 = vld [vmem:[%s3082 + $0x38] sm:$0xff]
    %v3091 = vld [vmem:[%s3082 + $0x40] sm:$0xff]
    %v3092 = vld [vmem:[%s3082 + $0x48] sm:$0xff]
    %v3093 = vld [vmem:[%s3082 + $0x50] sm:$0xff]
    %v3094 = vld [vmem:[%s3082 + $0x58] sm:$0xff]
    %v3095 = vld [vmem:[%s3082 + $0x60] sm:$0xff]
    %v3096 = vld [vmem:[%s3082 + $0x68] sm:$0xff]
    %v3097 = vld [vmem:[%s3082 + $0x70] sm:$0xff]
    %v3098 = vld [vmem:[%s3082 + $0x78] sm:$0xff]
    %s3099 = scalar_lea.vmem [#allocation23], 1
    %v3100 = vld [vmem:[%s3099] sm:$0x1]
    %v3102 = vlaneseq
    %v3103 = vshrl.u32 %v3102, 7
    %v3104 = vsub.s32 0, %v3103
    %v3105 = vrot.slane %v3100, %v3104
    %3107 = vmatprep.subr.mxu0 0.0
    %3108 = vmatpush1.msra.mxu0 %v3083
    %3109 = vmatprep.subr.mxu0 0.0
    %3110 = vmatpush1.msra.mxu0 %v3084
    %3111 = vmatprep.subr.mxu0 0.0
    %3112 = vmatpush1.msra.mxu0 %v3085
    %3113 = vmatprep.subr.mxu0 0.0
    %3114 = vmatpush1.msra.mxu0 %v3086
    %3115 = vmatprep.subr.mxu0 0.0
    %3116 = vmatpush1.msra.mxu0 %v3087
    %3117 = vmatprep.subr.mxu0 0.0
    %3118 = vmatpush1.msra.mxu0 %v3088
    %3119 = vmatprep.subr.mxu0 0.0
    %3120 = vmatpush1.msra.mxu0 %v3089
    %3121 = vmatprep.subr.mxu0 0.0
    %3122 = vmatpush1.msra.mxu0 %v3090
    %3123 = vmatprep.subr.mxu0 0.0
    %3124 = vmatpush1.msra.mxu0 %v3091
    %3125 = vmatprep.subr.mxu0 0.0
    %3126 = vmatpush1.msra.mxu0 %v3092
    %3127 = vmatprep.subr.mxu0 0.0
    %3128 = vmatpush1.msra.mxu0 %v3093
    %3129 = vmatprep.subr.mxu0 0.0
    %3130 = vmatpush1.msra.mxu0 %v3094
    %3131 = vmatprep.subr.mxu0 0.0
    %3132 = vmatpush1.msra.mxu0 %v3095
    %3133 = vmatprep.subr.mxu0 0.0
    %3134 = vmatpush1.msra.mxu0 %v3096
    %3135 = vmatprep.subr.mxu0 0.0
    %3136 = vmatpush1.msra.mxu0 %v3097
    %3137 = vmatprep.subr.mxu0 0.0
    %3138 = vmatpush1.msra.mxu0 %v3098
    %3139 = vmatprep.subr.mxu0 0.0
    %3140 = vmatpush1.msra.mxu0 0.0
    %3141 = vmatprep.subr.mxu0 0.0
    %3142 = vmatpush1.msra.mxu0 0.0
    %3143 = vmatprep.subr.mxu0 0.0
    %3144 = vmatpush1.msra.mxu0 0.0
    %3145 = vmatprep.subr.mxu0 0.0
    %3146 = vmatpush1.msra.mxu0 0.0
    %3147 = vmatprep.subr.mxu0 0.0
    %3148 = vmatpush1.msra.mxu0 0.0
    %3149 = vmatprep.subr.mxu0 0.0
    %3150 = vmatpush1.msra.mxu0 0.0
    %3151 = vmatprep.subr.mxu0 0.0
    %3152 = vmatpush1.msra.mxu0 0.0
    %3153 = vmatprep.subr.mxu0 0.0
    %3154 = vmatpush1.msra.mxu0 0.0
    %3155 = vmatprep.subr.mxu0 0.0
    %3156 = vmatpush1.msra.mxu0 0.0
    %3157 = vmatprep.subr.mxu0 0.0
    %3158 = vmatpush1.msra.mxu0 0.0
    %3159 = vmatprep.subr.mxu0 0.0
    %3160 = vmatpush1.msra.mxu0 0.0
    %3161 = vmatprep.subr.mxu0 0.0
    %3162 = vmatpush1.msra.mxu0 0.0
    %3163 = vmatprep.subr.mxu0 0.0
    %3164 = vmatpush1.msra.mxu0 0.0
    %3165 = vmatprep.subr.mxu0 0.0
    %3166 = vmatpush1.msra.mxu0 0.0
    %3167 = vmatprep.subr.mxu0 0.0
    %3168 = vmatpush1.msra.mxu0 0.0
    %3169 = vmatprep.subr.mxu0 0.0
    %3170 = vmatpush1.msra.mxu0 0.0
    %3171 = vmatprep.mubr.f32.mxu0 0.0
    %3172 = vmatmul.mubr.f32.gmra.mrb[0].mxu0 %v3080
    %v3173 = vpop.f32.mrb[0].mxu0
    %v3174 = vadd.f32 %v3105, %v3173
    %v3175 = vpop.f32.mrb[0].mxu0
    %3176 = vmatprep.mubr.f32.mxu0 0.0
    %3177 = vmatmul.mubr.f32.gmra.mrb[0].mxu0 %v3081
    %v3178 = vpop.f32.mrb[0].mxu0
    %v3179 = vadd.f32 %v3105, %v3178
    %v3180 = vpop.f32.mrb[0].mxu0
    %3181 = vdwg.mxu0
    %v3182 = vadd.f32 %v2976, %v3174
    %v3183 = vadd.f32 %v2977, %v3179
    %s3184 = scalar_lea.vmem [#allocation19], 1
    %v3185 = vld [vmem:[%s3184] sm:$0x1]
    %s3186 = scalar_lea.vmem [#allocation20], 1
    %v3187 = vld [vmem:[%s3186] sm:$0x1]
    %v3188 = vsel %vm374, %v3182, 0.0
    %3189 = vadd.xlane.f32.xlu0 %v3188
    %v3190 = vpop.xlane.xlu0 %3189
    %v3191 = vsel %vm374, %v3183, 0.0
    %3192 = vadd.xlane.f32.xlu0 %v3191
    %v3193 = vpop.xlane.xlu0 %3192
    %v3194 = vmul.f32 %v3190, %v1519
    %v3195 = vmul.f32 %v3193, %v1519
    %v3196 = vsub.f32 %v3182, %v3194
    %v3197 = vsub.f32 %v3183, %v3195
    %v3198 = vmul.f32 %v3196, %v3196
    %v3199 = vmul.f32 %v3197, %v3197
    %v3200 = vsel %vm374, %v3198, 0.0
    %3201 = vadd.xlane.f32.xlu0 %v3200
    %v3202 = vpop.xlane.xlu0 %3201
    %v3203 = vsel %vm374, %v3199, 0.0
    %3204 = vadd.xlane.f32.xlu0 %v3203
    %v3205 = vpop.xlane.xlu0 %3204
    %v3206 = vmul.f32 %v3202, %v1519
    %v3207 = vmul.f32 %v3205, %v1519
    %v3208 = vadd.f32 %v3206, 1e-05
    %v3209 = vadd.f32 %v3207, 1e-05
    %v3210 = vrsqrt.pop %v3208
    %v3211 = vrsqrt.pop %v3209
    %v3212 = vmul.f32 %v3196, %v3210
    %v3213 = vmul.f32 %v3197, %v3211
    %v3215 = vlaneseq
    %v3216 = vshrl.u32 %v3215, 7
    %v3217 = vsub.s32 0, %v3216
    %v3218 = vrot.slane %v3185, %v3217
    %v3220 = vmul.f32 %v3212, %v3218
    %v3221 = vmul.f32 %v3213, %v3218
    %v3223 = vlaneseq
    %v3224 = vshrl.u32 %v3223, 7
    %v3225 = vsub.s32 0, %v3224
    %v3226 = vrot.slane %v3187, %v3225
    %v3228 = vadd.f32 %v3220, %v3226
    %v3229 = vadd.f32 %v3221, %v3226
    %v3230 = vld [vmem:[%s1] sm:$0x3]
    %v3231 = vsub.f32 1.0, %v3230
    %vm3232 = vcmask 58368
    %v3233 = vsel %vm3232, %v3231, 0.0
    %3234 = vadd.xlane.f32.xlu0 %v3233
    %v3235 = vpop.xlane.xlu0 %3234
    %v3236 = vcvt.f32.s32.to.zero.pseudo %v3235
    %v3237 = vsub.s32 %v3236, 1
    %vm3238 = vcmp.gt.s32.totalorder %v3237, 0
    %v3239 = vsel %vm3238, %v3237, 0
    %v3240 = vlaneseq
    %v3241 = vshrl.u32 %v3240, 7
    %v3242 = vmul.u32 %v3241, 8
    %v3243 = vadd.s32 %v3242, %v3239
    %v3244 = vlaneseq
    %v3245 = vand.u32 %v3244, 127
    %vm3246 = vcmp.eq.s32.totalorder %v3245, %v3243
    %v3247 = vsel %vm3246, 1, 0
    %v3248 = vcvt.s32.f32 %v3247
    %v3250 = vsel %vm723, %v3248, 0
    %3252 = vmatprep.subr.mxu0 0.0
    %3253 = vmatpush1.msra.mxu0 %v3228
    %3254 = vmatprep.subr.mxu0 0.0
    %3255 = vmatpush1.msra.mxu0 %v3229
    %3256 = vmatprep.subr.mxu0 0.0
    %3257 = vmatpush1.msra.mxu0 0.0
    %3258 = vmatprep.subr.mxu0 0.0
    %3259 = vmatpush1.msra.mxu0 0.0
    %3260 = vmatprep.subr.mxu0 0.0
    %3261 = vmatpush1.msra.mxu0 0.0
    %3262 = vmatprep.subr.mxu0 0.0
    %3263 = vmatpush1.msra.mxu0 0.0
    %3264 = vmatprep.subr.mxu0 0.0
    %3265 = vmatpush1.msra.mxu0 0.0
    %3266 = vmatprep.subr.mxu0 0.0
    %3267 = vmatpush1.msra.mxu0 0.0
    %3268 = vmatprep.subr.mxu0 0.0
    %3269 = vmatpush1.msra.mxu0 0.0
    %3270 = vmatprep.subr.mxu0 0.0
    %3271 = vmatpush1.msra.mxu0 0.0
    %3272 = vmatprep.subr.mxu0 0.0
    %3273 = vmatpush1.msra.mxu0 0.0
    %3274 = vmatprep.subr.mxu0 0.0
    %3275 = vmatpush1.msra.mxu0 0.0
    %3276 = vmatprep.subr.mxu0 0.0
    %3277 = vmatpush1.msra.mxu0 0.0
    %3278 = vmatprep.subr.mxu0 0.0
    %3279 = vmatpush1.msra.mxu0 0.0
    %3280 = vmatprep.subr.mxu0 0.0
    %3281 = vmatpush1.msra.mxu0 0.0
    %3282 = vmatprep.subr.mxu0 0.0
    %3283 = vmatpush1.msra.mxu0 0.0
    %3284 = vmatprep.subr.mxu0 0.0
    %3285 = vmatpush1.msra.mxu0 0.0
    %3286 = vmatprep.subr.mxu0 0.0
    %3287 = vmatpush1.msra.mxu0 0.0
    %3288 = vmatprep.subr.mxu0 0.0
    %3289 = vmatpush1.msra.mxu0 0.0
    %3290 = vmatprep.subr.mxu0 0.0
    %3291 = vmatpush1.msra.mxu0 0.0
    %3292 = vmatprep.subr.mxu0 0.0
    %3293 = vmatpush1.msra.mxu0 0.0
    %3294 = vmatprep.subr.mxu0 0.0
    %3295 = vmatpush1.msra.mxu0 0.0
    %3296 = vmatprep.subr.mxu0 0.0
    %3297 = vmatpush1.msra.mxu0 0.0
    %3298 = vmatprep.subr.mxu0 0.0
    %3299 = vmatpush1.msra.mxu0 0.0
    %3300 = vmatprep.subr.mxu0 0.0
    %3301 = vmatpush1.msra.mxu0 0.0
    %3302 = vmatprep.subr.mxu0 0.0
    %3303 = vmatpush1.msra.mxu0 0.0
    %3304 = vmatprep.subr.mxu0 0.0
    %3305 = vmatpush1.msra.mxu0 0.0
    %3306 = vmatprep.subr.mxu0 0.0
    %3307 = vmatpush1.msra.mxu0 0.0
    %3308 = vmatprep.subr.mxu0 0.0
    %3309 = vmatpush1.msra.mxu0 0.0
    %3310 = vmatprep.subr.mxu0 0.0
    %3311 = vmatpush1.msra.mxu0 0.0
    %3312 = vmatprep.subr.mxu0 0.0
    %3313 = vmatpush1.msra.mxu0 0.0
    %3314 = vmatprep.subr.mxu0 0.0
    %3315 = vmatpush1.msra.mxu0 0.0
    %3316 = vmatprep.mubr.f32.mxu0 0.0
    %3317 = vmatmul.mubr.f32.gmra.mrb[0].mxu0 %v3250
    %v3318 = vpop.f32.mrb[0].mxu0
    %v3319 = vadd.f32 0.0, %v3318
    %v3320 = vpop.f32.mrb[0].mxu0
    %3321 = vdwg.mxu0
    %v3322 = vld [vmem:[%s22] sm:$0xff]
    %v3323 = vld [vmem:[%s22 + $0x8] sm:$0xff]
    %v3324 = vld [vmem:[%s22 + $0x10] sm:$0xff]
    %v3325 = vld [vmem:[%s22 + $0x18] sm:$0xff]
    %v3326 = vld [vmem:[%s23] sm:$0x1]
    %v3328 = vlaneseq
    %v3329 = vshrl.u32 %v3328, 7
    %v3330 = vsub.s32 0, %v3329
    %v3331 = vrot.slane %v3326, %v3330
    %v3334 = vsel %vm374, %v3319, 0
    %3336 = vmatprep.subr.mxu0 0.0
    %3337 = vmatpush1.msra.mxu0 %v3322
    %3338 = vmatprep.subr.mxu0 0.0
    %3339 = vmatpush1.msra.mxu0 %v3323
    %3340 = vmatprep.subr.mxu0 0.0
    %3341 = vmatpush1.msra.mxu0 %v3324
    %3342 = vmatprep.subr.mxu0 0.0
    %3343 = vmatpush1.msra.mxu0 %v3325
    %3344 = vmatprep.subr.mxu0 0.0
    %3345 = vmatpush1.msra.mxu0 0.0
    %3346 = vmatprep.subr.mxu0 0.0
    %3347 = vmatpush1.msra.mxu0 0.0
    %3348 = vmatprep.subr.mxu0 0.0
    %3349 = vmatpush1.msra.mxu0 0.0
    %3350 = vmatprep.subr.mxu0 0.0
    %3351 = vmatpush1.msra.mxu0 0.0
    %3352 = vmatprep.subr.mxu0 0.0
    %3353 = vmatpush1.msra.mxu0 0.0
    %3354 = vmatprep.subr.mxu0 0.0
    %3355 = vmatpush1.msra.mxu0 0.0
    %3356 = vmatprep.subr.mxu0 0.0
    %3357 = vmatpush1.msra.mxu0 0.0
    %3358 = vmatprep.subr.mxu0 0.0
    %3359 = vmatpush1.msra.mxu0 0.0
    %3360 = vmatprep.subr.mxu0 0.0
    %3361 = vmatpush1.msra.mxu0 0.0
    %3362 = vmatprep.subr.mxu0 0.0
    %3363 = vmatpush1.msra.mxu0 0.0
    %3364 = vmatprep.subr.mxu0 0.0
    %3365 = vmatpush1.msra.mxu0 0.0
    %3366 = vmatprep.subr.mxu0 0.0
    %3367 = vmatpush1.msra.mxu0 0.0
    %3368 = vmatprep.subr.mxu0 0.0
    %3369 = vmatpush1.msra.mxu0 0.0
    %3370 = vmatprep.subr.mxu0 0.0
    %3371 = vmatpush1.msra.mxu0 0.0
    %3372 = vmatprep.subr.mxu0 0.0
    %3373 = vmatpush1.msra.mxu0 0.0
    %3374 = vmatprep.subr.mxu0 0.0
    %3375 = vmatpush1.msra.mxu0 0.0
    %3376 = vmatprep.subr.mxu0 0.0
    %3377 = vmatpush1.msra.mxu0 0.0
    %3378 = vmatprep.subr.mxu0 0.0
    %3379 = vmatpush1.msra.mxu0 0.0
    %3380 = vmatprep.subr.mxu0 0.0
    %3381 = vmatpush1.msra.mxu0 0.0
    %3382 = vmatprep.subr.mxu0 0.0
    %3383 = vmatpush1.msra.mxu0 0.0
    %3384 = vmatprep.subr.mxu0 0.0
    %3385 = vmatpush1.msra.mxu0 0.0
    %3386 = vmatprep.subr.mxu0 0.0
    %3387 = vmatpush1.msra.mxu0 0.0
    %3388 = vmatprep.subr.mxu0 0.0
    %3389 = vmatpush1.msra.mxu0 0.0
    %3390 = vmatprep.subr.mxu0 0.0
    %3391 = vmatpush1.msra.mxu0 0.0
    %3392 = vmatprep.subr.mxu0 0.0
    %3393 = vmatpush1.msra.mxu0 0.0
    %3394 = vmatprep.subr.mxu0 0.0
    %3395 = vmatpush1.msra.mxu0 0.0
    %3396 = vmatprep.subr.mxu0 0.0
    %3397 = vmatpush1.msra.mxu0 0.0
    %3398 = vmatprep.subr.mxu0 0.0
    %3399 = vmatpush1.msra.mxu0 0.0
    %3400 = vmatprep.mubr.f32.mxu0 0.0
    %3401 = vmatmul.mubr.f32.gmra.mrb[0].mxu0 %v3334
    %v3402 = vpop.f32.mrb[0].mxu0
    %v3403 = vadd.f32 %v3331, %v3402
    %v3404 = vpop.f32.mrb[0].mxu0
    %3405 = vdwg.mxu0
    %3406 = vst [vmem:[#allocation25] sm:$0x3] %v3403
    // Predicated region
    $region154: #{tpu_custom_call.1} parent=1 // pred_check
      _
    $region155: #{tpu_custom_call.1} parent=1 // pred_check_branch
      %3408 = sbr.rel (0) target = $region157
    $region156: #{tpu_custom_call.1} parent=1 // pred_region
      %s3410 = ssub.s32 32, 32
      %3411 = vsyncadd [#allocation4], %s3410
      %s3413 = sshll.u32 [#allocation25], 4
      %s3414 = int_to_ptr.vmem [resolvable:$true] %s3413
      %3416 = dma.vmem_to_hbm [thread:$0]  %s3414, 32, %s24, [#allocation4]
    $region157: #{tpu_custom_call.1} parent=1 // pred_fallthru
      _
    // Predicated region
    $region158: #{tpu_custom_call.1} parent=1 // pred_check
      _
    $region159: #{tpu_custom_call.1} parent=1 // pred_check_branch
      %3418 = sbr.rel (0) target = $region161
    $region160: #{tpu_custom_call.1} parent=1 // pred_region
      %3419 = dma.done [#allocation4], 32
    $region161: #{tpu_custom_call.1} parent=1 // pred_fallthru
      _
    %3420 = vsyncpa [#allocation3], 1
    %3421 = vsyncpa [#allocation6], 1
    %3422 = vsyncpa [#allocation9], 1
    %3423 = vsyncpa [#allocation12], 1
    %3424 = vsyncpa [#allocation15], 1
    %3425 = vsyncpa [#allocation18], 1
    %3426 = vsyncpa [#allocation21], 1
    %3427 = vsyncpa [#allocation24], 1
    %3428 = vsyncpa [#allocation4], 1

</llo_original>
